<compile_context>
chip_gen: v7x
topology: tpu7x:2x2x1
jax: 0.10.0
libtpu: 0.0.40
codegen_flags: <defaults>
</compile_context>

<pallas_src>
import numpy as np
import jax
import jax.numpy as jnp
from jax.experimental import pallas as pl
from jax.experimental.pallas import tpu as pltpu


# ---------------------------------------------------------------------------
# Constant helper matrices: pad / pool / upsample / extract as matmuls over
# flattened spatial domains (built once at trace time with numpy).
# ---------------------------------------------------------------------------
def _build_helper_mats(h, w, p):
    hl, wl = h // 2, w // 2
    hp, wp = h + 2 * p, w + 2 * p
    hpl, wpl = hl + 2 * p, wl + 2 * p
    l_h, l_l = hp * wp, hpl * wpl
    m_h, m_l = p * wp + p, p * wpl + p

    hh, ww = np.meshgrid(np.arange(h), np.arange(w), indexing="ij")
    col_h = (hh * w + ww).ravel()                          # flat (h, w)
    row_pad = ((hh + p) * wp + (ww + p)).ravel()           # padded-flat (h, w)
    row_low = ((hh // 2 + p) * wpl + (ww // 2 + p)).ravel()

    hh2, ww2 = np.meshgrid(np.arange(hl), np.arange(wl), indexing="ij")
    col_l = (hh2 * wl + ww2).ravel()
    row_lpad = ((hh2 + p) * wpl + (ww2 + p)).ravel()

    pad_h = np.zeros((h * w, l_h + 2 * m_h), np.float32)     # zero-pad high input
    pad_h[col_h, m_h + row_pad] = 1.0
    pad_l = np.zeros((hl * wl, l_l + 2 * m_l), np.float32)   # zero-pad low input
    pad_l[col_l, m_l + row_lpad] = 1.0
    pool_m = np.zeros((h * w, l_l + 2 * m_l), np.float32)    # 2x2 avg-pool of high
    pool_m[col_h, m_l + row_low] = 0.25
    ext_h = np.zeros((l_h, h * w), np.float32)               # interior extraction (high)
    ext_h[row_pad, col_h] = 1.0
    up_h = np.zeros((l_l, h * w), np.float32)                # nearest-2x upsample + extract
    up_h[row_low, col_h] = 1.0
    ext_l = np.zeros((l_l, hl * wl), np.float32)             # interior extraction (low)
    ext_l[row_lpad, col_l] = 1.0
    return pad_h, pad_l, pool_m, ext_h, up_h, ext_l


# ---------------------------------------------------------------------------
# Fused OctConv2d forward (single pallas_call, grid over batch)
# ---------------------------------------------------------------------------
def octconv2d_forward(xh, xl, params):
    n, cin_h, h, w = xh.shape
    n2, cin_l, hl, wl = xl.shape
    cout_h, cin_h2, k, k2 = params["wh2h"].shape
    cout_l = params["wl2l"].shape[0]
    assert n == n2 and cin_h2 == cin_h and k == k2
    assert hl == h // 2 and wl == w // 2 and h % 2 == 0 and w % 2 == 0, \
        "high-frequency spatial dims must be even (avg_pool2d(2))"
    assert k % 2 == 1, "odd kernel_size required for stride=1 'same' padding"
    # TODO(synk): stride > 1 and the degenerate alpha in {0, 1} single-branch
    # variants of OctConv2d are not implemented (example uses stride=1, alpha=0.5).
    p = (k - 1) // 2            # == (kernel_size - stride) // 2 for stride == 1

    hp, wp = h + 2 * p, w + 2 * p
    hpl, wpl = hl + 2 * p, wl + 2 * p
    l_h, l_l = hp * wp, hpl * wpl
    m_h, m_l = p * wp + p, p * wpl + p
    hw, hlwl = h * w, hl * wl
    cp = 8 * (-(-max(cin_h, cin_l, cout_h, cout_l) // 8))   # channels -> multiple of 8

    # ---- constant helper matrices -----------------------------------------
    pad_h_np, pad_l_np, pool_np, ext_h_np, up_h_np, ext_l_np = _build_helper_mats(h, w, p)
    bf = jnp.bfloat16
    pad_h_m = jnp.asarray(pad_h_np, bf)
    pad_l_m = jnp.asarray(pad_l_np, bf)
    pool_m = jnp.asarray(pool_np, bf)
    ext_h_m = jnp.asarray(ext_h_np, jnp.float32)
    up_h_m = jnp.asarray(up_h_np, jnp.float32)
    ext_l_m = jnp.asarray(ext_l_np, jnp.float32)

    # ---- operands: bf16 activations / weights, channels padded to `cp` ----
    def pad_c(a, c):
        return jnp.pad(a, ((0, 0), (0, cp - c), (0, 0)))

    xh_in = pad_c(xh.astype(bf).reshape(n, cin_h, hw), cin_h)
    xl_in = pad_c(xl.astype(bf).reshape(n, cin_l, hlwl), cin_l)

    def wmat(name):
        wgt = params[name]
        co, ci = wgt.shape[0], wgt.shape[1]
        m = jnp.transpose(wgt, (2, 3, 0, 1)).reshape(k * k, co, ci)
        return jnp.pad(m, ((0, 0), (0, cp - co), (0, cp - ci))).astype(bf)

    wh2h_m, wl2h_m, wl2l_m, wh2l_m = (wmat(nm) for nm in ("wh2h", "wl2h", "wl2l", "wh2l"))

    def bvec(b1, b2, co):
        return jnp.pad((b1 + b2).astype(jnp.float32), (0, cp - co)).reshape(cp, 1)

    bias_h = bvec(params["bh2h"], params["bl2h"], cout_h)   # both biases land on yh
    bias_l = bvec(params["bl2l"], params["bh2l"], cout_l)   # both biases land on yl

    # ---- fused kernel ------------------------------------------------------
    def kernel(xh_ref, xl_ref, wh2h_ref, wl2h_ref, wl2l_ref, wh2l_ref,
               bh_ref, bl_ref, padh_ref, padl_ref, pool_ref, exth_ref, uph_ref,
               extl_ref, yh_ref, yl_ref, xs_h, xs_l, xs_hp):
        # Zero-pad + flatten inputs into VMEM scratch slabs (pad fused in-kernel
        # as MXU matmuls against constant 0/1 matrices).
        xs_h[...] = jnp.dot(xh_ref[...], padh_ref[...],
                            preferred_element_type=jnp.float32).astype(xs_h.dtype)
        xs_l[...] = jnp.dot(xl_ref[...], padl_ref[...],
                            preferred_element_type=jnp.float32).astype(xs_l.dtype)
        # 2x2 average pool of xh straight into the padded low-res layout.
        xs_hp[...] = jnp.dot(xh_ref[...], pool_ref[...],
                             preferred_element_type=jnp.float32).astype(xs_hp.dtype)

        def conv(src_ref, w_ref, row_stride, margin, length):
            # K*K shifted-slab matmuls, contracting over (padded) input channels.
            # NOTE: for large channel counts switch this static unroll to
            # lax.fori_loop(..., unroll=True) to bound code size / live ranges.
            acc = jnp.zeros((cp, length), jnp.float32)
            for kh in range(k):
                for kw in range(k):
                    start = margin + (kh - p) * row_stride + (kw - p)
                    acc = acc + jnp.dot(
                        w_ref[kh * k + kw], src_ref[:, start:start + length],
                        preferred_element_type=jnp.float32)
            return acc

        acc_h2h = conv(xs_h, wh2h_ref, wp, m_h, l_h)      # high -> high
        acc_l2h = conv(xs_l, wl2h_ref, wpl, m_l, l_l)     # low  -> high (pre-upsample)
        acc_l2l = conv(xs_l, wl2l_ref, wpl, m_l, l_l)     # low  -> low
        acc_h2l = conv(xs_hp, wh2l_ref, wpl, m_l, l_l)    # pooled high -> low

        # Interior extraction / nearest-2x upsample as matmuls + fused bias & adds.
        yh = (jnp.dot(acc_h2h, exth_ref[...], preferred_element_type=jnp.float32)
              + jnp.dot(acc_l2h, uph_ref[...], preferred_element_type=jnp.float32)
              + bh_ref[...])
        yl = (jnp.dot(acc_l2l + acc_h2l, extl_ref[...],
                      preferred_element_type=jnp.float32)
              + bl_ref[...])
        yh_ref[...] = yh[:cout_h, :]          # drop channel padding rows
        yl_ref[...] = yl[:cout_l, :]

    def full(a):
        nd = a.ndim
        return pl.BlockSpec(a.shape, lambda i, _nd=nd: (0,) * _nd)

    flops = 2 * n * k * k * (cout_h * cin_h * hw
                             + (cout_h * cin_l + cout_l * cin_l + cout_l * cin_h) * hlwl)
    bytes_accessed = sum(int(np.prod(a.shape)) * a.dtype.itemsize
                         for a in (xh_in, xl_in, wh2h_m, wl2h_m, wl2l_m, wh2l_m)) \
        + 4 * n * (cout_h * hw + cout_l * hlwl)

    yh_flat, yl_flat = pl.pallas_call(
        kernel,
        out_shape=(jax.ShapeDtypeStruct((n, cout_h, hw), jnp.float32),
                   jax.ShapeDtypeStruct((n, cout_l, hlwl), jnp.float32)),
        grid=(n,),
        in_specs=[
            pl.BlockSpec((None, cp, hw), lambda i: (i, 0, 0)),
            pl.BlockSpec((None, cp, hlwl), lambda i: (i, 0, 0)),
            full(wh2h_m), full(wl2h_m), full(wl2l_m), full(wh2l_m),
            full(bias_h), full(bias_l),
            full(pad_h_m), full(pad_l_m), full(pool_m),
            full(ext_h_m), full(up_h_m), full(ext_l_m),
        ],
        out_specs=(pl.BlockSpec((None, cout_h, hw), lambda i: (i, 0, 0)),
                   pl.BlockSpec((None, cout_l, hlwl), lambda i: (i, 0, 0))),
        scratch_shapes=[
            pltpu.VMEM((cp, l_h + 2 * m_h), bf),   # padded-flat xh
            pltpu.VMEM((cp, l_l + 2 * m_l), bf),   # padded-flat xl
            pltpu.VMEM((cp, l_l + 2 * m_l), bf),   # padded-flat avg-pooled xh
        ],
        compiler_params=pltpu.CompilerParams(
            dimension_semantics=("parallel",)),
        cost_estimate=pl.CostEstimate(flops=flops, transcendentals=0,
                                      bytes_accessed=bytes_accessed),
    )(xh_in, xl_in, wh2h_m, wl2h_m, wl2l_m, wh2l_m, bias_h, bias_l,
      pad_h_m, pad_l_m, pool_m, ext_h_m, up_h_m, ext_l_m)

    return (yh_flat.reshape(n, cout_h, h, w),
            yl_flat.reshape(n, cout_l, hl, wl))


# ---------------------------------------------------------------------------
# Pure-JAX reference (for correctness check)
# ---------------------------------------------------------------------------
def _avg_pool2(x):
    n, c, h, w = x.shape
    return x.reshape(n, c, h // 2, 2, w // 2, 2).mean(axis=(3, 5))


def _upsample_nearest2(x):
    return jnp.repeat(jnp.repeat(x, 2, axis=2), 2, axis=3)


def _conv_ref(x, w, b):
    kk = w.shape[2]
    pad = (kk - 1) // 2
    y = jax.lax.conv_general_dilated(
        x.astype(jnp.float32), w.astype(jnp.float32), (1, 1),
        [(pad, pad), (pad, pad)],
        dimension_numbers=("NCHW", "OIHW", "NCHW"))
    return y + b.astype(jnp.float32)[None, :, None, None]


def _octconv_ref(xh, xl, params, quantize=False):
    """Reference of the module math.  quantize=True mirrors the kernel's bf16
    rounding points so the comparison isolates accumulation-order error."""
    q = (lambda t: t.astype(jnp.bfloat16).astype(jnp.float32)) if quantize else (lambda t: t)
    xh_q, xl_q = q(xh), q(xl)
    pr = {nm: (q(v) if nm.startswith("w") else v) for nm, v in params.items()}
    yh2h = _conv_ref(xh_q, pr["wh2h"], pr["bh2h"])
    yh2l = _conv_ref(q(_avg_pool2(xh_q)), pr["wh2l"], pr["bh2l"])
    yl2l = _conv_ref(xl_q, pr["wl2l"], pr["bl2l"])
    yl2h = _upsample_nearest2(_conv_ref(xl_q, pr["wl2h"], pr["bl2h"]))
    return yh2h + yl2h, yl2l + yh2l


# ---------------------------------------------------------------------------
if __name__ == "__main__":
    # Module config: OctConv2d(ch_in=4, ch_out=4, kernel_size=3, stride=1,
    #                          bias=True, alpha=(0.5, 0.5))
    ch_in, ch_out, k = 4, 4, 3
    alpha_in, alpha_out = 0.5, 0.5
    ch_in_xl = int(alpha_in * ch_in)
    ch_in_xh = ch_in - ch_in_xl
    ch_out_yl = int(alpha_out * ch_out)
    ch_out_yh = ch_out - ch_out_yl

    n, h, w = 2, 16, 16   # high-frequency spatial size; low-frequency is h//2

    key = jax.random.PRNGKey(0)
    ks = jax.random.split(key, 10)

    xh = jax.random.normal(ks[0], (n, ch_in_xh, h, w), jnp.float32)
    xl = jax.random.normal(ks[1], (n, ch_in_xl, h // 2, w // 2), jnp.float32)

    params = {
        "wh2h": 0.1 * jax.random.normal(ks[2], (ch_out_yh, ch_in_xh, k, k), jnp.float32),
        "bh2h": 0.1 * jax.random.normal(ks[3], (ch_out_yh,), jnp.float32),
        "wh2l": 0.1 * jax.random.normal(ks[4], (ch_out_yl, ch_in_xh, k, k), jnp.float32),
        "bh2l": 0.1 * jax.random.normal(ks[5], (ch_out_yl,), jnp.float32),
        "wl2l": 0.1 * jax.random.normal(ks[6], (ch_out_yl, ch_in_xl, k, k), jnp.float32),
        "bl2l": 0.1 * jax.random.normal(ks[7], (ch_out_yl,), jnp.float32),
        "wl2h": 0.1 * jax.random.normal(ks[8], (ch_out_yh, ch_in_xl, k, k), jnp.float32),
        "bl2h": 0.1 * jax.random.normal(ks[9], (ch_out_yh,), jnp.float32),
    }

    yh, yl = jax.jit(octconv2d_forward)(xh, xl, params)
    jax.block_until_ready((yh, yl))

    assert yh.shape == (n, ch_out_yh, h, w)
    assert yl.shape == (n, ch_out_yl, h // 2, w // 2)

    # Tight check vs a reference that mirrors the kernel's bf16 rounding points.
    yh_q, yl_q = _octconv_ref(xh, xl, params, quantize=True)
    assert jnp.max(jnp.abs(yh - yh_q)) < 2e-3
    assert jnp.max(jnp.abs(yl - yl_q)) < 2e-3
    # Loose sanity check vs the original full-f32 module math.
    yh_f, yl_f = _octconv_ref(xh, xl, params, quantize=False)
    assert jnp.max(jnp.abs(yh - yh_f)) < 5e-2
    assert jnp.max(jnp.abs(yl - yl_f)) < 5e-2

    print("KERNEL_OK")
</pallas_src>

<mosaic_0001>
module attributes {stable_mosaic.version = 11 : i64} {
  func.func @kernel(%arg0: i32, %arg1: memref<1x8x256xbf16, #tpu.memory_space<vmem>>, %arg2: memref<1x8x64xbf16, #tpu.memory_space<vmem>>, %arg3: memref<9x8x8xbf16, #tpu.memory_space<vmem>>, %arg4: memref<9x8x8xbf16, #tpu.memory_space<vmem>>, %arg5: memref<9x8x8xbf16, #tpu.memory_space<vmem>>, %arg6: memref<9x8x8xbf16, #tpu.memory_space<vmem>>, %arg7: memref<8x1xf32, #tpu.memory_space<vmem>>, %arg8: memref<8x1xf32, #tpu.memory_space<vmem>>, %arg9: memref<256x362xbf16, #tpu.memory_space<vmem>>, %arg10: memref<64x122xbf16, #tpu.memory_space<vmem>>, %arg11: memref<256x122xbf16, #tpu.memory_space<vmem>>, %arg12: memref<324x256xf32, #tpu.memory_space<vmem>>, %arg13: memref<100x256xf32, #tpu.memory_space<vmem>>, %arg14: memref<100x64xf32, #tpu.memory_space<vmem>>, %arg15: memref<1x2x256xf32, #tpu.memory_space<vmem>>, %arg16: memref<1x2x64xf32, #tpu.memory_space<vmem>>, %arg17: memref<8x362xbf16, #tpu.memory_space<vmem>>, %arg18: memref<8x122xbf16, #tpu.memory_space<vmem>>, %arg19: memref<8x122xbf16, #tpu.memory_space<vmem>>) attributes {dimension_semantics = [#tpu.dimension_semantics<parallel>], iteration_bounds = array<i64: 2>, scalar_prefetch = 0 : i64, scratch_operands = 3 : i64, tpu.core_type = #tpu.core_type<tc>, window_params = [{transform_indices = @transform_0, window_bounds = array<i64: 1, 8, 256>}, {transform_indices = @transform_1, window_bounds = array<i64: 1, 8, 64>}, {pipeline_mode = #tpu.pipeline_mode<synchronous>, transform_indices = @transform_2, window_bounds = array<i64: 9, 8, 8>}, {pipeline_mode = #tpu.pipeline_mode<synchronous>, transform_indices = @transform_3, window_bounds = array<i64: 9, 8, 8>}, {pipeline_mode = #tpu.pipeline_mode<synchronous>, transform_indices = @transform_4, window_bounds = array<i64: 9, 8, 8>}, {pipeline_mode = #tpu.pipeline_mode<synchronous>, transform_indices = @transform_5, window_bounds = array<i64: 9, 8, 8>}, {pipeline_mode = #tpu.pipeline_mode<synchronous>, transform_indices = @transform_6, window_bounds = array<i64: 8, 1>}, {pipeline_mode = #tpu.pipeline_mode<synchronous>, transform_indices = @transform_7, window_bounds = array<i64: 8, 1>}, {pipeline_mode = #tpu.pipeline_mode<synchronous>, transform_indices = @transform_8, window_bounds = array<i64: 256, 362>}, {pipeline_mode = #tpu.pipeline_mode<synchronous>, transform_indices = @transform_9, window_bounds = array<i64: 64, 122>}, {pipeline_mode = #tpu.pipeline_mode<synchronous>, transform_indices = @transform_10, window_bounds = array<i64: 256, 122>}, {pipeline_mode = #tpu.pipeline_mode<synchronous>, transform_indices = @transform_11, window_bounds = array<i64: 324, 256>}, {pipeline_mode = #tpu.pipeline_mode<synchronous>, transform_indices = @transform_12, window_bounds = array<i64: 100, 256>}, {pipeline_mode = #tpu.pipeline_mode<synchronous>, transform_indices = @transform_13, window_bounds = array<i64: 100, 64>}, {transform_indices = @transform_14, window_bounds = array<i64: 1, 2, 256>}, {transform_indices = @transform_15, window_bounds = array<i64: 1, 2, 64>}]} {
    %c0 = arith.constant 0 : index
    %c0_0 = arith.constant 0 : index
    %c0_1 = arith.constant 0 : index
    %0 = vector.load %arg1[%c0, %c0_0, %c0_1] : memref<1x8x256xbf16, #tpu.memory_space<vmem>>, vector<1x8x256xbf16>
    %1 = vector.shape_cast %0 : vector<1x8x256xbf16> to vector<8x256xbf16>
    %c0_2 = arith.constant 0 : index
    %c0_3 = arith.constant 0 : index
    %2 = vector.load %arg9[%c0_2, %c0_3] : memref<256x362xbf16, #tpu.memory_space<vmem>>, vector<256x362xbf16>
    %cst = arith.constant dense<0.000000e+00> : vector<8x362xf32>
    %3 = tpu.matmul %1, %2, %cst {dimension_numbers = #tpu.dot_dimension_numbers<[1], [0], [0], [1], [0, 0, 1, 1], [], []>} : vector<8x256xbf16>, vector<256x362xbf16>, vector<8x362xf32> -> vector<8x362xf32>
    %4 = arith.truncf %3 : vector<8x362xf32> to vector<8x362xbf16>
    %c0_4 = arith.constant 0 : index
    %c0_5 = arith.constant 0 : index
    %5 = vector.load %arg17[%c0_4, %c0_5] : memref<8x362xbf16, #tpu.memory_space<vmem>>, vector<8x362xbf16>
    tpu.vector_store %arg17[%c0_4, %c0_5], %4 {strides = array<i32>} : memref<8x362xbf16, #tpu.memory_space<vmem>>, vector<8x362xbf16>,
    %c0_6 = arith.constant 0 : index
    %c0_7 = arith.constant 0 : index
    %c0_8 = arith.constant 0 : index
    %6 = vector.load %arg2[%c0_6, %c0_7, %c0_8] : memref<1x8x64xbf16, #tpu.memory_space<vmem>>, vector<1x8x64xbf16>
    %7 = vector.shape_cast %6 : vector<1x8x64xbf16> to vector<8x64xbf16>
    %c0_9 = arith.constant 0 : index
    %c0_10 = arith.constant 0 : index
    %8 = vector.load %arg10[%c0_9, %c0_10] : memref<64x122xbf16, #tpu.memory_space<vmem>>, vector<64x122xbf16>
    %cst_11 = arith.constant dense<0.000000e+00> : vector<8x122xf32>
    %9 = tpu.matmul %7, %8, %cst_11 {dimension_numbers = #tpu.dot_dimension_numbers<[1], [0], [0], [1], [0, 0, 1, 1], [], []>} : vector<8x64xbf16>, vector<64x122xbf16>, vector<8x122xf32> -> vector<8x122xf32>
    %10 = arith.truncf %9 : vector<8x122xf32> to vector<8x122xbf16>
    %c0_12 = arith.constant 0 : index
    %c0_13 = arith.constant 0 : index
    %11 = vector.load %arg18[%c0_12, %c0_13] : memref<8x122xbf16, #tpu.memory_space<vmem>>, vector<8x122xbf16>
    tpu.vector_store %arg18[%c0_12, %c0_13], %10 {strides = array<i32>} : memref<8x122xbf16, #tpu.memory_space<vmem>>, vector<8x122xbf16>,
    %c0_14 = arith.constant 0 : index
    %c0_15 = arith.constant 0 : index
    %c0_16 = arith.constant 0 : index
    %12 = vector.load %arg1[%c0_14, %c0_15, %c0_16] : memref<1x8x256xbf16, #tpu.memory_space<vmem>>, vector<1x8x256xbf16>
    %13 = vector.shape_cast %12 : vector<1x8x256xbf16> to vector<8x256xbf16>
    %c0_17 = arith.constant 0 : index
    %c0_18 = arith.constant 0 : index
    %14 = vector.load %arg11[%c0_17, %c0_18] : memref<256x122xbf16, #tpu.memory_space<vmem>>, vector<256x122xbf16>
    %cst_19 = arith.constant dense<0.000000e+00> : vector<8x122xf32>
    %15 = tpu.matmul %13, %14, %cst_19 {dimension_numbers = #tpu.dot_dimension_numbers<[1], [0], [0], [1], [0, 0, 1, 1], [], []>} : vector<8x256xbf16>, vector<256x122xbf16>, vector<8x122xf32> -> vector<8x122xf32>
    %16 = arith.truncf %15 : vector<8x122xf32> to vector<8x122xbf16>
    %c0_20 = arith.constant 0 : index
    %c0_21 = arith.constant 0 : index
    %17 = vector.load %arg19[%c0_20, %c0_21] : memref<8x122xbf16, #tpu.memory_space<vmem>>, vector<8x122xbf16>
    tpu.vector_store %arg19[%c0_20, %c0_21], %16 {strides = array<i32>} : memref<8x122xbf16, #tpu.memory_space<vmem>>, vector<8x122xbf16>,
    %cst_22 = arith.constant 0.000000e+00 : f32
    %18 = vector.broadcast %cst_22 : f32 to vector<8x324xf32>
    %c0_23 = arith.constant 0 : index
    %c0_24 = arith.constant 0 : index
    %c0_25 = arith.constant 0 : index
    %19 = vector.load %arg3[%c0_23, %c0_24, %c0_25] : memref<9x8x8xbf16, #tpu.memory_space<vmem>>, vector<1x8x8xbf16>
    %20 = vector.shape_cast %19 : vector<1x8x8xbf16> to vector<8x8xbf16>
    %c0_26 = arith.constant 0 : index
    %c0_27 = arith.constant 0 : index
    %21 = vector.load %arg17[%c0_26, %c0_27] : memref<8x362xbf16, #tpu.memory_space<vmem>>, vector<8x324xbf16>
    %cst_28 = arith.constant dense<0.000000e+00> : vector<8x324xf32>
    %22 = tpu.matmul %20, %21, %cst_28 {dimension_numbers = #tpu.dot_dimension_numbers<[1], [0], [0], [1], [0, 0, 1, 1], [], []>} : vector<8x8xbf16>, vector<8x324xbf16>, vector<8x324xf32> -> vector<8x324xf32>
    %23 = arith.addf %18, %22 : vector<8x324xf32>
    %c1 = arith.constant 1 : index
    %c0_29 = arith.constant 0 : index
    %c0_30 = arith.constant 0 : index
    %24 = vector.load %arg3[%c1, %c0_29, %c0_30] : memref<9x8x8xbf16, #tpu.memory_space<vmem>>, vector<1x8x8xbf16>
    %25 = vector.shape_cast %24 : vector<1x8x8xbf16> to vector<8x8xbf16>
    %c0_31 = arith.constant 0 : index
    %c1_32 = arith.constant 1 : index
    %26 = vector.load %arg17[%c0_31, %c1_32] : memref<8x362xbf16, #tpu.memory_space<vmem>>, vector<8x324xbf16>
    %cst_33 = arith.constant dense<0.000000e+00> : vector<8x324xf32>
    %27 = tpu.matmul %25, %26, %cst_33 {dimension_numbers = #tpu.dot_dimension_numbers<[1], [0], [0], [1], [0, 0, 1, 1], [], []>} : vector<8x8xbf16>, vector<8x324xbf16>, vector<8x324xf32> -> vector<8x324xf32>
    %28 = arith.addf %23, %27 : vector<8x324xf32>
    %c2 = arith.constant 2 : index
    %c0_34 = arith.constant 0 : index
    %c0_35 = arith.constant 0 : index
    %29 = vector.load %arg3[%c2, %c0_34, %c0_35] : memref<9x8x8xbf16, #tpu.memory_space<vmem>>, vector<1x8x8xbf16>
    %30 = vector.shape_cast %29 : vector<1x8x8xbf16> to vector<8x8xbf16>
    %c0_36 = arith.constant 0 : index
    %c2_37 = arith.constant 2 : index
    %31 = vector.load %arg17[%c0_36, %c2_37] : memref<8x362xbf16, #tpu.memory_space<vmem>>, vector<8x324xbf16>
    %cst_38 = arith.constant dense<0.000000e+00> : vector<8x324xf32>
    %32 = tpu.matmul %30, %31, %cst_38 {dimension_numbers = #tpu.dot_dimension_numbers<[1], [0], [0], [1], [0, 0, 1, 1], [], []>} : vector<8x8xbf16>, vector<8x324xbf16>, vector<8x324xf32> -> vector<8x324xf32>
    %33 = arith.addf %28, %32 : vector<8x324xf32>
    %c3 = arith.constant 3 : index
    %c0_39 = arith.constant 0 : index
    %c0_40 = arith.constant 0 : index
    %34 = vector.load %arg3[%c3, %c0_39, %c0_40] : memref<9x8x8xbf16, #tpu.memory_space<vmem>>, vector<1x8x8xbf16>
    %35 = vector.shape_cast %34 : vector<1x8x8xbf16> to vector<8x8xbf16>
    %c0_41 = arith.constant 0 : index
    %c18 = arith.constant 18 : index
    %36 = vector.load %arg17[%c0_41, %c18] : memref<8x362xbf16, #tpu.memory_space<vmem>>, vector<8x324xbf16>
    %cst_42 = arith.constant dense<0.000000e+00> : vector<8x324xf32>
    %37 = tpu.matmul %35, %36, %cst_42 {dimension_numbers = #tpu.dot_dimension_numbers<[1], [0], [0], [1], [0, 0, 1, 1], [], []>} : vector<8x8xbf16>, vector<8x324xbf16>, vector<8x324xf32> -> vector<8x324xf32>
    %38 = arith.addf %33, %37 : vector<8x324xf32>
    %c4 = arith.constant 4 : index
    %c0_43 = arith.constant 0 : index
    %c0_44 = arith.constant 0 : index
    %39 = vector.load %arg3[%c4, %c0_43, %c0_44] : memref<9x8x8xbf16, #tpu.memory_space<vmem>>, vector<1x8x8xbf16>
    %40 = vector.shape_cast %39 : vector<1x8x8xbf16> to vector<8x8xbf16>
    %c0_45 = arith.constant 0 : index
    %c19 = arith.constant 19 : index
    %41 = vector.load %arg17[%c0_45, %c19] : memref<8x362xbf16, #tpu.memory_space<vmem>>, vector<8x324xbf16>
    %cst_46 = arith.constant dense<0.000000e+00> : vector<8x324xf32>
    %42 = tpu.matmul %40, %41, %cst_46 {dimension_numbers = #tpu.dot_dimension_numbers<[1], [0], [0], [1], [0, 0, 1, 1], [], []>} : vector<8x8xbf16>, vector<8x324xbf16>, vector<8x324xf32> -> vector<8x324xf32>
    %43 = arith.addf %38, %42 : vector<8x324xf32>
    %c5 = arith.constant 5 : index
    %c0_47 = arith.constant 0 : index
    %c0_48 = arith.constant 0 : index
    %44 = vector.load %arg3[%c5, %c0_47, %c0_48] : memref<9x8x8xbf16, #tpu.memory_space<vmem>>, vector<1x8x8xbf16>
    %45 = vector.shape_cast %44 : vector<1x8x8xbf16> to vector<8x8xbf16>
    %c0_49 = arith.constant 0 : index
    %c20 = arith.constant 20 : index
    %46 = vector.load %arg17[%c0_49, %c20] : memref<8x362xbf16, #tpu.memory_space<vmem>>, vector<8x324xbf16>
    %cst_50 = arith.constant dense<0.000000e+00> : vector<8x324xf32>
    %47 = tpu.matmul %45, %46, %cst_50 {dimension_numbers = #tpu.dot_dimension_numbers<[1], [0], [0], [1], [0, 0, 1, 1], [], []>} : vector<8x8xbf16>, vector<8x324xbf16>, vector<8x324xf32> -> vector<8x324xf32>
    %48 = arith.addf %43, %47 : vector<8x324xf32>
    %c6 = arith.constant 6 : index
    %c0_51 = arith.constant 0 : index
    %c0_52 = arith.constant 0 : index
    %49 = vector.load %arg3[%c6, %c0_51, %c0_52] : memref<9x8x8xbf16, #tpu.memory_space<vmem>>, vector<1x8x8xbf16>
    %50 = vector.shape_cast %49 : vector<1x8x8xbf16> to vector<8x8xbf16>
    %c0_53 = arith.constant 0 : index
    %c36 = arith.constant 36 : index
    %51 = vector.load %arg17[%c0_53, %c36] : memref<8x362xbf16, #tpu.memory_space<vmem>>, vector<8x324xbf16>
    %cst_54 = arith.constant dense<0.000000e+00> : vector<8x324xf32>
    %52 = tpu.matmul %50, %51, %cst_54 {dimension_numbers = #tpu.dot_dimension_numbers<[1], [0], [0], [1], [0, 0, 1, 1], [], []>} : vector<8x8xbf16>, vector<8x324xbf16>, vector<8x324xf32> -> vector<8x324xf32>
    %53 = arith.addf %48, %52 : vector<8x324xf32>
    %c7 = arith.constant 7 : index
    %c0_55 = arith.constant 0 : index
    %c0_56 = arith.constant 0 : index
    %54 = vector.load %arg3[%c7, %c0_55, %c0_56] : memref<9x8x8xbf16, #tpu.memory_space<vmem>>, vector<1x8x8xbf16>
    %55 = vector.shape_cast %54 : vector<1x8x8xbf16> to vector<8x8xbf16>
    %c0_57 = arith.constant 0 : index
    %c37 = arith.constant 37 : index
    %56 = vector.load %arg17[%c0_57, %c37] : memref<8x362xbf16, #tpu.memory_space<vmem>>, vector<8x324xbf16>
    %cst_58 = arith.constant dense<0.000000e+00> : vector<8x324xf32>
    %57 = tpu.matmul %55, %56, %cst_58 {dimension_numbers = #tpu.dot_dimension_numbers<[1], [0], [0], [1], [0, 0, 1, 1], [], []>} : vector<8x8xbf16>, vector<8x324xbf16>, vector<8x324xf32> -> vector<8x324xf32>
    %58 = arith.addf %53, %57 : vector<8x324xf32>
    %c8 = arith.constant 8 : index
    %c0_59 = arith.constant 0 : index
    %c0_60 = arith.constant 0 : index
    %59 = vector.load %arg3[%c8, %c0_59, %c0_60] : memref<9x8x8xbf16, #tpu.memory_space<vmem>>, vector<1x8x8xbf16>
    %60 = vector.shape_cast %59 : vector<1x8x8xbf16> to vector<8x8xbf16>
    %c0_61 = arith.constant 0 : index
    %c38 = arith.constant 38 : index
    %61 = vector.load %arg17[%c0_61, %c38] : memref<8x362xbf16, #tpu.memory_space<vmem>>, vector<8x324xbf16>
    %cst_62 = arith.constant dense<0.000000e+00> : vector<8x324xf32>
    %62 = tpu.matmul %60, %61, %cst_62 {dimension_numbers = #tpu.dot_dimension_numbers<[1], [0], [0], [1], [0, 0, 1, 1], [], []>} : vector<8x8xbf16>, vector<8x324xbf16>, vector<8x324xf32> -> vector<8x324xf32>
    %63 = arith.addf %58, %62 : vector<8x324xf32>
    %cst_63 = arith.constant 0.000000e+00 : f32
    %64 = vector.broadcast %cst_63 : f32 to vector<8x100xf32>
    %c0_64 = arith.constant 0 : index
    %c0_65 = arith.constant 0 : index
    %c0_66 = arith.constant 0 : index
    %65 = vector.load %arg4[%c0_64, %c0_65, %c0_66] : memref<9x8x8xbf16, #tpu.memory_space<vmem>>, vector<1x8x8xbf16>
    %66 = vector.shape_cast %65 : vector<1x8x8xbf16> to vector<8x8xbf16>
    %c0_67 = arith.constant 0 : index
    %c0_68 = arith.constant 0 : index
    %67 = vector.load %arg18[%c0_67, %c0_68] : memref<8x122xbf16, #tpu.memory_space<vmem>>, vector<8x100xbf16>
    %cst_69 = arith.constant dense<0.000000e+00> : vector<8x100xf32>
    %68 = tpu.matmul %66, %67, %cst_69 {dimension_numbers = #tpu.dot_dimension_numbers<[1], [0], [0], [1], [0, 0, 1, 1], [], []>} : vector<8x8xbf16>, vector<8x100xbf16>, vector<8x100xf32> -> vector<8x100xf32>
    %69 = arith.addf %64, %68 : vector<8x100xf32>
    %c1_70 = arith.constant 1 : index
    %c0_71 = arith.constant 0 : index
    %c0_72 = arith.constant 0 : index
    %70 = vector.load %arg4[%c1_70, %c0_71, %c0_72] : memref<9x8x8xbf16, #tpu.memory_space<vmem>>, vector<1x8x8xbf16>
    %71 = vector.shape_cast %70 : vector<1x8x8xbf16> to vector<8x8xbf16>
    %c0_73 = arith.constant 0 : index
    %c1_74 = arith.constant 1 : index
    %72 = vector.load %arg18[%c0_73, %c1_74] : memref<8x122xbf16, #tpu.memory_space<vmem>>, vector<8x100xbf16>
    %cst_75 = arith.constant dense<0.000000e+00> : vector<8x100xf32>
    %73 = tpu.matmul %71, %72, %cst_75 {dimension_numbers = #tpu.dot_dimension_numbers<[1], [0], [0], [1], [0, 0, 1, 1], [], []>} : vector<8x8xbf16>, vector<8x100xbf16>, vector<8x100xf32> -> vector<8x100xf32>
    %74 = arith.addf %69, %73 : vector<8x100xf32>
    %c2_76 = arith.constant 2 : index
    %c0_77 = arith.constant 0 : index
    %c0_78 = arith.constant 0 : index
    %75 = vector.load %arg4[%c2_76, %c0_77, %c0_78] : memref<9x8x8xbf16, #tpu.memory_space<vmem>>, vector<1x8x8xbf16>
    %76 = vector.shape_cast %75 : vector<1x8x8xbf16> to vector<8x8xbf16>
    %c0_79 = arith.constant 0 : index
    %c2_80 = arith.constant 2 : index
    %77 = vector.load %arg18[%c0_79, %c2_80] : memref<8x122xbf16, #tpu.memory_space<vmem>>, vector<8x100xbf16>
    %cst_81 = arith.constant dense<0.000000e+00> : vector<8x100xf32>
    %78 = tpu.matmul %76, %77, %cst_81 {dimension_numbers = #tpu.dot_dimension_numbers<[1], [0], [0], [1], [0, 0, 1, 1], [], []>} : vector<8x8xbf16>, vector<8x100xbf16>, vector<8x100xf32> -> vector<8x100xf32>
    %79 = arith.addf %74, %78 : vector<8x100xf32>
    %c3_82 = arith.constant 3 : index
    %c0_83 = arith.constant 0 : index
    %c0_84 = arith.constant 0 : index
    %80 = vector.load %arg4[%c3_82, %c0_83, %c0_84] : memref<9x8x8xbf16, #tpu.memory_space<vmem>>, vector<1x8x8xbf16>
    %81 = vector.shape_cast %80 : vector<1x8x8xbf16> to vector<8x8xbf16>
    %c0_85 = arith.constant 0 : index
    %c10 = arith.constant 10 : index
    %82 = vector.load %arg18[%c0_85, %c10] : memref<8x122xbf16, #tpu.memory_space<vmem>>, vector<8x100xbf16>
    %cst_86 = arith.constant dense<0.000000e+00> : vector<8x100xf32>
    %83 = tpu.matmul %81, %82, %cst_86 {dimension_numbers = #tpu.dot_dimension_numbers<[1], [0], [0], [1], [0, 0, 1, 1], [], []>} : vector<8x8xbf16>, vector<8x100xbf16>, vector<8x100xf32> -> vector<8x100xf32>
    %84 = arith.addf %79, %83 : vector<8x100xf32>
    %c4_87 = arith.constant 4 : index
    %c0_88 = arith.constant 0 : index
    %c0_89 = arith.constant 0 : index
    %85 = vector.load %arg4[%c4_87, %c0_88, %c0_89] : memref<9x8x8xbf16, #tpu.memory_space<vmem>>, vector<1x8x8xbf16>
    %86 = vector.shape_cast %85 : vector<1x8x8xbf16> to vector<8x8xbf16>
    %c0_90 = arith.constant 0 : index
    %c11 = arith.constant 11 : index
    %87 = vector.load %arg18[%c0_90, %c11] : memref<8x122xbf16, #tpu.memory_space<vmem>>, vector<8x100xbf16>
    %cst_91 = arith.constant dense<0.000000e+00> : vector<8x100xf32>
    %88 = tpu.matmul %86, %87, %cst_91 {dimension_numbers = #tpu.dot_dimension_numbers<[1], [0], [0], [1], [0, 0, 1, 1], [], []>} : vector<8x8xbf16>, vector<8x100xbf16>, vector<8x100xf32> -> vector<8x100xf32>
    %89 = arith.addf %84, %88 : vector<8x100xf32>
    %c5_92 = arith.constant 5 : index
    %c0_93 = arith.constant 0 : index
    %c0_94 = arith.constant 0 : index
    %90 = vector.load %arg4[%c5_92, %c0_93, %c0_94] : memref<9x8x8xbf16, #tpu.memory_space<vmem>>, vector<1x8x8xbf16>
    %91 = vector.shape_cast %90 : vector<1x8x8xbf16> to vector<8x8xbf16>
    %c0_95 = arith.constant 0 : index
    %c12 = arith.constant 12 : index
    %92 = vector.load %arg18[%c0_95, %c12] : memref<8x122xbf16, #tpu.memory_space<vmem>>, vector<8x100xbf16>
    %cst_96 = arith.constant dense<0.000000e+00> : vector<8x100xf32>
    %93 = tpu.matmul %91, %92, %cst_96 {dimension_numbers = #tpu.dot_dimension_numbers<[1], [0], [0], [1], [0, 0, 1, 1], [], []>} : vector<8x8xbf16>, vector<8x100xbf16>, vector<8x100xf32> -> vector<8x100xf32>
    %94 = arith.addf %89, %93 : vector<8x100xf32>
    %c6_97 = arith.constant 6 : index
    %c0_98 = arith.constant 0 : index
    %c0_99 = arith.constant 0 : index
    %95 = vector.load %arg4[%c6_97, %c0_98, %c0_99] : memref<9x8x8xbf16, #tpu.memory_space<vmem>>, vector<1x8x8xbf16>
    %96 = vector.shape_cast %95 : vector<1x8x8xbf16> to vector<8x8xbf16>
    %c0_100 = arith.constant 0 : index
    %c20_101 = arith.constant 20 : index
    %97 = vector.load %arg18[%c0_100, %c20_101] : memref<8x122xbf16, #tpu.memory_space<vmem>>, vector<8x100xbf16>
    %cst_102 = arith.constant dense<0.000000e+00> : vector<8x100xf32>
    %98 = tpu.matmul %96, %97, %cst_102 {dimension_numbers = #tpu.dot_dimension_numbers<[1], [0], [0], [1], [0, 0, 1, 1], [], []>} : vector<8x8xbf16>, vector<8x100xbf16>, vector<8x100xf32> -> vector<8x100xf32>
    %99 = arith.addf %94, %98 : vector<8x100xf32>
    %c7_103 = arith.constant 7 : index
    %c0_104 = arith.constant 0 : index
    %c0_105 = arith.constant 0 : index
    %100 = vector.load %arg4[%c7_103, %c0_104, %c0_105] : memref<9x8x8xbf16, #tpu.memory_space<vmem>>, vector<1x8x8xbf16>
    %101 = vector.shape_cast %100 : vector<1x8x8xbf16> to vector<8x8xbf16>
    %c0_106 = arith.constant 0 : index
    %c21 = arith.constant 21 : index
    %102 = vector.load %arg18[%c0_106, %c21] : memref<8x122xbf16, #tpu.memory_space<vmem>>, vector<8x100xbf16>
    %cst_107 = arith.constant dense<0.000000e+00> : vector<8x100xf32>
    %103 = tpu.matmul %101, %102, %cst_107 {dimension_numbers = #tpu.dot_dimension_numbers<[1], [0], [0], [1], [0, 0, 1, 1], [], []>} : vector<8x8xbf16>, vector<8x100xbf16>, vector<8x100xf32> -> vector<8x100xf32>
    %104 = arith.addf %99, %103 : vector<8x100xf32>
    %c8_108 = arith.constant 8 : index
    %c0_109 = arith.constant 0 : index
    %c0_110 = arith.constant 0 : index
    %105 = vector.load %arg4[%c8_108, %c0_109, %c0_110] : memref<9x8x8xbf16, #tpu.memory_space<vmem>>, vector<1x8x8xbf16>
    %106 = vector.shape_cast %105 : vector<1x8x8xbf16> to vector<8x8xbf16>
    %c0_111 = arith.constant 0 : index
    %c22 = arith.constant 22 : index
    %107 = vector.load %arg18[%c0_111, %c22] : memref<8x122xbf16, #tpu.memory_space<vmem>>, vector<8x100xbf16>
    %cst_112 = arith.constant dense<0.000000e+00> : vector<8x100xf32>
    %108 = tpu.matmul %106, %107, %cst_112 {dimension_numbers = #tpu.dot_dimension_numbers<[1], [0], [0], [1], [0, 0, 1, 1], [], []>} : vector<8x8xbf16>, vector<8x100xbf16>, vector<8x100xf32> -> vector<8x100xf32>
    %109 = arith.addf %104, %108 : vector<8x100xf32>
    %cst_113 = arith.constant 0.000000e+00 : f32
    %110 = vector.broadcast %cst_113 : f32 to vector<8x100xf32>
    %c0_114 = arith.constant 0 : index
    %c0_115 = arith.constant 0 : index
    %c0_116 = arith.constant 0 : index
    %111 = vector.load %arg5[%c0_114, %c0_115, %c0_116] : memref<9x8x8xbf16, #tpu.memory_space<vmem>>, vector<1x8x8xbf16>
    %112 = vector.shape_cast %111 : vector<1x8x8xbf16> to vector<8x8xbf16>
    %c0_117 = arith.constant 0 : index
    %c0_118 = arith.constant 0 : index
    %113 = vector.load %arg18[%c0_117, %c0_118] : memref<8x122xbf16, #tpu.memory_space<vmem>>, vector<8x100xbf16>
    %cst_119 = arith.constant dense<0.000000e+00> : vector<8x100xf32>
    %114 = tpu.matmul %112, %113, %cst_119 {dimension_numbers = #tpu.dot_dimension_numbers<[1], [0], [0], [1], [0, 0, 1, 1], [], []>} : vector<8x8xbf16>, vector<8x100xbf16>, vector<8x100xf32> -> vector<8x100xf32>
    %115 = arith.addf %110, %114 : vector<8x100xf32>
    %c1_120 = arith.constant 1 : index
    %c0_121 = arith.constant 0 : index
    %c0_122 = arith.constant 0 : index
    %116 = vector.load %arg5[%c1_120, %c0_121, %c0_122] : memref<9x8x8xbf16, #tpu.memory_space<vmem>>, vector<1x8x8xbf16>
    %117 = vector.shape_cast %116 : vector<1x8x8xbf16> to vector<8x8xbf16>
    %c0_123 = arith.constant 0 : index
    %c1_124 = arith.constant 1 : index
    %118 = vector.load %arg18[%c0_123, %c1_124] : memref<8x122xbf16, #tpu.memory_space<vmem>>, vector<8x100xbf16>
    %cst_125 = arith.constant dense<0.000000e+00> : vector<8x100xf32>
    %119 = tpu.matmul %117, %118, %cst_125 {dimension_numbers = #tpu.dot_dimension_numbers<[1], [0], [0], [1], [0, 0, 1, 1], [], []>} : vector<8x8xbf16>, vector<8x100xbf16>, vector<8x100xf32> -> vector<8x100xf32>
    %120 = arith.addf %115, %119 : vector<8x100xf32>
    %c2_126 = arith.constant 2 : index
    %c0_127 = arith.constant 0 : index
    %c0_128 = arith.constant 0 : index
    %121 = vector.load %arg5[%c2_126, %c0_127, %c0_128] : memref<9x8x8xbf16, #tpu.memory_space<vmem>>, vector<1x8x8xbf16>
    %122 = vector.shape_cast %121 : vector<1x8x8xbf16> to vector<8x8xbf16>
    %c0_129 = arith.constant 0 : index
    %c2_130 = arith.constant 2 : index
    %123 = vector.load %arg18[%c0_129, %c2_130] : memref<8x122xbf16, #tpu.memory_space<vmem>>, vector<8x100xbf16>
    %cst_131 = arith.constant dense<0.000000e+00> : vector<8x100xf32>
    %124 = tpu.matmul %122, %123, %cst_131 {dimension_numbers = #tpu.dot_dimension_numbers<[1], [0], [0], [1], [0, 0, 1, 1], [], []>} : vector<8x8xbf16>, vector<8x100xbf16>, vector<8x100xf32> -> vector<8x100xf32>
    %125 = arith.addf %120, %124 : vector<8x100xf32>
    %c3_132 = arith.constant 3 : index
    %c0_133 = arith.constant 0 : index
    %c0_134 = arith.constant 0 : index
    %126 = vector.load %arg5[%c3_132, %c0_133, %c0_134] : memref<9x8x8xbf16, #tpu.memory_space<vmem>>, vector<1x8x8xbf16>
    %127 = vector.shape_cast %126 : vector<1x8x8xbf16> to vector<8x8xbf16>
    %c0_135 = arith.constant 0 : index
    %c10_136 = arith.constant 10 : index
    %128 = vector.load %arg18[%c0_135, %c10_136] : memref<8x122xbf16, #tpu.memory_space<vmem>>, vector<8x100xbf16>
    %cst_137 = arith.constant dense<0.000000e+00> : vector<8x100xf32>
    %129 = tpu.matmul %127, %128, %cst_137 {dimension_numbers = #tpu.dot_dimension_numbers<[1], [0], [0], [1], [0, 0, 1, 1], [], []>} : vector<8x8xbf16>, vector<8x100xbf16>, vector<8x100xf32> -> vector<8x100xf32>
    %130 = arith.addf %125, %129 : vector<8x100xf32>
    %c4_138 = arith.constant 4 : index
    %c0_139 = arith.constant 0 : index
    %c0_140 = arith.constant 0 : index
    %131 = vector.load %arg5[%c4_138, %c0_139, %c0_140] : memref<9x8x8xbf16, #tpu.memory_space<vmem>>, vector<1x8x8xbf16>
    %132 = vector.shape_cast %131 : vector<1x8x8xbf16> to vector<8x8xbf16>
    %c0_141 = arith.constant 0 : index
    %c11_142 = arith.constant 11 : index
    %133 = vector.load %arg18[%c0_141, %c11_142] : memref<8x122xbf16, #tpu.memory_space<vmem>>, vector<8x100xbf16>
    %cst_143 = arith.constant dense<0.000000e+00> : vector<8x100xf32>
    %134 = tpu.matmul %132, %133, %cst_143 {dimension_numbers = #tpu.dot_dimension_numbers<[1], [0], [0], [1], [0, 0, 1, 1], [], []>} : vector<8x8xbf16>, vector<8x100xbf16>, vector<8x100xf32> -> vector<8x100xf32>
    %135 = arith.addf %130, %134 : vector<8x100xf32>
    %c5_144 = arith.constant 5 : index
    %c0_145 = arith.constant 0 : index
    %c0_146 = arith.constant 0 : index
    %136 = vector.load %arg5[%c5_144, %c0_145, %c0_146] : memref<9x8x8xbf16, #tpu.memory_space<vmem>>, vector<1x8x8xbf16>
    %137 = vector.shape_cast %136 : vector<1x8x8xbf16> to vector<8x8xbf16>
    %c0_147 = arith.constant 0 : index
    %c12_148 = arith.constant 12 : index
    %138 = vector.load %arg18[%c0_147, %c12_148] : memref<8x122xbf16, #tpu.memory_space<vmem>>, vector<8x100xbf16>
    %cst_149 = arith.constant dense<0.000000e+00> : vector<8x100xf32>
    %139 = tpu.matmul %137, %138, %cst_149 {dimension_numbers = #tpu.dot_dimension_numbers<[1], [0], [0], [1], [0, 0, 1, 1], [], []>} : vector<8x8xbf16>, vector<8x100xbf16>, vector<8x100xf32> -> vector<8x100xf32>
    %140 = arith.addf %135, %139 : vector<8x100xf32>
    %c6_150 = arith.constant 6 : index
    %c0_151 = arith.constant 0 : index
    %c0_152 = arith.constant 0 : index
    %141 = vector.load %arg5[%c6_150, %c0_151, %c0_152] : memref<9x8x8xbf16, #tpu.memory_space<vmem>>, vector<1x8x8xbf16>
    %142 = vector.shape_cast %141 : vector<1x8x8xbf16> to vector<8x8xbf16>
    %c0_153 = arith.constant 0 : index
    %c20_154 = arith.constant 20 : index
    %143 = vector.load %arg18[%c0_153, %c20_154] : memref<8x122xbf16, #tpu.memory_space<vmem>>, vector<8x100xbf16>
    %cst_155 = arith.constant dense<0.000000e+00> : vector<8x100xf32>
    %144 = tpu.matmul %142, %143, %cst_155 {dimension_numbers = #tpu.dot_dimension_numbers<[1], [0], [0], [1], [0, 0, 1, 1], [], []>} : vector<8x8xbf16>, vector<8x100xbf16>, vector<8x100xf32> -> vector<8x100xf32>
    %145 = arith.addf %140, %144 : vector<8x100xf32>
    %c7_156 = arith.constant 7 : index
    %c0_157 = arith.constant 0 : index
    %c0_158 = arith.constant 0 : index
    %146 = vector.load %arg5[%c7_156, %c0_157, %c0_158] : memref<9x8x8xbf16, #tpu.memory_space<vmem>>, vector<1x8x8xbf16>
    %147 = vector.shape_cast %146 : vector<1x8x8xbf16> to vector<8x8xbf16>
    %c0_159 = arith.constant 0 : index
    %c21_160 = arith.constant 21 : index
    %148 = vector.load %arg18[%c0_159, %c21_160] : memref<8x122xbf16, #tpu.memory_space<vmem>>, vector<8x100xbf16>
    %cst_161 = arith.constant dense<0.000000e+00> : vector<8x100xf32>
    %149 = tpu.matmul %147, %148, %cst_161 {dimension_numbers = #tpu.dot_dimension_numbers<[1], [0], [0], [1], [0, 0, 1, 1], [], []>} : vector<8x8xbf16>, vector<8x100xbf16>, vector<8x100xf32> -> vector<8x100xf32>
    %150 = arith.addf %145, %149 : vector<8x100xf32>
    %c8_162 = arith.constant 8 : index
    %c0_163 = arith.constant 0 : index
    %c0_164 = arith.constant 0 : index
    %151 = vector.load %arg5[%c8_162, %c0_163, %c0_164] : memref<9x8x8xbf16, #tpu.memory_space<vmem>>, vector<1x8x8xbf16>
    %152 = vector.shape_cast %151 : vector<1x8x8xbf16> to vector<8x8xbf16>
    %c0_165 = arith.constant 0 : index
    %c22_166 = arith.constant 22 : index
    %153 = vector.load %arg18[%c0_165, %c22_166] : memref<8x122xbf16, #tpu.memory_space<vmem>>, vector<8x100xbf16>
    %cst_167 = arith.constant dense<0.000000e+00> : vector<8x100xf32>
    %154 = tpu.matmul %152, %153, %cst_167 {dimension_numbers = #tpu.dot_dimension_numbers<[1], [0], [0], [1], [0, 0, 1, 1], [], []>} : vector<8x8xbf16>, vector<8x100xbf16>, vector<8x100xf32> -> vector<8x100xf32>
    %155 = arith.addf %150, %154 : vector<8x100xf32>
    %cst_168 = arith.constant 0.000000e+00 : f32
    %156 = vector.broadcast %cst_168 : f32 to vector<8x100xf32>
    %c0_169 = arith.constant 0 : index
    %c0_170 = arith.constant 0 : index
    %c0_171 = arith.constant 0 : index
    %157 = vector.load %arg6[%c0_169, %c0_170, %c0_171] : memref<9x8x8xbf16, #tpu.memory_space<vmem>>, vector<1x8x8xbf16>
    %158 = vector.shape_cast %157 : vector<1x8x8xbf16> to vector<8x8xbf16>
    %c0_172 = arith.constant 0 : index
    %c0_173 = arith.constant 0 : index
    %159 = vector.load %arg19[%c0_172, %c0_173] : memref<8x122xbf16, #tpu.memory_space<vmem>>, vector<8x100xbf16>
    %cst_174 = arith.constant dense<0.000000e+00> : vector<8x100xf32>
    %160 = tpu.matmul %158, %159, %cst_174 {dimension_numbers = #tpu.dot_dimension_numbers<[1], [0], [0], [1], [0, 0, 1, 1], [], []>} : vector<8x8xbf16>, vector<8x100xbf16>, vector<8x100xf32> -> vector<8x100xf32>
    %161 = arith.addf %156, %160 : vector<8x100xf32>
    %c1_175 = arith.constant 1 : index
    %c0_176 = arith.constant 0 : index
    %c0_177 = arith.constant 0 : index
    %162 = vector.load %arg6[%c1_175, %c0_176, %c0_177] : memref<9x8x8xbf16, #tpu.memory_space<vmem>>, vector<1x8x8xbf16>
    %163 = vector.shape_cast %162 : vector<1x8x8xbf16> to vector<8x8xbf16>
    %c0_178 = arith.constant 0 : index
    %c1_179 = arith.constant 1 : index
    %164 = vector.load %arg19[%c0_178, %c1_179] : memref<8x122xbf16, #tpu.memory_space<vmem>>, vector<8x100xbf16>
    %cst_180 = arith.constant dense<0.000000e+00> : vector<8x100xf32>
    %165 = tpu.matmul %163, %164, %cst_180 {dimension_numbers = #tpu.dot_dimension_numbers<[1], [0], [0], [1], [0, 0, 1, 1], [], []>} : vector<8x8xbf16>, vector<8x100xbf16>, vector<8x100xf32> -> vector<8x100xf32>
    %166 = arith.addf %161, %165 : vector<8x100xf32>
    %c2_181 = arith.constant 2 : index
    %c0_182 = arith.constant 0 : index
    %c0_183 = arith.constant 0 : index
    %167 = vector.load %arg6[%c2_181, %c0_182, %c0_183] : memref<9x8x8xbf16, #tpu.memory_space<vmem>>, vector<1x8x8xbf16>
    %168 = vector.shape_cast %167 : vector<1x8x8xbf16> to vector<8x8xbf16>
    %c0_184 = arith.constant 0 : index
    %c2_185 = arith.constant 2 : index
    %169 = vector.load %arg19[%c0_184, %c2_185] : memref<8x122xbf16, #tpu.memory_space<vmem>>, vector<8x100xbf16>
    %cst_186 = arith.constant dense<0.000000e+00> : vector<8x100xf32>
    %170 = tpu.matmul %168, %169, %cst_186 {dimension_numbers = #tpu.dot_dimension_numbers<[1], [0], [0], [1], [0, 0, 1, 1], [], []>} : vector<8x8xbf16>, vector<8x100xbf16>, vector<8x100xf32> -> vector<8x100xf32>
    %171 = arith.addf %166, %170 : vector<8x100xf32>
    %c3_187 = arith.constant 3 : index
    %c0_188 = arith.constant 0 : index
    %c0_189 = arith.constant 0 : index
    %172 = vector.load %arg6[%c3_187, %c0_188, %c0_189] : memref<9x8x8xbf16, #tpu.memory_space<vmem>>, vector<1x8x8xbf16>
    %173 = vector.shape_cast %172 : vector<1x8x8xbf16> to vector<8x8xbf16>
    %c0_190 = arith.constant 0 : index
    %c10_191 = arith.constant 10 : index
    %174 = vector.load %arg19[%c0_190, %c10_191] : memref<8x122xbf16, #tpu.memory_space<vmem>>, vector<8x100xbf16>
    %cst_192 = arith.constant dense<0.000000e+00> : vector<8x100xf32>
    %175 = tpu.matmul %173, %174, %cst_192 {dimension_numbers = #tpu.dot_dimension_numbers<[1], [0], [0], [1], [0, 0, 1, 1], [], []>} : vector<8x8xbf16>, vector<8x100xbf16>, vector<8x100xf32> -> vector<8x100xf32>
    %176 = arith.addf %171, %175 : vector<8x100xf32>
    %c4_193 = arith.constant 4 : index
    %c0_194 = arith.constant 0 : index
    %c0_195 = arith.constant 0 : index
    %177 = vector.load %arg6[%c4_193, %c0_194, %c0_195] : memref<9x8x8xbf16, #tpu.memory_space<vmem>>, vector<1x8x8xbf16>
    %178 = vector.shape_cast %177 : vector<1x8x8xbf16> to vector<8x8xbf16>
    %c0_196 = arith.constant 0 : index
    %c11_197 = arith.constant 11 : index
    %179 = vector.load %arg19[%c0_196, %c11_197] : memref<8x122xbf16, #tpu.memory_space<vmem>>, vector<8x100xbf16>
    %cst_198 = arith.constant dense<0.000000e+00> : vector<8x100xf32>
    %180 = tpu.matmul %178, %179, %cst_198 {dimension_numbers = #tpu.dot_dimension_numbers<[1], [0], [0], [1], [0, 0, 1, 1], [], []>} : vector<8x8xbf16>, vector<8x100xbf16>, vector<8x100xf32> -> vector<8x100xf32>
    %181 = arith.addf %176, %180 : vector<8x100xf32>
    %c5_199 = arith.constant 5 : index
    %c0_200 = arith.constant 0 : index
    %c0_201 = arith.constant 0 : index
    %182 = vector.load %arg6[%c5_199, %c0_200, %c0_201] : memref<9x8x8xbf16, #tpu.memory_space<vmem>>, vector<1x8x8xbf16>
    %183 = vector.shape_cast %182 : vector<1x8x8xbf16> to vector<8x8xbf16>
    %c0_202 = arith.constant 0 : index
    %c12_203 = arith.constant 12 : index
    %184 = vector.load %arg19[%c0_202, %c12_203] : memref<8x122xbf16, #tpu.memory_space<vmem>>, vector<8x100xbf16>
    %cst_204 = arith.constant dense<0.000000e+00> : vector<8x100xf32>
    %185 = tpu.matmul %183, %184, %cst_204 {dimension_numbers = #tpu.dot_dimension_numbers<[1], [0], [0], [1], [0, 0, 1, 1], [], []>} : vector<8x8xbf16>, vector<8x100xbf16>, vector<8x100xf32> -> vector<8x100xf32>
    %186 = arith.addf %181, %185 : vector<8x100xf32>
    %c6_205 = arith.constant 6 : index
    %c0_206 = arith.constant 0 : index
    %c0_207 = arith.constant 0 : index
    %187 = vector.load %arg6[%c6_205, %c0_206, %c0_207] : memref<9x8x8xbf16, #tpu.memory_space<vmem>>, vector<1x8x8xbf16>
    %188 = vector.shape_cast %187 : vector<1x8x8xbf16> to vector<8x8xbf16>
    %c0_208 = arith.constant 0 : index
    %c20_209 = arith.constant 20 : index
    %189 = vector.load %arg19[%c0_208, %c20_209] : memref<8x122xbf16, #tpu.memory_space<vmem>>, vector<8x100xbf16>
    %cst_210 = arith.constant dense<0.000000e+00> : vector<8x100xf32>
    %190 = tpu.matmul %188, %189, %cst_210 {dimension_numbers = #tpu.dot_dimension_numbers<[1], [0], [0], [1], [0, 0, 1, 1], [], []>} : vector<8x8xbf16>, vector<8x100xbf16>, vector<8x100xf32> -> vector<8x100xf32>
    %191 = arith.addf %186, %190 : vector<8x100xf32>
    %c7_211 = arith.constant 7 : index
    %c0_212 = arith.constant 0 : index
    %c0_213 = arith.constant 0 : index
    %192 = vector.load %arg6[%c7_211, %c0_212, %c0_213] : memref<9x8x8xbf16, #tpu.memory_space<vmem>>, vector<1x8x8xbf16>
    %193 = vector.shape_cast %192 : vector<1x8x8xbf16> to vector<8x8xbf16>
    %c0_214 = arith.constant 0 : index
    %c21_215 = arith.constant 21 : index
    %194 = vector.load %arg19[%c0_214, %c21_215] : memref<8x122xbf16, #tpu.memory_space<vmem>>, vector<8x100xbf16>
    %cst_216 = arith.constant dense<0.000000e+00> : vector<8x100xf32>
    %195 = tpu.matmul %193, %194, %cst_216 {dimension_numbers = #tpu.dot_dimension_numbers<[1], [0], [0], [1], [0, 0, 1, 1], [], []>} : vector<8x8xbf16>, vector<8x100xbf16>, vector<8x100xf32> -> vector<8x100xf32>
    %196 = arith.addf %191, %195 : vector<8x100xf32>
    %c8_217 = arith.constant 8 : index
    %c0_218 = arith.constant 0 : index
    %c0_219 = arith.constant 0 : index
    %197 = vector.load %arg6[%c8_217, %c0_218, %c0_219] : memref<9x8x8xbf16, #tpu.memory_space<vmem>>, vector<1x8x8xbf16>
    %198 = vector.shape_cast %197 : vector<1x8x8xbf16> to vector<8x8xbf16>
    %c0_220 = arith.constant 0 : index
    %c22_221 = arith.constant 22 : index
    %199 = vector.load %arg19[%c0_220, %c22_221] : memref<8x122xbf16, #tpu.memory_space<vmem>>, vector<8x100xbf16>
    %cst_222 = arith.constant dense<0.000000e+00> : vector<8x100xf32>
    %200 = tpu.matmul %198, %199, %cst_222 {dimension_numbers = #tpu.dot_dimension_numbers<[1], [0], [0], [1], [0, 0, 1, 1], [], []>} : vector<8x8xbf16>, vector<8x100xbf16>, vector<8x100xf32> -> vector<8x100xf32>
    %201 = arith.addf %196, %200 : vector<8x100xf32>
    %c0_223 = arith.constant 0 : index
    %c0_224 = arith.constant 0 : index
    %202 = vector.load %arg12[%c0_223, %c0_224] : memref<324x256xf32, #tpu.memory_space<vmem>>, vector<324x256xf32>
    %cst_225 = arith.constant dense<0.000000e+00> : vector<8x256xf32>
    %203 = tpu.matmul %63, %202, %cst_225 {dimension_numbers = #tpu.dot_dimension_numbers<[1], [0], [0], [1], [0, 0, 1, 1], [], []>} : vector<8x324xf32>, vector<324x256xf32>, vector<8x256xf32> -> vector<8x256xf32>
    %c0_226 = arith.constant 0 : index
    %c0_227 = arith.constant 0 : index
    %204 = vector.load %arg13[%c0_226, %c0_227] : memref<100x256xf32, #tpu.memory_space<vmem>>, vector<100x256xf32>
    %cst_228 = arith.constant dense<0.000000e+00> : vector<8x256xf32>
    %205 = tpu.matmul %109, %204, %cst_228 {dimension_numbers = #tpu.dot_dimension_numbers<[1], [0], [0], [1], [0, 0, 1, 1], [], []>} : vector<8x100xf32>, vector<100x256xf32>, vector<8x256xf32> -> vector<8x256xf32>
    %206 = arith.addf %203, %205 : vector<8x256xf32>
    %c0_229 = arith.constant 0 : index
    %c0_230 = arith.constant 0 : index
    %207 = vector.load %arg7[%c0_229, %c0_230] : memref<8x1xf32, #tpu.memory_space<vmem>>, vector<8x1xf32>
    %208 = vector.broadcast %207 : vector<8x1xf32> to vector<8x256xf32>
    %209 = arith.addf %206, %208 : vector<8x256xf32>
    %210 = arith.addf %155, %201 : vector<8x100xf32>
    %c0_231 = arith.constant 0 : index
    %c0_232 = arith.constant 0 : index
    %211 = vector.load %arg14[%c0_231, %c0_232] : memref<100x64xf32, #tpu.memory_space<vmem>>, vector<100x64xf32>
    %cst_233 = arith.constant dense<0.000000e+00> : vector<8x64xf32>
    %212 = tpu.matmul %210, %211, %cst_233 {dimension_numbers = #tpu.dot_dimension_numbers<[1], [0], [0], [1], [0, 0, 1, 1], [], []>} : vector<8x100xf32>, vector<100x64xf32>, vector<8x64xf32> -> vector<8x64xf32>
    %c0_234 = arith.constant 0 : index
    %c0_235 = arith.constant 0 : index
    %213 = vector.load %arg8[%c0_234, %c0_235] : memref<8x1xf32, #tpu.memory_space<vmem>>, vector<8x1xf32>
    %214 = vector.broadcast %213 : vector<8x1xf32> to vector<8x64xf32>
    %215 = arith.addf %212, %214 : vector<8x64xf32>
    %216 = vector.extract_strided_slice %209 {offsets = [0, 0], sizes = [2, 256], strides = [1, 1]} : vector<8x256xf32> to vector<2x256xf32>
    %c0_236 = arith.constant 0 : index
    %c0_237 = arith.constant 0 : index
    %c0_238 = arith.constant 0 : index
    %217 = vector.load %arg15[%c0_236, %c0_237, %c0_238] : memref<1x2x256xf32, #tpu.memory_space<vmem>>, vector<1x2x256xf32>
    %218 = vector.shape_cast %217 : vector<1x2x256xf32> to vector<2x256xf32>
    %219 = vector.shape_cast %216 : vector<2x256xf32> to vector<1x2x256xf32>
    tpu.vector_store %arg15[%c0_236, %c0_237, %c0_238], %219 {strides = array<i32>} : memref<1x2x256xf32, #tpu.memory_space<vmem>>, vector<1x2x256xf32>,
    %220 = vector.extract_strided_slice %215 {offsets = [0, 0], sizes = [2, 64], strides = [1, 1]} : vector<8x64xf32> to vector<2x64xf32>
    %c0_239 = arith.constant 0 : index
    %c0_240 = arith.constant 0 : index
    %c0_241 = arith.constant 0 : index
    %221 = vector.load %arg16[%c0_239, %c0_240, %c0_241] : memref<1x2x64xf32, #tpu.memory_space<vmem>>, vector<1x2x64xf32>
    %222 = vector.shape_cast %221 : vector<1x2x64xf32> to vector<2x64xf32>
    %223 = vector.shape_cast %220 : vector<2x64xf32> to vector<1x2x64xf32>
    tpu.vector_store %arg16[%c0_239, %c0_240, %c0_241], %223 {strides = array<i32>} : memref<1x2x64xf32, #tpu.memory_space<vmem>>, vector<1x2x64xf32>,
    return
  }
  func.func @transform_0(%arg0: i32) -> (i32, i32, i32) {
    %c0_i32 = arith.constant 0 : i32
    %c0_i32_0 = arith.constant 0 : i32
    %c0_i32_1 = arith.constant 0 : i32
    return %arg0, %c0_i32, %c0_i32_0 : i32, i32, i32
  }
  func.func @transform_1(%arg0: i32) -> (i32, i32, i32) {
    %c0_i32 = arith.constant 0 : i32
    %c0_i32_0 = arith.constant 0 : i32
    %c0_i32_1 = arith.constant 0 : i32
    return %arg0, %c0_i32, %c0_i32_0 : i32, i32, i32
  }
  func.func @transform_2(%arg0: i32) -> (i32, i32, i32) {
    %c0_i32 = arith.constant 0 : i32
    %c0_i32_0 = arith.constant 0 : i32
    %c0_i32_1 = arith.constant 0 : i32
    %c0_i32_2 = arith.constant 0 : i32
    return %c0_i32, %c0_i32_0, %c0_i32_1 : i32, i32, i32
  }
  func.func @transform_3(%arg0: i32) -> (i32, i32, i32) {
    %c0_i32 = arith.constant 0 : i32
    %c0_i32_0 = arith.constant 0 : i32
    %c0_i32_1 = arith.constant 0 : i32
    %c0_i32_2 = arith.constant 0 : i32
    return %c0_i32, %c0_i32_0, %c0_i32_1 : i32, i32, i32
  }
  func.func @transform_4(%arg0: i32) -> (i32, i32, i32) {
    %c0_i32 = arith.constant 0 : i32
    %c0_i32_0 = arith.constant 0 : i32
    %c0_i32_1 = arith.constant 0 : i32
    %c0_i32_2 = arith.constant 0 : i32
    return %c0_i32, %c0_i32_0, %c0_i32_1 : i32, i32, i32
  }
  func.func @transform_5(%arg0: i32) -> (i32, i32, i32) {
    %c0_i32 = arith.constant 0 : i32
    %c0_i32_0 = arith.constant 0 : i32
    %c0_i32_1 = arith.constant 0 : i32
    %c0_i32_2 = arith.constant 0 : i32
    return %c0_i32, %c0_i32_0, %c0_i32_1 : i32, i32, i32
  }
  func.func @transform_6(%arg0: i32) -> (i32, i32) {
    %c0_i32 = arith.constant 0 : i32
    %c0_i32_0 = arith.constant 0 : i32
    %c0_i32_1 = arith.constant 0 : i32
    return %c0_i32, %c0_i32_0 : i32, i32
  }
  func.func @transform_7(%arg0: i32) -> (i32, i32) {
    %c0_i32 = arith.constant 0 : i32
    %c0_i32_0 = arith.constant 0 : i32
    %c0_i32_1 = arith.constant 0 : i32
    return %c0_i32, %c0_i32_0 : i32, i32
  }
  func.func @transform_8(%arg0: i32) -> (i32, i32) {
    %c0_i32 = arith.constant 0 : i32
    %c0_i32_0 = arith.constant 0 : i32
    %c0_i32_1 = arith.constant 0 : i32
    return %c0_i32, %c0_i32_0 : i32, i32
  }
  func.func @transform_9(%arg0: i32) -> (i32, i32) {
    %c0_i32 = arith.constant 0 : i32
    %c0_i32_0 = arith.constant 0 : i32
    %c0_i32_1 = arith.constant 0 : i32
    return %c0_i32, %c0_i32_0 : i32, i32
  }
  func.func @transform_10(%arg0: i32) -> (i32, i32) {
    %c0_i32 = arith.constant 0 : i32
    %c0_i32_0 = arith.constant 0 : i32
    %c0_i32_1 = arith.constant 0 : i32
    return %c0_i32, %c0_i32_0 : i32, i32
  }
  func.func @transform_11(%arg0: i32) -> (i32, i32) {
    %c0_i32 = arith.constant 0 : i32
    %c0_i32_0 = arith.constant 0 : i32
    %c0_i32_1 = arith.constant 0 : i32
    return %c0_i32, %c0_i32_0 : i32, i32
  }
  func.func @transform_12(%arg0: i32) -> (i32, i32) {
    %c0_i32 = arith.constant 0 : i32
    %c0_i32_0 = arith.constant 0 : i32
    %c0_i32_1 = arith.constant 0 : i32
    return %c0_i32, %c0_i32_0 : i32, i32
  }
  func.func @transform_13(%arg0: i32) -> (i32, i32) {
    %c0_i32 = arith.constant 0 : i32
    %c0_i32_0 = arith.constant 0 : i32
    %c0_i32_1 = arith.constant 0 : i32
    return %c0_i32, %c0_i32_0 : i32, i32
  }
  func.func @transform_14(%arg0: i32) -> (i32, i32, i32) {
    %c0_i32 = arith.constant 0 : i32
    %c0_i32_0 = arith.constant 0 : i32
    %c0_i32_1 = arith.constant 0 : i32
    return %arg0, %c0_i32, %c0_i32_0 : i32, i32, i32
  }
  func.func @transform_15(%arg0: i32) -> (i32, i32, i32) {
    %c0_i32 = arith.constant 0 : i32
    %c0_i32_0 = arith.constant 0 : i32
    %c0_i32_1 = arith.constant 0 : i32
    return %arg0, %c0_i32, %c0_i32_0 : i32, i32, i32
  }
}

</mosaic_0001>

<llo_original>
// kernel: octconv2d_forward.1
$region0: #{octconv2d_forward.1}
  #allocation0 [shape = 'u32[]', space=smem, size = 0x4, offset = 0x4, fixed_abs, tag = 'smem constant byte address 0x4 - core index']
  #allocation1 [shape = 'u32[144,128]{1,0:T(1,128)}', space=vmem, size = 0x12000, scoped, tag = 'internal scratch']
  #allocation2 [shape = 'bf16[8,362]{1,0:T(8,128)(2,1)}', space=vmem, size = 0x1800, scoped, tag = 'scratch operand']
  #allocation3 [shape = 'bf16[8,122]{1,0:T(8,128)(2,1)}', space=vmem, size = 0x800, scoped, tag = 'scratch operand']
  #allocation4 [shape = 'bf16[8,122]{1,0:T(8,128)(2,1)}', space=vmem, size = 0x800, scoped, tag = 'scratch operand']
  %s0 = inlined_call_operand.vmem [shape: bf16[2,8,256], index: 0, kind: input, shape index: {}]
  %s1 = inlined_call_operand.vmem [shape: bf16[2,8,64], index: 1, kind: input, shape index: {}]
  %s2 = inlined_call_operand.vmem [shape: bf16[9,8,8], index: 2, kind: input, shape index: {}]
  %s3 = inlined_call_operand.vmem [shape: bf16[9,8,8], index: 3, kind: input, shape index: {}]
  %s4 = inlined_call_operand.vmem [shape: bf16[9,8,8], index: 4, kind: input, shape index: {}]
  %s5 = inlined_call_operand.vmem [shape: bf16[9,8,8], index: 5, kind: input, shape index: {}]
  %s6 = inlined_call_operand.vmem [shape: f32[8,1], index: 6, kind: input, shape index: {}]
  %s7 = inlined_call_operand.vmem [shape: f32[8,1], index: 7, kind: input, shape index: {}]
  %s8 = inlined_call_operand.vmem [shape: bf16[256,362], index: 8, kind: input, shape index: {}]
  %s9 = inlined_call_operand.vmem [shape: bf16[64,122], index: 9, kind: input, shape index: {}]
  %s10 = inlined_call_operand.vmem [shape: bf16[256,122], index: 10, kind: input, shape index: {}]
  %s11 = inlined_call_operand.vmem [shape: f32[324,256], index: 11, kind: input, shape index: {}]
  %s12 = inlined_call_operand.vmem [shape: f32[100,256], index: 12, kind: input, shape index: {}]
  %s13 = inlined_call_operand.hbm [shape: f32[100,64], index: 13, kind: input, shape index: {}]
  %s14 = inlined_call_operand.vmem [shape: f32[2,2,256], index: 14, kind: output, shape index: {0}]
  %s15 = inlined_call_operand.vmem [shape: f32[2,2,64], index: 15, kind: output, shape index: {1}]
  %16 = xla_tuple %s14, %s15
  %s17 = sld [smem:[#allocation0]]
  $region101: #{octconv2d_forward.1} parent=0
    _
  %s19 = ssub.s32 1, %s17
  %s20 = scalar_select 0, %s19, %s17
  $region1: #{octconv2d_forward.1} parent=0
    #allocation5 [shape = 'u8[53248]{0}', space=vmem, size = 0xd000, scoped, tag = 'input window, operand 13, single buffered']
    #allocation6 [shape = 's32[2]{0}', space=sflag, size = 0x8, scoped, tag = 'scoped memory for octconv2d_forward.1']
    %21 = vsyncpa [#allocation6], 0
    loop: start=0, step=1, limit=4
    $region2: #{octconv2d_forward.1} parent=1 // loop_pre_header
      _
    $region3: #{octconv2d_forward.1} parent=1 // loop_header
      %s23 = sphi 0, %s27
      %p24 = scmp.ge.s32.totalorder %s23, 4
      %s33 = sphi 0, %s35
      %s36 = sphi 0, %s33
      %s37 = sphi 0, %s36
      %s53 = sphi 0, %s37
      %s59 = sphi 0, %s61
      %s62 = sphi 0, %s59
      %s63 = sphi 0, %s62
      %s79 = sphi 0, %s63
      %s83 = sphi 0, %s83
      %s85 = sphi 0, %s83
      %s86 = sphi 0, %s85
      %s100 = sphi 0, %s86
      %s104 = sphi 0, %s104
      %s106 = sphi 0, %s104
      %s107 = sphi 0, %s106
      %s121 = sphi 0, %s107
      %s125 = sphi 0, %s125
      %s127 = sphi 0, %s125
      %s128 = sphi 0, %s127
      %s142 = sphi 0, %s128
      %s146 = sphi 0, %s146
      %s148 = sphi 0, %s146
      %s149 = sphi 0, %s148
      %s163 = sphi 0, %s149
      %s167 = sphi 0, %s167
      %s169 = sphi 0, %s167
      %s170 = sphi 0, %s169
      %s184 = sphi 0, %s170
      %s188 = sphi 0, %s188
      %s190 = sphi 0, %s188
      %s191 = sphi 0, %s190
      %s205 = sphi 0, %s191
      %s209 = sphi 0, %s209
      %s211 = sphi 0, %s209
      %s212 = sphi 0, %s211
      %s226 = sphi 0, %s212
      %s230 = sphi 0, %s230
      %s232 = sphi 0, %s230
      %s233 = sphi 0, %s232
      %s247 = sphi 0, %s233
      %s251 = sphi 0, %s251
      %s253 = sphi 0, %s251
      %s254 = sphi 0, %s253
      %s268 = sphi 0, %s254
      %s272 = sphi 0, %s272
      %s274 = sphi 0, %s272
      %s275 = sphi 0, %s274
      %s289 = sphi 0, %s275
      %s293 = sphi 0, %s293
      %s295 = sphi 0, %s293
      %s296 = sphi 0, %s295
      %s310 = sphi 0, %s296
      %s314 = sphi 0, %s314
      %s316 = sphi 0, %s314
      %s317 = sphi 0, %s316
      %s331 = sphi 0, %s317
      %s337 = sphi 0, %s339
      %s340 = sphi 0, %s337
      %s341 = sphi 0, %s340
      %s357 = sphi 0, %s341
      %s363 = sphi 0, %s365
      %s366 = sphi 0, %s363
      %s367 = sphi 0, %s366
      %s383 = sphi 0, %s367
    $region4: #{octconv2d_forward.1} parent=1 // loop_header_branch
      %26 = sbr.rel (%p24) target = $region8
    $region5: #{octconv2d_forward.1} parent=1 // loop_body
      %s28 = ssub.s32 %s23, 1
      %s29 = ssub.s32 %s23, 2
      %s30 = sadd.s32 %s23, 1
      %s31 = ssub.s32 %s23, %s30
      %p32 = scmp.eq.s32.totalorder %s31, 0
      %s34 = sadd.s32 %s33, 1
      %s35 = scalar_select %p32, %s33, %s34
      %p38 = pneg %p32
      %p39 = scmp.eq.s32.totalorder %s23, 1
      %p40 = por %p38, %p39
      %p41 = scmp.ne.s32.totalorder %s33, %s36
      %p42 = scmp.eq.s32.totalorder %s23, 0
      %p43 = por %p41, %p42
      %p44 = scmp.ne.s32.totalorder %s33, %s36
      %p45 = scmp.eq.s32.totalorder %s28, 1
      %p46 = por %p44, %p45
      %p47 = scmp.ne.s32.totalorder %s36, %s37
      %p48 = scmp.eq.s32.totalorder %s28, 0
      %p49 = por %p47, %p48
      %p50 = scmp.ne.s32.totalorder %s36, %s37
      %p51 = scmp.eq.s32.totalorder %s29, 1
      %p52 = por %p50, %p51
      %p54 = scmp.ne.s32.totalorder %s37, %s53
      %p55 = scmp.eq.s32.totalorder %s29, 0
      %p56 = por %p54, %p55
      %s57 = ssub.s32 %s23, %s30
      %p58 = scmp.eq.s32.totalorder %s57, 0
      %s60 = sadd.s32 %s59, 1
      %s61 = scalar_select %p58, %s59, %s60
      %p64 = pneg %p58
      %p65 = scmp.eq.s32.totalorder %s23, 1
      %p66 = por %p64, %p65
      %p67 = scmp.ne.s32.totalorder %s59, %s62
      %p68 = scmp.eq.s32.totalorder %s23, 0
      %p69 = por %p67, %p68
      %p70 = scmp.ne.s32.totalorder %s59, %s62
      %p71 = scmp.eq.s32.totalorder %s28, 1
      %p72 = por %p70, %p71
      %p73 = scmp.ne.s32.totalorder %s62, %s63
      %p74 = scmp.eq.s32.totalorder %s28, 0
      %p75 = por %p73, %p74
      %p76 = scmp.ne.s32.totalorder %s62, %s63
      %p77 = scmp.eq.s32.totalorder %s29, 1
      %p78 = por %p76, %p77
      %p80 = scmp.ne.s32.totalorder %s63, %s79
      %p81 = scmp.eq.s32.totalorder %s29, 0
      %p82 = por %p80, %p81
      %s84 = sadd.s32 %s83, 1
      %p87 = scmp.eq.s32.totalorder %s23, 1
      %p88 = scmp.ne.s32.totalorder %s83, %s85
      %p89 = scmp.eq.s32.totalorder %s23, 0
      %p90 = por %p88, %p89
      %p91 = scmp.ne.s32.totalorder %s83, %s85
      %p92 = scmp.eq.s32.totalorder %s28, 1
      %p93 = por %p91, %p92
      %p94 = scmp.ne.s32.totalorder %s85, %s86
      %p95 = scmp.eq.s32.totalorder %s28, 0
      %p96 = por %p94, %p95
      %p97 = scmp.ne.s32.totalorder %s85, %s86
      %p98 = scmp.eq.s32.totalorder %s29, 1
      %p99 = por %p97, %p98
      %p101 = scmp.ne.s32.totalorder %s86, %s100
      %p102 = scmp.eq.s32.totalorder %s29, 0
      %p103 = por %p101, %p102
      %s105 = sadd.s32 %s104, 1
      %p108 = scmp.eq.s32.totalorder %s23, 1
      %p109 = scmp.ne.s32.totalorder %s104, %s106
      %p110 = scmp.eq.s32.totalorder %s23, 0
      %p111 = por %p109, %p110
      %p112 = scmp.ne.s32.totalorder %s104, %s106
      %p113 = scmp.eq.s32.totalorder %s28, 1
      %p114 = por %p112, %p113
      %p115 = scmp.ne.s32.totalorder %s106, %s107
      %p116 = scmp.eq.s32.totalorder %s28, 0
      %p117 = por %p115, %p116
      %p118 = scmp.ne.s32.totalorder %s106, %s107
      %p119 = scmp.eq.s32.totalorder %s29, 1
      %p120 = por %p118, %p119
      %p122 = scmp.ne.s32.totalorder %s107, %s121
      %p123 = scmp.eq.s32.totalorder %s29, 0
      %p124 = por %p122, %p123
      %s126 = sadd.s32 %s125, 1
      %p129 = scmp.eq.s32.totalorder %s23, 1
      %p130 = scmp.ne.s32.totalorder %s125, %s127
      %p131 = scmp.eq.s32.totalorder %s23, 0
      %p132 = por %p130, %p131
      %p133 = scmp.ne.s32.totalorder %s125, %s127
      %p134 = scmp.eq.s32.totalorder %s28, 1
      %p135 = por %p133, %p134
      %p136 = scmp.ne.s32.totalorder %s127, %s128
      %p137 = scmp.eq.s32.totalorder %s28, 0
      %p138 = por %p136, %p137
      %p139 = scmp.ne.s32.totalorder %s127, %s128
      %p140 = scmp.eq.s32.totalorder %s29, 1
      %p141 = por %p139, %p140
      %p143 = scmp.ne.s32.totalorder %s128, %s142
      %p144 = scmp.eq.s32.totalorder %s29, 0
      %p145 = por %p143, %p144
      %s147 = sadd.s32 %s146, 1
      %p150 = scmp.eq.s32.totalorder %s23, 1
      %p151 = scmp.ne.s32.totalorder %s146, %s148
      %p152 = scmp.eq.s32.totalorder %s23, 0
      %p153 = por %p151, %p152
      %p154 = scmp.ne.s32.totalorder %s146, %s148
      %p155 = scmp.eq.s32.totalorder %s28, 1
      %p156 = por %p154, %p155
      %p157 = scmp.ne.s32.totalorder %s148, %s149
      %p158 = scmp.eq.s32.totalorder %s28, 0
      %p159 = por %p157, %p158
      %p160 = scmp.ne.s32.totalorder %s148, %s149
      %p161 = scmp.eq.s32.totalorder %s29, 1
      %p162 = por %p160, %p161
      %p164 = scmp.ne.s32.totalorder %s149, %s163
      %p165 = scmp.eq.s32.totalorder %s29, 0
      %p166 = por %p164, %p165
      %s168 = sadd.s32 %s167, 1
      %p171 = scmp.eq.s32.totalorder %s23, 1
      %p172 = scmp.ne.s32.totalorder %s167, %s169
      %p173 = scmp.eq.s32.totalorder %s23, 0
      %p174 = por %p172, %p173
      %p175 = scmp.ne.s32.totalorder %s167, %s169
      %p176 = scmp.eq.s32.totalorder %s28, 1
      %p177 = por %p175, %p176
      %p178 = scmp.ne.s32.totalorder %s169, %s170
      %p179 = scmp.eq.s32.totalorder %s28, 0
      %p180 = por %p178, %p179
      %p181 = scmp.ne.s32.totalorder %s169, %s170
      %p182 = scmp.eq.s32.totalorder %s29, 1
      %p183 = por %p181, %p182
      %p185 = scmp.ne.s32.totalorder %s170, %s184
      %p186 = scmp.eq.s32.totalorder %s29, 0
      %p187 = por %p185, %p186
      %s189 = sadd.s32 %s188, 1
      %p192 = scmp.eq.s32.totalorder %s23, 1
      %p193 = scmp.ne.s32.totalorder %s188, %s190
      %p194 = scmp.eq.s32.totalorder %s23, 0
      %p195 = por %p193, %p194
      %p196 = scmp.ne.s32.totalorder %s188, %s190
      %p197 = scmp.eq.s32.totalorder %s28, 1
      %p198 = por %p196, %p197
      %p199 = scmp.ne.s32.totalorder %s190, %s191
      %p200 = scmp.eq.s32.totalorder %s28, 0
      %p201 = por %p199, %p200
      %p202 = scmp.ne.s32.totalorder %s190, %s191
      %p203 = scmp.eq.s32.totalorder %s29, 1
      %p204 = por %p202, %p203
      %p206 = scmp.ne.s32.totalorder %s191, %s205
      %p207 = scmp.eq.s32.totalorder %s29, 0
      %p208 = por %p206, %p207
      %s210 = sadd.s32 %s209, 1
      %p213 = scmp.eq.s32.totalorder %s23, 1
      %p214 = scmp.ne.s32.totalorder %s209, %s211
      %p215 = scmp.eq.s32.totalorder %s23, 0
      %p216 = por %p214, %p215
      %p217 = scmp.ne.s32.totalorder %s209, %s211
      %p218 = scmp.eq.s32.totalorder %s28, 1
      %p219 = por %p217, %p218
      %p220 = scmp.ne.s32.totalorder %s211, %s212
      %p221 = scmp.eq.s32.totalorder %s28, 0
      %p222 = por %p220, %p221
      %p223 = scmp.ne.s32.totalorder %s211, %s212
      %p224 = scmp.eq.s32.totalorder %s29, 1
      %p225 = por %p223, %p224
      %p227 = scmp.ne.s32.totalorder %s212, %s226
      %p228 = scmp.eq.s32.totalorder %s29, 0
      %p229 = por %p227, %p228
      %s231 = sadd.s32 %s230, 1
      %p234 = scmp.eq.s32.totalorder %s23, 1
      %p235 = scmp.ne.s32.totalorder %s230, %s232
      %p236 = scmp.eq.s32.totalorder %s23, 0
      %p237 = por %p235, %p236
      %p238 = scmp.ne.s32.totalorder %s230, %s232
      %p239 = scmp.eq.s32.totalorder %s28, 1
      %p240 = por %p238, %p239
      %p241 = scmp.ne.s32.totalorder %s232, %s233
      %p242 = scmp.eq.s32.totalorder %s28, 0
      %p243 = por %p241, %p242
      %p244 = scmp.ne.s32.totalorder %s232, %s233
      %p245 = scmp.eq.s32.totalorder %s29, 1
      %p246 = por %p244, %p245
      %p248 = scmp.ne.s32.totalorder %s233, %s247
      %p249 = scmp.eq.s32.totalorder %s29, 0
      %p250 = por %p248, %p249
      %s252 = sadd.s32 %s251, 1
      %p255 = scmp.eq.s32.totalorder %s23, 1
      %p256 = scmp.ne.s32.totalorder %s251, %s253
      %p257 = scmp.eq.s32.totalorder %s23, 0
      %p258 = por %p256, %p257
      %p259 = scmp.ne.s32.totalorder %s251, %s253
      %p260 = scmp.eq.s32.totalorder %s28, 1
      %p261 = por %p259, %p260
      %p262 = scmp.ne.s32.totalorder %s253, %s254
      %p263 = scmp.eq.s32.totalorder %s28, 0
      %p264 = por %p262, %p263
      %p265 = scmp.ne.s32.totalorder %s253, %s254
      %p266 = scmp.eq.s32.totalorder %s29, 1
      %p267 = por %p265, %p266
      %p269 = scmp.ne.s32.totalorder %s254, %s268
      %p270 = scmp.eq.s32.totalorder %s29, 0
      %p271 = por %p269, %p270
      %s273 = sadd.s32 %s272, 1
      %p276 = scmp.eq.s32.totalorder %s23, 1
      %p277 = scmp.ne.s32.totalorder %s272, %s274
      %p278 = scmp.eq.s32.totalorder %s23, 0
      %p279 = por %p277, %p278
      %p280 = scmp.ne.s32.totalorder %s272, %s274
      %p281 = scmp.eq.s32.totalorder %s28, 1
      %p282 = por %p280, %p281
      %p283 = scmp.ne.s32.totalorder %s274, %s275
      %p284 = scmp.eq.s32.totalorder %s28, 0
      %p285 = por %p283, %p284
      %p286 = scmp.ne.s32.totalorder %s274, %s275
      %p287 = scmp.eq.s32.totalorder %s29, 1
      %p288 = por %p286, %p287
      %p290 = scmp.ne.s32.totalorder %s275, %s289
      %p291 = scmp.eq.s32.totalorder %s29, 0
      %p292 = por %p290, %p291
      %s294 = sadd.s32 %s293, 1
      %p297 = scmp.eq.s32.totalorder %s23, 1
      %p298 = scmp.ne.s32.totalorder %s293, %s295
      %p299 = scmp.eq.s32.totalorder %s23, 0
      %p300 = por %p298, %p299
      %p301 = scmp.ne.s32.totalorder %s293, %s295
      %p302 = scmp.eq.s32.totalorder %s28, 1
      %p303 = por %p301, %p302
      %p304 = scmp.ne.s32.totalorder %s295, %s296
      %p305 = scmp.eq.s32.totalorder %s28, 0
      %p306 = por %p304, %p305
      %p307 = scmp.ne.s32.totalorder %s295, %s296
      %p308 = scmp.eq.s32.totalorder %s29, 1
      %p309 = por %p307, %p308
      %p311 = scmp.ne.s32.totalorder %s296, %s310
      %p312 = scmp.eq.s32.totalorder %s29, 0
      %p313 = por %p311, %p312
      %s315 = sadd.s32 %s314, 1
      %p318 = scmp.eq.s32.totalorder %s23, 1
      %p319 = scmp.ne.s32.totalorder %s314, %s316
      %p320 = scmp.eq.s32.totalorder %s23, 0
      %p321 = por %p319, %p320
      %p322 = scmp.ne.s32.totalorder %s314, %s316
      %p323 = scmp.eq.s32.totalorder %s28, 1
      %p324 = por %p322, %p323
      %p325 = scmp.ne.s32.totalorder %s316, %s317
      %p326 = scmp.eq.s32.totalorder %s28, 0
      %p327 = por %p325, %p326
      %p328 = scmp.ne.s32.totalorder %s316, %s317
      %p329 = scmp.eq.s32.totalorder %s29, 1
      %p330 = por %p328, %p329
      %p332 = scmp.ne.s32.totalorder %s317, %s331
      %p333 = scmp.eq.s32.totalorder %s29, 0
      %p334 = por %p332, %p333
      %s335 = ssub.s32 %s23, %s30
      %p336 = scmp.eq.s32.totalorder %s335, 0
      %s338 = sadd.s32 %s337, 1
      %s339 = scalar_select %p336, %s337, %s338
      %p342 = pneg %p336
      %p343 = scmp.eq.s32.totalorder %s23, 1
      %p344 = por %p342, %p343
      %p345 = scmp.ne.s32.totalorder %s337, %s340
      %p346 = scmp.eq.s32.totalorder %s23, 0
      %p347 = por %p345, %p346
      %p348 = scmp.ne.s32.totalorder %s337, %s340
      %p349 = scmp.eq.s32.totalorder %s28, 1
      %p350 = por %p348, %p349
      %p351 = scmp.ne.s32.totalorder %s340, %s341
      %p352 = scmp.eq.s32.totalorder %s28, 0
      %p353 = por %p351, %p352
      %p354 = scmp.ne.s32.totalorder %s340, %s341
      %p355 = scmp.eq.s32.totalorder %s29, 1
      %p356 = por %p354, %p355
      %p358 = scmp.ne.s32.totalorder %s341, %s357
      %p359 = scmp.eq.s32.totalorder %s29, 0
      %p360 = por %p358, %p359
      %s361 = ssub.s32 %s23, %s30
      %p362 = scmp.eq.s32.totalorder %s361, 0
      %s364 = sadd.s32 %s363, 1
      %s365 = scalar_select %p362, %s363, %s364
      %p368 = pneg %p362
      %p369 = scmp.eq.s32.totalorder %s23, 1
      %p370 = por %p368, %p369
      %p371 = scmp.ne.s32.totalorder %s363, %s366
      %p372 = scmp.eq.s32.totalorder %s23, 0
      %p373 = por %p371, %p372
      %p374 = scmp.ne.s32.totalorder %s363, %s366
      %p375 = scmp.eq.s32.totalorder %s28, 1
      %p376 = por %p374, %p375
      %p377 = scmp.ne.s32.totalorder %s366, %s367
      %p378 = scmp.eq.s32.totalorder %s28, 0
      %p379 = por %p377, %p378
      %p380 = scmp.ne.s32.totalorder %s366, %s367
      %p381 = scmp.eq.s32.totalorder %s29, 1
      %p382 = por %p380, %p381
      %p384 = scmp.ne.s32.totalorder %s367, %s383
      %p385 = scmp.eq.s32.totalorder %s29, 0
      %p386 = por %p384, %p385
      %p387 = scmp.le.s32.totalorder 1, %s23
      %p388 = scmp.lt.s32.totalorder %s23, 3
      %p389 = pnand %p387, %p388
      %p390 = pneg %p389
      // Predicated region
      $region9: #{octconv2d_forward.1} parent=5 // pred_check
        _
      $region10: #{octconv2d_forward.1} parent=5 // pred_check_branch
        %392 = sbr.rel (%p389) target = $region12
      $region11: #{octconv2d_forward.1} parent=5 // pred_region
        %s393 = ssub.s32 %s23, 1
        // Predicated region
        $region13: #{octconv2d_forward.1} parent=11 // pred_check
          %p394 = pneg %p96
        $region14: #{octconv2d_forward.1} parent=11 // pred_check_branch
          %396 = sbr.rel (%p394) target = $region16
        $region15: #{octconv2d_forward.1} parent=11 // pred_region
          _
        $region16: #{octconv2d_forward.1} parent=11 // pred_fallthru
          _
        // Predicated region
        $region17: #{octconv2d_forward.1} parent=11 // pred_check
          %p397 = pneg %p117
        $region18: #{octconv2d_forward.1} parent=11 // pred_check_branch
          %399 = sbr.rel (%p397) target = $region20
        $region19: #{octconv2d_forward.1} parent=11 // pred_region
          _
        $region20: #{octconv2d_forward.1} parent=11 // pred_fallthru
          _
        // Predicated region
        $region21: #{octconv2d_forward.1} parent=11 // pred_check
          %p400 = pneg %p138
        $region22: #{octconv2d_forward.1} parent=11 // pred_check_branch
          %402 = sbr.rel (%p400) target = $region24
        $region23: #{octconv2d_forward.1} parent=11 // pred_region
          _
        $region24: #{octconv2d_forward.1} parent=11 // pred_fallthru
          _
        // Predicated region
        $region25: #{octconv2d_forward.1} parent=11 // pred_check
          %p403 = pneg %p159
        $region26: #{octconv2d_forward.1} parent=11 // pred_check_branch
          %405 = sbr.rel (%p403) target = $region28
        $region27: #{octconv2d_forward.1} parent=11 // pred_region
          _
        $region28: #{octconv2d_forward.1} parent=11 // pred_fallthru
          _
        // Predicated region
        $region29: #{octconv2d_forward.1} parent=11 // pred_check
          %p406 = pneg %p180
        $region30: #{octconv2d_forward.1} parent=11 // pred_check_branch
          %408 = sbr.rel (%p406) target = $region32
        $region31: #{octconv2d_forward.1} parent=11 // pred_region
          _
        $region32: #{octconv2d_forward.1} parent=11 // pred_fallthru
          _
        // Predicated region
        $region33: #{octconv2d_forward.1} parent=11 // pred_check
          %p409 = pneg %p201
        $region34: #{octconv2d_forward.1} parent=11 // pred_check_branch
          %411 = sbr.rel (%p409) target = $region36
        $region35: #{octconv2d_forward.1} parent=11 // pred_region
          _
        $region36: #{octconv2d_forward.1} parent=11 // pred_fallthru
          _
        // Predicated region
        $region37: #{octconv2d_forward.1} parent=11 // pred_check
          %p412 = pneg %p222
        $region38: #{octconv2d_forward.1} parent=11 // pred_check_branch
          %414 = sbr.rel (%p412) target = $region40
        $region39: #{octconv2d_forward.1} parent=11 // pred_region
          _
        $region40: #{octconv2d_forward.1} parent=11 // pred_fallthru
          _
        // Predicated region
        $region41: #{octconv2d_forward.1} parent=11 // pred_check
          %p415 = pneg %p243
        $region42: #{octconv2d_forward.1} parent=11 // pred_check_branch
          %417 = sbr.rel (%p415) target = $region44
        $region43: #{octconv2d_forward.1} parent=11 // pred_region
          _
        $region44: #{octconv2d_forward.1} parent=11 // pred_fallthru
          _
        // Predicated region
        $region45: #{octconv2d_forward.1} parent=11 // pred_check
          %p418 = pneg %p264
        $region46: #{octconv2d_forward.1} parent=11 // pred_check_branch
          %420 = sbr.rel (%p418) target = $region48
        $region47: #{octconv2d_forward.1} parent=11 // pred_region
          _
        $region48: #{octconv2d_forward.1} parent=11 // pred_fallthru
          _
        // Predicated region
        $region49: #{octconv2d_forward.1} parent=11 // pred_check
          %p421 = pneg %p285
        $region50: #{octconv2d_forward.1} parent=11 // pred_check_branch
          %423 = sbr.rel (%p421) target = $region52
        $region51: #{octconv2d_forward.1} parent=11 // pred_region
          _
        $region52: #{octconv2d_forward.1} parent=11 // pred_fallthru
          _
        // Predicated region
        $region53: #{octconv2d_forward.1} parent=11 // pred_check
          %p424 = pneg %p306
        $region54: #{octconv2d_forward.1} parent=11 // pred_check_branch
          %426 = sbr.rel (%p424) target = $region56
        $region55: #{octconv2d_forward.1} parent=11 // pred_region
          _
        $region56: #{octconv2d_forward.1} parent=11 // pred_fallthru
          _
        // Predicated region
        $region57: #{octconv2d_forward.1} parent=11 // pred_check
          %p427 = pneg %p327
        $region58: #{octconv2d_forward.1} parent=11 // pred_check_branch
          %429 = sbr.rel (%p427) target = $region60
        $region59: #{octconv2d_forward.1} parent=11 // pred_region
          %s431 = ssub.s32 1664, 1664
          %432 = vsyncadd [#allocation6], %s431
          %s433 = sshll.u32 [#allocation5], 4
          %s434 = int_to_ptr.vmem [resolvable:$true] %s433
          %439 = dma.hbm_to_vmem [thread:$0]  %s13, 1664, %s434, [#allocation6], 128, 128, 8
        $region60: #{octconv2d_forward.1} parent=11 // pred_fallthru
          _
      $region12: #{octconv2d_forward.1} parent=5 // pred_fallthru
        _
      %p440 = scmp.lt.s32.totalorder %s23, 2
      // Predicated region
      $region61: #{octconv2d_forward.1} parent=5 // pred_check
        %p441 = pneg %p440
      $region62: #{octconv2d_forward.1} parent=5 // pred_check_branch
        %443 = sbr.rel (%p441) target = $region64
      $region63: #{octconv2d_forward.1} parent=5 // pred_region
        // Predicated region
        $region65: #{octconv2d_forward.1} parent=63 // pred_check
          %p444 = pneg %p43
        $region66: #{octconv2d_forward.1} parent=63 // pred_check_branch
          %446 = sbr.rel (%p444) target = $region68
        $region67: #{octconv2d_forward.1} parent=63 // pred_region
          %p447 = scmp.lt.s32.totalorder %s23, 1
          %s448 = scalar_select %p447, %s23, 1
          %s449 = smul.addr %s448, 2
          %s450 = smul.addr %s449, 4
          %s451 = scalar_lea.vmem %s0, %s450
        $region68: #{octconv2d_forward.1} parent=63 // pred_fallthru
          _
        // Predicated region
        $region69: #{octconv2d_forward.1} parent=63 // pred_check
          %p452 = pneg %p69
        $region70: #{octconv2d_forward.1} parent=63 // pred_check_branch
          %454 = sbr.rel (%p452) target = $region72
        $region71: #{octconv2d_forward.1} parent=63 // pred_region
          %p455 = scmp.lt.s32.totalorder %s23, 1
          %s456 = scalar_select %p455, %s23, 1
          %s457 = smul.addr %s456, 4
          %s458 = scalar_lea.vmem %s1, %s457
        $region72: #{octconv2d_forward.1} parent=63 // pred_fallthru
          _
      $region64: #{octconv2d_forward.1} parent=5 // pred_fallthru
        _
      %p459 = scmp.le.s32.totalorder 1, %s23
      %p460 = scmp.lt.s32.totalorder %s23, 3
      %p461 = pnand %p459, %p460
      %p462 = pneg %p461
      // Predicated region
      $region73: #{octconv2d_forward.1} parent=5 // pred_check
        _
      $region74: #{octconv2d_forward.1} parent=5 // pred_check_branch
        %464 = sbr.rel (%p461) target = $region76
      $region75: #{octconv2d_forward.1} parent=5 // pred_region
        %s465 = ssub.s32 %s23, 1
        // Predicated region
        $region77: #{octconv2d_forward.1} parent=75 // pred_check
          %p466 = pneg %p327
        $region78: #{octconv2d_forward.1} parent=75 // pred_check_branch
          %468 = sbr.rel (%p466) target = $region80
        $region79: #{octconv2d_forward.1} parent=75 // pred_region
          %469 = dma.done [#allocation6], 1664
        $region80: #{octconv2d_forward.1} parent=75 // pred_fallthru
          _
        %p470 = scmp.lt.s32.totalorder %s28, 1
        %s471 = scalar_select %p470, %s28, 1
        %s472 = smul.addr %s471, 2
        %s473 = smul.addr %s472, 4
        %s474 = scalar_lea.vmem %s0, %s473
        %p475 = pneg %p49
        %p476 = pneg %p46
        %p477 = scmp.lt.s32.totalorder %s28, 1
        %s478 = scalar_select %p477, %s28, 1
        %s479 = smul.addr %s478, 4
        %s480 = scalar_lea.vmem %s1, %s479
        %p481 = pneg %p75
        %p482 = pneg %p72
        %p483 = pneg %p96
        %p484 = pneg %p93
        %p485 = pneg %p117
        %p486 = pneg %p114
        %p487 = pneg %p138
        %p488 = pneg %p135
        %p489 = pneg %p159
        %p490 = pneg %p156
        %p491 = pneg %p180
        %p492 = pneg %p177
        %p493 = pneg %p201
        %p494 = pneg %p198
        %p495 = pneg %p222
        %p496 = pneg %p219
        %p497 = pneg %p243
        %p498 = pneg %p240
        %p499 = pneg %p264
        %p500 = pneg %p261
        %p501 = pneg %p285
        %p502 = pneg %p282
        %p503 = pneg %p306
        %p504 = pneg %p303
        %p505 = pneg %p327
        %p506 = pneg %p324
        %p507 = pneg %p353
        %p508 = pneg %p350
        %p509 = scmp.lt.s32.totalorder %s28, 1
        %s510 = scalar_select %p509, %s28, 1
        %s511 = smul.addr %s510, 2
        %s512 = smul.addr %s511, 2
        %s513 = scalar_lea.vmem %s14, %s512
        %p514 = pneg %p379
        %p515 = pneg %p376
        %p516 = scmp.lt.s32.totalorder %s28, 1
        %s517 = scalar_select %p516, %s28, 1
        %s518 = smul.addr %s517, 2
        %s519 = scalar_lea.vmem %s15, %s518
        %p520 = scmp.lt.s32.totalorder %s28, 1
        %s521 = scalar_select %p520, %s28, 1
        %s522 = smul.addr %s521, 2
        %s523 = smul.addr %s522, 4
        %s524 = scalar_lea.vmem %s0, %s523
        %p525 = scmp.lt.s32.totalorder %s28, 1
        %s526 = scalar_select %p525, %s28, 1
        %s527 = smul.addr %s526, 4
        %s528 = scalar_lea.vmem %s1, %s527
        %p529 = scmp.lt.s32.totalorder %s28, 1
        %s530 = scalar_select %p529, %s28, 1
        %s531 = smul.addr %s530, 2
        %s532 = smul.addr %s531, 2
        %s533 = scalar_lea.vmem %s14, %s532
        %p534 = scmp.lt.s32.totalorder %s28, 1
        %s535 = scalar_select %p534, %s28, 1
        %s536 = smul.addr %s535, 2
        %s537 = scalar_lea.vmem %s15, %s536
        %v539 = vld [vmem:[%s524] sm:$0xff]
        %v540 = vld [vmem:[%s8] sm:$0xff]
        %v541 = vld [vmem:[%s8 + $0x8] sm:$0xf]
        %v542 = vld [vmem:[%s8 + $0xc] sm:$0xff]
        %v543 = vld [vmem:[%s8 + $0x14] sm:$0xf]
        %v544 = vld [vmem:[%s8 + $0x18] sm:$0xff]
        %v545 = vld [vmem:[%s8 + $0x20] sm:$0xf]
        %v546 = vld [vmem:[%s8 + $0x24] sm:$0xff]
        %v547 = vld [vmem:[%s8 + $0x2c] sm:$0xf]
        %v548 = vld [vmem:[%s8 + $0x30] sm:$0xff]
        %v549 = vld [vmem:[%s8 + $0x38] sm:$0xf]
        %v550 = vld [vmem:[%s8 + $0x3c] sm:$0xff]
        %v551 = vld [vmem:[%s8 + $0x44] sm:$0xf]
        %v552 = vld [vmem:[%s8 + $0x48] sm:$0xff]
        %v553 = vld [vmem:[%s8 + $0x50] sm:$0xf]
        %v554 = vld [vmem:[%s8 + $0x54] sm:$0xff]
        %v555 = vld [vmem:[%s8 + $0x5c] sm:$0xf]
        %v556 = vld [vmem:[%s8 + $0x60] sm:$0xff]
        %v557 = vld [vmem:[%s8 + $0x68] sm:$0xf]
        %v558 = vld [vmem:[%s8 + $0x6c] sm:$0xff]
        %v559 = vld [vmem:[%s8 + $0x74] sm:$0xf]
        %v560 = vld [vmem:[%s8 + $0x78] sm:$0xff]
        %v561 = vld [vmem:[%s8 + $0x80] sm:$0xf]
        %v562 = vld [vmem:[%s8 + $0x84] sm:$0xff]
        %v563 = vld [vmem:[%s8 + $0x8c] sm:$0xf]
        %v564 = vld [vmem:[%s8 + $0x90] sm:$0xff]
        %v565 = vld [vmem:[%s8 + $0x98] sm:$0xf]
        %v566 = vld [vmem:[%s8 + $0x9c] sm:$0xff]
        %v567 = vld [vmem:[%s8 + $0xa4] sm:$0xf]
        %v568 = vld [vmem:[%s8 + $0xa8] sm:$0xff]
        %v569 = vld [vmem:[%s8 + $0xb0] sm:$0xf]
        %v570 = vld [vmem:[%s8 + $0xb4] sm:$0xff]
        %v571 = vld [vmem:[%s8 + $0xbc] sm:$0xf]
        %v572 = vld [vmem:[%s8 + $0xc0] sm:$0xff]
        %v573 = vld [vmem:[%s8 + $0xc8] sm:$0xf]
        %v574 = vld [vmem:[%s8 + $0xcc] sm:$0xff]
        %v575 = vld [vmem:[%s8 + $0xd4] sm:$0xf]
        %v576 = vld [vmem:[%s8 + $0xd8] sm:$0xff]
        %v577 = vld [vmem:[%s8 + $0xe0] sm:$0xf]
        %v578 = vld [vmem:[%s8 + $0xe4] sm:$0xff]
        %v579 = vld [vmem:[%s8 + $0xec] sm:$0xf]
        %v580 = vld [vmem:[%s8 + $0xf0] sm:$0xff]
        %v581 = vld [vmem:[%s8 + $0xf8] sm:$0xf]
        %v582 = vld [vmem:[%s8 + $0xfc] sm:$0xff]
        %v583 = vld [vmem:[%s8 + $0x104] sm:$0xf]
        %v584 = vld [vmem:[%s8 + $0x108] sm:$0xff]
        %v585 = vld [vmem:[%s8 + $0x110] sm:$0xf]
        %v586 = vld [vmem:[%s8 + $0x114] sm:$0xff]
        %v587 = vld [vmem:[%s8 + $0x11c] sm:$0xf]
        %v588 = vld [vmem:[%s8 + $0x120] sm:$0xff]
        %v589 = vld [vmem:[%s8 + $0x128] sm:$0xf]
        %v590 = vld [vmem:[%s8 + $0x12c] sm:$0xff]
        %v591 = vld [vmem:[%s8 + $0x134] sm:$0xf]
        %v592 = vld [vmem:[%s8 + $0x138] sm:$0xff]
        %v593 = vld [vmem:[%s8 + $0x140] sm:$0xf]
        %v594 = vld [vmem:[%s8 + $0x144] sm:$0xff]
        %v595 = vld [vmem:[%s8 + $0x14c] sm:$0xf]
        %v596 = vld [vmem:[%s8 + $0x150] sm:$0xff]
        %v597 = vld [vmem:[%s8 + $0x158] sm:$0xf]
        %v598 = vld [vmem:[%s8 + $0x15c] sm:$0xff]
        %v599 = vld [vmem:[%s8 + $0x164] sm:$0xf]
        %v600 = vld [vmem:[%s8 + $0x168] sm:$0xff]
        %v601 = vld [vmem:[%s8 + $0x170] sm:$0xf]
        %v602 = vld [vmem:[%s8 + $0x174] sm:$0xff]
        %v603 = vld [vmem:[%s8 + $0x17c] sm:$0xf]
        %v605 = vunpack.c.l.b16 %v539
        %v606 = vunpack.c.h.b16 %v539
        %v607 = vpack.c.b16 %v605, %v605
        %v608 = vpack.c.b16 %v606, %v606
        %v675 = vunpack.c.l.b16 %v540
        %v676 = vunpack.c.h.b16 %v540
        %v677 = vunpack.c.l.b16 %v541
        %v678 = vunpack.c.l.b16 %v542
        %v679 = vunpack.c.h.b16 %v542
        %v680 = vunpack.c.l.b16 %v543
        %v681 = vunpack.c.l.b16 %v544
        %v682 = vunpack.c.h.b16 %v544
        %v683 = vunpack.c.l.b16 %v545
        %v684 = vunpack.c.l.b16 %v546
        %v685 = vunpack.c.h.b16 %v546
        %v686 = vunpack.c.l.b16 %v547
        %v687 = vunpack.c.l.b16 %v548
        %v688 = vunpack.c.h.b16 %v548
        %v689 = vunpack.c.l.b16 %v549
        %v690 = vunpack.c.l.b16 %v550
        %v691 = vunpack.c.h.b16 %v550
        %v692 = vunpack.c.l.b16 %v551
        %v693 = vunpack.c.l.b16 %v552
        %v694 = vunpack.c.h.b16 %v552
        %v695 = vunpack.c.l.b16 %v553
        %v696 = vunpack.c.l.b16 %v554
        %v697 = vunpack.c.h.b16 %v554
        %v698 = vunpack.c.l.b16 %v555
        %v699 = vunpack.c.l.b16 %v556
        %v700 = vunpack.c.h.b16 %v556
        %v701 = vunpack.c.l.b16 %v557
        %v702 = vunpack.c.l.b16 %v558
        %v703 = vunpack.c.h.b16 %v558
        %v704 = vunpack.c.l.b16 %v559
        %v705 = vunpack.c.l.b16 %v560
        %v706 = vunpack.c.h.b16 %v560
        %v707 = vunpack.c.l.b16 %v561
        %v708 = vunpack.c.l.b16 %v562
        %v709 = vunpack.c.h.b16 %v562
        %v710 = vunpack.c.l.b16 %v563
        %v711 = vunpack.c.l.b16 %v564
        %v712 = vunpack.c.h.b16 %v564
        %v713 = vunpack.c.l.b16 %v565
        %v714 = vunpack.c.l.b16 %v566
        %v715 = vunpack.c.h.b16 %v566
        %v716 = vunpack.c.l.b16 %v567
        %v717 = vunpack.c.l.b16 %v568
        %v718 = vunpack.c.h.b16 %v568
        %v719 = vunpack.c.l.b16 %v569
        %v720 = vunpack.c.l.b16 %v570
        %v721 = vunpack.c.h.b16 %v570
        %v722 = vunpack.c.l.b16 %v571
        %v723 = vunpack.c.l.b16 %v572
        %v724 = vunpack.c.h.b16 %v572
        %v725 = vunpack.c.l.b16 %v573
        %v726 = vunpack.c.l.b16 %v574
        %v727 = vunpack.c.h.b16 %v574
        %v728 = vunpack.c.l.b16 %v575
        %v729 = vunpack.c.l.b16 %v576
        %v730 = vunpack.c.h.b16 %v576
        %v731 = vunpack.c.l.b16 %v577
        %v732 = vunpack.c.l.b16 %v578
        %v733 = vunpack.c.h.b16 %v578
        %v734 = vunpack.c.l.b16 %v579
        %v735 = vunpack.c.l.b16 %v580
        %v736 = vunpack.c.h.b16 %v580
        %v737 = vunpack.c.l.b16 %v581
        %v738 = vunpack.c.l.b16 %v582
        %v739 = vunpack.c.h.b16 %v582
        %v740 = vunpack.c.l.b16 %v583
        %v741 = vunpack.c.l.b16 %v584
        %v742 = vunpack.c.h.b16 %v584
        %v743 = vunpack.c.l.b16 %v585
        %v744 = vunpack.c.l.b16 %v586
        %v745 = vunpack.c.h.b16 %v586
        %v746 = vunpack.c.l.b16 %v587
        %v747 = vunpack.c.l.b16 %v588
        %v748 = vunpack.c.h.b16 %v588
        %v749 = vunpack.c.l.b16 %v589
        %v750 = vunpack.c.l.b16 %v590
        %v751 = vunpack.c.h.b16 %v590
        %v752 = vunpack.c.l.b16 %v591
        %v753 = vunpack.c.l.b16 %v592
        %v754 = vunpack.c.h.b16 %v592
        %v755 = vunpack.c.l.b16 %v593
        %v756 = vunpack.c.l.b16 %v594
        %v757 = vunpack.c.h.b16 %v594
        %v758 = vunpack.c.l.b16 %v595
        %v759 = vunpack.c.l.b16 %v596
        %v760 = vunpack.c.h.b16 %v596
        %v761 = vunpack.c.l.b16 %v597
        %v762 = vunpack.c.l.b16 %v598
        %v763 = vunpack.c.h.b16 %v598
        %v764 = vunpack.c.l.b16 %v599
        %v765 = vunpack.c.l.b16 %v600
        %v766 = vunpack.c.h.b16 %v600
        %v767 = vunpack.c.l.b16 %v601
        %v768 = vunpack.c.l.b16 %v602
        %v769 = vunpack.c.h.b16 %v602
        %v770 = vunpack.c.l.b16 %v603
        %v771 = vpack.c.b16 %v678, %v675
        %v772 = vpack.c.b16 %v679, %v676
        %v773 = vpack.c.b16 %v680, %v677
        %v774 = vpack.c.b16 %v684, %v681
        %v775 = vpack.c.b16 %v685, %v682
        %v776 = vpack.c.b16 %v686, %v683
        %v777 = vpack.c.b16 %v690, %v687
        %v778 = vpack.c.b16 %v691, %v688
        %v779 = vpack.c.b16 %v692, %v689
        %v780 = vpack.c.b16 %v696, %v693
        %v781 = vpack.c.b16 %v697, %v694
        %v782 = vpack.c.b16 %v698, %v695
        %v783 = vpack.c.b16 %v702, %v699
        %v784 = vpack.c.b16 %v703, %v700
        %v785 = vpack.c.b16 %v704, %v701
        %v786 = vpack.c.b16 %v708, %v705
        %v787 = vpack.c.b16 %v709, %v706
        %v788 = vpack.c.b16 %v710, %v707
        %v789 = vpack.c.b16 %v714, %v711
        %v790 = vpack.c.b16 %v715, %v712
        %v791 = vpack.c.b16 %v716, %v713
        %v792 = vpack.c.b16 %v720, %v717
        %v793 = vpack.c.b16 %v721, %v718
        %v794 = vpack.c.b16 %v722, %v719
        %v795 = vpack.c.b16 %v726, %v723
        %v796 = vpack.c.b16 %v727, %v724
        %v797 = vpack.c.b16 %v728, %v725
        %v798 = vpack.c.b16 %v732, %v729
        %v799 = vpack.c.b16 %v733, %v730
        %v800 = vpack.c.b16 %v734, %v731
        %v801 = vpack.c.b16 %v738, %v735
        %v802 = vpack.c.b16 %v739, %v736
        %v803 = vpack.c.b16 %v740, %v737
        %v804 = vpack.c.b16 %v744, %v741
        %v805 = vpack.c.b16 %v745, %v742
        %v806 = vpack.c.b16 %v746, %v743
        %v807 = vpack.c.b16 %v750, %v747
        %v808 = vpack.c.b16 %v751, %v748
        %v809 = vpack.c.b16 %v752, %v749
        %v810 = vpack.c.b16 %v756, %v753
        %v811 = vpack.c.b16 %v757, %v754
        %v812 = vpack.c.b16 %v758, %v755
        %v813 = vpack.c.b16 %v762, %v759
        %v814 = vpack.c.b16 %v763, %v760
        %v815 = vpack.c.b16 %v764, %v761
        %v816 = vpack.c.b16 %v768, %v765
        %v817 = vpack.c.b16 %v769, %v766
        %v818 = vpack.c.b16 %v770, %v767
        %867 = vmatprep.subr.bf16.mxu0 %v772
        %868 = vmatpush1.bf16.msra.mxu0 %v771
        %869 = vmatprep.subr.bf16.mxu0 %v775
        %870 = vmatpush1.bf16.msra.mxu0 %v774
        %871 = vmatprep.subr.bf16.mxu0 %v778
        %872 = vmatpush1.bf16.msra.mxu0 %v777
        %873 = vmatprep.subr.bf16.mxu0 %v781
        %874 = vmatpush1.bf16.msra.mxu0 %v780
        %875 = vmatprep.subr.bf16.mxu0 %v784
        %876 = vmatpush1.bf16.msra.mxu0 %v783
        %877 = vmatprep.subr.bf16.mxu0 %v787
        %878 = vmatpush1.bf16.msra.mxu0 %v786
        %879 = vmatprep.subr.bf16.mxu0 %v790
        %880 = vmatpush1.bf16.msra.mxu0 %v789
        %881 = vmatprep.subr.bf16.mxu0 %v793
        %882 = vmatpush1.bf16.msra.mxu0 %v792
        %883 = vmatprep.subr.bf16.mxu0 %v796
        %884 = vmatpush1.bf16.msra.mxu0 %v795
        %885 = vmatprep.subr.bf16.mxu0 %v799
        %886 = vmatpush1.bf16.msra.mxu0 %v798
        %887 = vmatprep.subr.bf16.mxu0 %v802
        %888 = vmatpush1.bf16.msra.mxu0 %v801
        %889 = vmatprep.subr.bf16.mxu0 %v805
        %890 = vmatpush1.bf16.msra.mxu0 %v804
        %891 = vmatprep.subr.bf16.mxu0 %v808
        %892 = vmatpush1.bf16.msra.mxu0 %v807
        %893 = vmatprep.subr.bf16.mxu0 %v811
        %894 = vmatpush1.bf16.msra.mxu0 %v810
        %895 = vmatprep.subr.bf16.mxu0 %v814
        %896 = vmatpush1.bf16.msra.mxu0 %v813
        %897 = vmatprep.subr.bf16.mxu0 %v817
        %898 = vmatpush1.bf16.msra.mxu0 %v816
        %899 = vmatprep.mubr.bf16.mxu0 %v608
        %900 = vmatmul.mubr.bf16.gmra.mrb[0].mxu0 %v607
        %v901 = vpop.f32.mrb[0].mxu0
        %v902 = vadd.f32 0.0, %v901
        %v903 = vpop.f32.mrb[0].mxu0
        %v904 = vadd.f32 0.0, %v903
        %v905 = vpop.f32.mrb[0].mxu0
        %v906 = vpop.f32.mrb[0].mxu0
        %907 = vdwg.mxu0
        %908 = vmatprep.subr.bf16.mxu0 0
        %909 = vmatpush1.bf16.msra.mxu0 %v773
        %910 = vmatprep.subr.bf16.mxu0 0
        %911 = vmatpush1.bf16.msra.mxu0 %v776
        %912 = vmatprep.subr.bf16.mxu0 0
        %913 = vmatpush1.bf16.msra.mxu0 %v779
        %914 = vmatprep.subr.bf16.mxu0 0
        %915 = vmatpush1.bf16.msra.mxu0 %v782
        %916 = vmatprep.subr.bf16.mxu0 0
        %917 = vmatpush1.bf16.msra.mxu0 %v785
        %918 = vmatprep.subr.bf16.mxu0 0
        %919 = vmatpush1.bf16.msra.mxu0 %v788
        %920 = vmatprep.subr.bf16.mxu0 0
        %921 = vmatpush1.bf16.msra.mxu0 %v791
        %922 = vmatprep.subr.bf16.mxu0 0
        %923 = vmatpush1.bf16.msra.mxu0 %v794
        %924 = vmatprep.subr.bf16.mxu0 0
        %925 = vmatpush1.bf16.msra.mxu0 %v797
        %926 = vmatprep.subr.bf16.mxu0 0
        %927 = vmatpush1.bf16.msra.mxu0 %v800
        %928 = vmatprep.subr.bf16.mxu0 0
        %929 = vmatpush1.bf16.msra.mxu0 %v803
        %930 = vmatprep.subr.bf16.mxu0 0
        %931 = vmatpush1.bf16.msra.mxu0 %v806
        %932 = vmatprep.subr.bf16.mxu0 0
        %933 = vmatpush1.bf16.msra.mxu0 %v809
        %934 = vmatprep.subr.bf16.mxu0 0
        %935 = vmatpush1.bf16.msra.mxu0 %v812
        %936 = vmatprep.subr.bf16.mxu0 0
        %937 = vmatpush1.bf16.msra.mxu0 %v815
        %938 = vmatprep.subr.bf16.mxu0 0
        %939 = vmatpush1.bf16.msra.mxu0 %v818
        %940 = vmatprep.mubr.bf16.mxu0 %v608
        %941 = vmatmul.mubr.bf16.gmra.mrb[0].mxu0 %v607
        %v942 = vpop.f32.mrb[0].mxu0
        %v943 = vadd.f32 0.0, %v942
        %v944 = vpop.f32.mrb[0].mxu0
        %v945 = vpop.f32.mrb[0].mxu0
        %v946 = vpop.f32.mrb[0].mxu0
        %947 = vdwg.mxu0
        %v948 = vpack.c.bf16 %v902, %v902
        %v949 = vpack.c.bf16 %v904, %v904
        %v950 = vpack.c.bf16 %v943, %v943
        %v954 = vunpack.c.l.b16 %v948
        %v955 = vunpack.c.l.b16 %v949
        %v956 = vunpack.c.l.b16 %v950
        %v957 = vpack.c.b16 %v955, %v954
        %v958 = vpack.c.b16 %v956, %v956
        %961 = vst [vmem:[#allocation2] sm:$0xff] %v957
        %vm962 = vcmask 863232
        %963 = vst.msk [vmem:[#allocation2 + $0x8] sm:$0xf] %vm962, %v958
        %v964 = vld [vmem:[%s528] sm:$0xf]
        %v965 = vld [vmem:[%s9] sm:$0xf]
        %v966 = vld [vmem:[%s9 + $0x4] sm:$0xf]
        %v967 = vld [vmem:[%s9 + $0x8] sm:$0xf]
        %v968 = vld [vmem:[%s9 + $0xc] sm:$0xf]
        %v969 = vld [vmem:[%s9 + $0x10] sm:$0xf]
        %v970 = vld [vmem:[%s9 + $0x14] sm:$0xf]
        %v971 = vld [vmem:[%s9 + $0x18] sm:$0xf]
        %v972 = vld [vmem:[%s9 + $0x1c] sm:$0xf]
        %v981 = vunpack.c.l.b16 %v965
        %v982 = vunpack.c.l.b16 %v966
        %v983 = vunpack.c.l.b16 %v967
        %v984 = vunpack.c.l.b16 %v968
        %v985 = vunpack.c.l.b16 %v969
        %v986 = vunpack.c.l.b16 %v970
        %v987 = vunpack.c.l.b16 %v971
        %v988 = vunpack.c.l.b16 %v972
        %v989 = vpack.c.b16 %v982, %v981
        %v990 = vpack.c.b16 %v984, %v983
        %v991 = vpack.c.b16 %v986, %v985
        %v992 = vpack.c.b16 %v988, %v987
        %vm997 = vcmask 523264
        %v999 = vsel %vm997, %v964, 0
        %1001 = vmatprep.subr.bf16.mxu0 0
        %1002 = vmatpush1.bf16.msra.mxu0 %v989
        %1003 = vmatprep.subr.bf16.mxu0 0
        %1004 = vmatpush1.bf16.msra.mxu0 %v990
        %1005 = vmatprep.subr.bf16.mxu0 0
        %1006 = vmatpush1.bf16.msra.mxu0 %v991
        %1007 = vmatprep.subr.bf16.mxu0 0
        %1008 = vmatpush1.bf16.msra.mxu0 %v992
        %1009 = vmatprep.subr.bf16.mxu0 0
        %1010 = vmatpush1.bf16.msra.mxu0 0
        %1011 = vmatprep.subr.bf16.mxu0 0
        %1012 = vmatpush1.bf16.msra.mxu0 0
        %1013 = vmatprep.subr.bf16.mxu0 0
        %1014 = vmatpush1.bf16.msra.mxu0 0
        %1015 = vmatprep.subr.bf16.mxu0 0
        %1016 = vmatpush1.bf16.msra.mxu0 0
        %1017 = vmatprep.subr.bf16.mxu0 0
        %1018 = vmatpush1.bf16.msra.mxu0 0
        %1019 = vmatprep.subr.bf16.mxu0 0
        %1020 = vmatpush1.bf16.msra.mxu0 0
        %1021 = vmatprep.subr.bf16.mxu0 0
        %1022 = vmatpush1.bf16.msra.mxu0 0
        %1023 = vmatprep.subr.bf16.mxu0 0
        %1024 = vmatpush1.bf16.msra.mxu0 0
        %1025 = vmatprep.subr.bf16.mxu0 0
        %1026 = vmatpush1.bf16.msra.mxu0 0
        %1027 = vmatprep.subr.bf16.mxu0 0
        %1028 = vmatpush1.bf16.msra.mxu0 0
        %1029 = vmatprep.subr.bf16.mxu0 0
        %1030 = vmatpush1.bf16.msra.mxu0 0
        %1031 = vmatprep.subr.bf16.mxu0 0
        %1032 = vmatpush1.bf16.msra.mxu0 0
        %1033 = vmatprep.mubr.bf16.mxu0 0
        %1034 = vmatmul.mubr.bf16.gmra.mrb[0].mxu0 %v999
        %v1035 = vpop.f32.mrb[0].mxu0
        %v1036 = vadd.f32 0.0, %v1035
        %v1037 = vpop.f32.mrb[0].mxu0
        %v1038 = vpop.f32.mrb[0].mxu0
        %v1039 = vpop.f32.mrb[0].mxu0
        %1040 = vdwg.mxu0
        %v1041 = vpack.c.bf16 %v1036, %v1036
        %vm1042 = vcmask 994304
        %1043 = vst.msk [vmem:[#allocation3] sm:$0xf] %vm1042, %v1041
        %v1044 = vld [vmem:[%s524] sm:$0xff]
        %v1045 = vld [vmem:[%s10] sm:$0xf]
        %v1046 = vld [vmem:[%s10 + $0x4] sm:$0xf]
        %v1047 = vld [vmem:[%s10 + $0x8] sm:$0xf]
        %v1048 = vld [vmem:[%s10 + $0xc] sm:$0xf]
        %v1049 = vld [vmem:[%s10 + $0x10] sm:$0xf]
        %v1050 = vld [vmem:[%s10 + $0x14] sm:$0xf]
        %v1051 = vld [vmem:[%s10 + $0x18] sm:$0xf]
        %v1052 = vld [vmem:[%s10 + $0x1c] sm:$0xf]
        %v1053 = vld [vmem:[%s10 + $0x20] sm:$0xf]
        %v1054 = vld [vmem:[%s10 + $0x24] sm:$0xf]
        %v1055 = vld [vmem:[%s10 + $0x28] sm:$0xf]
        %v1056 = vld [vmem:[%s10 + $0x2c] sm:$0xf]
        %v1057 = vld [vmem:[%s10 + $0x30] sm:$0xf]
        %v1058 = vld [vmem:[%s10 + $0x34] sm:$0xf]
        %v1059 = vld [vmem:[%s10 + $0x38] sm:$0xf]
        %v1060 = vld [vmem:[%s10 + $0x3c] sm:$0xf]
        %v1061 = vld [vmem:[%s10 + $0x40] sm:$0xf]
        %v1062 = vld [vmem:[%s10 + $0x44] sm:$0xf]
        %v1063 = vld [vmem:[%s10 + $0x48] sm:$0xf]
        %v1064 = vld [vmem:[%s10 + $0x4c] sm:$0xf]
        %v1065 = vld [vmem:[%s10 + $0x50] sm:$0xf]
        %v1066 = vld [vmem:[%s10 + $0x54] sm:$0xf]
        %v1067 = vld [vmem:[%s10 + $0x58] sm:$0xf]
        %v1068 = vld [vmem:[%s10 + $0x5c] sm:$0xf]
        %v1069 = vld [vmem:[%s10 + $0x60] sm:$0xf]
        %v1070 = vld [vmem:[%s10 + $0x64] sm:$0xf]
        %v1071 = vld [vmem:[%s10 + $0x68] sm:$0xf]
        %v1072 = vld [vmem:[%s10 + $0x6c] sm:$0xf]
        %v1073 = vld [vmem:[%s10 + $0x70] sm:$0xf]
        %v1074 = vld [vmem:[%s10 + $0x74] sm:$0xf]
        %v1075 = vld [vmem:[%s10 + $0x78] sm:$0xf]
        %v1076 = vld [vmem:[%s10 + $0x7c] sm:$0xf]
        %v1078 = vunpack.c.l.b16 %v1044
        %v1079 = vunpack.c.h.b16 %v1044
        %v1080 = vpack.c.b16 %v1078, %v1078
        %v1081 = vpack.c.b16 %v1079, %v1079
        %v1116 = vunpack.c.l.b16 %v1045
        %v1117 = vunpack.c.l.b16 %v1046
        %v1118 = vunpack.c.l.b16 %v1047
        %v1119 = vunpack.c.l.b16 %v1048
        %v1120 = vunpack.c.l.b16 %v1049
        %v1121 = vunpack.c.l.b16 %v1050
        %v1122 = vunpack.c.l.b16 %v1051
        %v1123 = vunpack.c.l.b16 %v1052
        %v1124 = vunpack.c.l.b16 %v1053
        %v1125 = vunpack.c.l.b16 %v1054
        %v1126 = vunpack.c.l.b16 %v1055
        %v1127 = vunpack.c.l.b16 %v1056
        %v1128 = vunpack.c.l.b16 %v1057
        %v1129 = vunpack.c.l.b16 %v1058
        %v1130 = vunpack.c.l.b16 %v1059
        %v1131 = vunpack.c.l.b16 %v1060
        %v1132 = vunpack.c.l.b16 %v1061
        %v1133 = vunpack.c.l.b16 %v1062
        %v1134 = vunpack.c.l.b16 %v1063
        %v1135 = vunpack.c.l.b16 %v1064
        %v1136 = vunpack.c.l.b16 %v1065
        %v1137 = vunpack.c.l.b16 %v1066
        %v1138 = vunpack.c.l.b16 %v1067
        %v1139 = vunpack.c.l.b16 %v1068
        %v1140 = vunpack.c.l.b16 %v1069
        %v1141 = vunpack.c.l.b16 %v1070
        %v1142 = vunpack.c.l.b16 %v1071
        %v1143 = vunpack.c.l.b16 %v1072
        %v1144 = vunpack.c.l.b16 %v1073
        %v1145 = vunpack.c.l.b16 %v1074
        %v1146 = vunpack.c.l.b16 %v1075
        %v1147 = vunpack.c.l.b16 %v1076
        %v1148 = vpack.c.b16 %v1117, %v1116
        %v1149 = vpack.c.b16 %v1119, %v1118
        %v1150 = vpack.c.b16 %v1121, %v1120
        %v1151 = vpack.c.b16 %v1123, %v1122
        %v1152 = vpack.c.b16 %v1125, %v1124
        %v1153 = vpack.c.b16 %v1127, %v1126
        %v1154 = vpack.c.b16 %v1129, %v1128
        %v1155 = vpack.c.b16 %v1131, %v1130
        %v1156 = vpack.c.b16 %v1133, %v1132
        %v1157 = vpack.c.b16 %v1135, %v1134
        %v1158 = vpack.c.b16 %v1137, %v1136
        %v1159 = vpack.c.b16 %v1139, %v1138
        %v1160 = vpack.c.b16 %v1141, %v1140
        %v1161 = vpack.c.b16 %v1143, %v1142
        %v1162 = vpack.c.b16 %v1145, %v1144
        %v1163 = vpack.c.b16 %v1147, %v1146
        %1180 = vmatprep.subr.bf16.mxu0 0
        %1181 = vmatpush1.bf16.msra.mxu0 %v1148
        %1182 = vmatprep.subr.bf16.mxu0 0
        %1183 = vmatpush1.bf16.msra.mxu0 %v1149
        %1184 = vmatprep.subr.bf16.mxu0 0
        %1185 = vmatpush1.bf16.msra.mxu0 %v1150
        %1186 = vmatprep.subr.bf16.mxu0 0
        %1187 = vmatpush1.bf16.msra.mxu0 %v1151
        %1188 = vmatprep.subr.bf16.mxu0 0
        %1189 = vmatpush1.bf16.msra.mxu0 %v1152
        %1190 = vmatprep.subr.bf16.mxu0 0
        %1191 = vmatpush1.bf16.msra.mxu0 %v1153
        %1192 = vmatprep.subr.bf16.mxu0 0
        %1193 = vmatpush1.bf16.msra.mxu0 %v1154
        %1194 = vmatprep.subr.bf16.mxu0 0
        %1195 = vmatpush1.bf16.msra.mxu0 %v1155
        %1196 = vmatprep.subr.bf16.mxu0 0
        %1197 = vmatpush1.bf16.msra.mxu0 %v1156
        %1198 = vmatprep.subr.bf16.mxu0 0
        %1199 = vmatpush1.bf16.msra.mxu0 %v1157
        %1200 = vmatprep.subr.bf16.mxu0 0
        %1201 = vmatpush1.bf16.msra.mxu0 %v1158
        %1202 = vmatprep.subr.bf16.mxu0 0
        %1203 = vmatpush1.bf16.msra.mxu0 %v1159
        %1204 = vmatprep.subr.bf16.mxu0 0
        %1205 = vmatpush1.bf16.msra.mxu0 %v1160
        %1206 = vmatprep.subr.bf16.mxu0 0
        %1207 = vmatpush1.bf16.msra.mxu0 %v1161
        %1208 = vmatprep.subr.bf16.mxu0 0
        %1209 = vmatpush1.bf16.msra.mxu0 %v1162
        %1210 = vmatprep.subr.bf16.mxu0 0
        %1211 = vmatpush1.bf16.msra.mxu0 %v1163
        %1212 = vmatprep.mubr.bf16.mxu0 %v1081
        %1213 = vmatmul.mubr.bf16.gmra.mrb[0].mxu0 %v1080
        %v1214 = vpop.f32.mrb[0].mxu0
        %v1215 = vadd.f32 0.0, %v1214
        %v1216 = vpop.f32.mrb[0].mxu0
        %v1217 = vpop.f32.mrb[0].mxu0
        %v1218 = vpop.f32.mrb[0].mxu0
        %1219 = vdwg.mxu0
        %v1220 = vpack.c.bf16 %v1215, %v1215
        %1221 = vst.msk [vmem:[#allocation4] sm:$0xf] %vm1042, %v1220
        %v1222 = vld [vmem:[%s2] sm:$0xf]
        %v1223 = vld [vmem:[#allocation2] sm:$0xff]
        %v1224 = vld [vmem:[#allocation2 + $0x8] sm:$0xf]
        %s1225 = scalar_lea.vmem %s2, 4
        %v1226 = vld [vmem:[%s1225] sm:$0xf]
        %v1229 = vunpack.c.l.b16 %v1223
        %v1230 = vunpack.c.h.b16 %v1223
        %v1231 = vunpack.c.l.b16 %v1224
        %v1232 = vpack.c.b16 %v1229, %v1229
        %v1233 = vpack.c.b16 %v1230, %v1230
        %v1234 = vpack.c.b16 %v1231, %v1231
        %1235 = vrot.lane.b32.xlu0 %v1232, 127
        %v1236 = vpop.permute.xlu0 %1235
        %1237 = vrot.lane.b32.xlu0 %v1233, 127
        %v1238 = vpop.permute.xlu0 %1237
        %1239 = vrot.lane.b32.xlu0 %v1234, 127
        %v1240 = vpop.permute.xlu0 %1239
        %vm1241 = vcmask 1039360
        %v1242 = vsel %vm1241, %v1236, %v1238
        %v1243 = vsel %vm1241, %v1238, %v1240
        %vm1244 = vcmask 64512
        %v1246 = vsel %vm1244, %v1226, 0
        %vm1248 = vcmask 1043456
        %v1250 = vsel %vm1248, %v1242, 0
        %v1253 = vsel %vm1248, %v1243, 0
        %v1256 = vsel %vm1248, %v1240, 0
        %1258 = vmatprep.subr.bf16.mxu0 %v1253
        %1259 = vmatpush1.bf16.msra.mxu0 %v1250
        %1260 = vmatprep.subr.bf16.mxu0 0
        %1261 = vmatpush1.bf16.msra.mxu0 0
        %1262 = vmatprep.subr.bf16.mxu0 0
        %1263 = vmatpush1.bf16.msra.mxu0 0
        %1264 = vmatprep.subr.bf16.mxu0 0
        %1265 = vmatpush1.bf16.msra.mxu0 0
        %1266 = vmatprep.subr.bf16.mxu0 0
        %1267 = vmatpush1.bf16.msra.mxu0 0
        %1268 = vmatprep.subr.bf16.mxu0 0
        %1269 = vmatpush1.bf16.msra.mxu0 0
        %1270 = vmatprep.subr.bf16.mxu0 0
        %1271 = vmatpush1.bf16.msra.mxu0 0
        %1272 = vmatprep.subr.bf16.mxu0 0
        %1273 = vmatpush1.bf16.msra.mxu0 0
        %1274 = vmatprep.subr.bf16.mxu0 0
        %1275 = vmatpush1.bf16.msra.mxu0 0
        %1276 = vmatprep.subr.bf16.mxu0 0
        %1277 = vmatpush1.bf16.msra.mxu0 0
        %1278 = vmatprep.subr.bf16.mxu0 0
        %1279 = vmatpush1.bf16.msra.mxu0 0
        %1280 = vmatprep.subr.bf16.mxu0 0
        %1281 = vmatpush1.bf16.msra.mxu0 0
        %1282 = vmatprep.subr.bf16.mxu0 0
        %1283 = vmatpush1.bf16.msra.mxu0 0
        %1284 = vmatprep.subr.bf16.mxu0 0
        %1285 = vmatpush1.bf16.msra.mxu0 0
        %1286 = vmatprep.subr.bf16.mxu0 0
        %1287 = vmatpush1.bf16.msra.mxu0 0
        %1288 = vmatprep.subr.bf16.mxu0 0
        %1289 = vmatpush1.bf16.msra.mxu0 0
        %1290 = vmatprep.mubr.bf16.mxu0 0
        %1291 = vmatmul.mubr.bf16.gmra.mrb[0].mxu0 %v1246
        %v1292 = vpop.f32.mrb[0].mxu0
        %v1293 = vadd.f32 0.0, %v1292
        %v1294 = vpop.f32.mrb[0].mxu0
        %v1295 = vadd.f32 0.0, %v1294
        %v1296 = vpop.f32.mrb[0].mxu0
        %v1297 = vpop.f32.mrb[0].mxu0
        %1298 = vdwg.mxu0
        %1299 = vmatprep.subr.bf16.mxu0 0
        %1300 = vmatpush1.bf16.msra.mxu0 %v1256
        %1301 = vmatprep.subr.bf16.mxu0 0
        %1302 = vmatpush1.bf16.msra.mxu0 0
        %1303 = vmatprep.subr.bf16.mxu0 0
        %1304 = vmatpush1.bf16.msra.mxu0 0
        %1305 = vmatprep.subr.bf16.mxu0 0
        %1306 = vmatpush1.bf16.msra.mxu0 0
        %1307 = vmatprep.subr.bf16.mxu0 0
        %1308 = vmatpush1.bf16.msra.mxu0 0
        %1309 = vmatprep.subr.bf16.mxu0 0
        %1310 = vmatpush1.bf16.msra.mxu0 0
        %1311 = vmatprep.subr.bf16.mxu0 0
        %1312 = vmatpush1.bf16.msra.mxu0 0
        %1313 = vmatprep.subr.bf16.mxu0 0
        %1314 = vmatpush1.bf16.msra.mxu0 0
        %1315 = vmatprep.subr.bf16.mxu0 0
        %1316 = vmatpush1.bf16.msra.mxu0 0
        %1317 = vmatprep.subr.bf16.mxu0 0
        %1318 = vmatpush1.bf16.msra.mxu0 0
        %1319 = vmatprep.subr.bf16.mxu0 0
        %1320 = vmatpush1.bf16.msra.mxu0 0
        %1321 = vmatprep.subr.bf16.mxu0 0
        %1322 = vmatpush1.bf16.msra.mxu0 0
        %1323 = vmatprep.subr.bf16.mxu0 0
        %1324 = vmatpush1.bf16.msra.mxu0 0
        %1325 = vmatprep.subr.bf16.mxu0 0
        %1326 = vmatpush1.bf16.msra.mxu0 0
        %1327 = vmatprep.subr.bf16.mxu0 0
        %1328 = vmatpush1.bf16.msra.mxu0 0
        %1329 = vmatprep.subr.bf16.mxu0 0
        %1330 = vmatpush1.bf16.msra.mxu0 0
        %1331 = vmatprep.mubr.bf16.mxu0 0
        %1332 = vmatmul.mubr.bf16.gmra.mrb[0].mxu0 %v1246
        %v1333 = vpop.f32.mrb[0].mxu0
        %v1334 = vadd.f32 0.0, %v1333
        %v1335 = vpop.f32.mrb[0].mxu0
        %v1336 = vpop.f32.mrb[0].mxu0
        %v1337 = vpop.f32.mrb[0].mxu0
        %1338 = vdwg.mxu0
        %v1340 = vsel %vm1244, %v1222, 0
        %v1343 = vsel %vm1248, %v1232, 0
        %v1346 = vsel %vm1248, %v1233, 0
        %v1349 = vsel %vm1248, %v1234, 0
        %1351 = vmatprep.subr.bf16.mxu0 %v1346
        %1352 = vmatpush1.bf16.msra.mxu0 %v1343
        %1353 = vmatprep.subr.bf16.mxu0 0
        %1354 = vmatpush1.bf16.msra.mxu0 0
        %1355 = vmatprep.subr.bf16.mxu0 0
        %1356 = vmatpush1.bf16.msra.mxu0 0
        %1357 = vmatprep.subr.bf16.mxu0 0
        %1358 = vmatpush1.bf16.msra.mxu0 0
        %1359 = vmatprep.subr.bf16.mxu0 0
        %1360 = vmatpush1.bf16.msra.mxu0 0
        %1361 = vmatprep.subr.bf16.mxu0 0
        %1362 = vmatpush1.bf16.msra.mxu0 0
        %1363 = vmatprep.subr.bf16.mxu0 0
        %1364 = vmatpush1.bf16.msra.mxu0 0
        %1365 = vmatprep.subr.bf16.mxu0 0
        %1366 = vmatpush1.bf16.msra.mxu0 0
        %1367 = vmatprep.subr.bf16.mxu0 0
        %1368 = vmatpush1.bf16.msra.mxu0 0
        %1369 = vmatprep.subr.bf16.mxu0 0
        %1370 = vmatpush1.bf16.msra.mxu0 0
        %1371 = vmatprep.subr.bf16.mxu0 0
        %1372 = vmatpush1.bf16.msra.mxu0 0
        %1373 = vmatprep.subr.bf16.mxu0 0
        %1374 = vmatpush1.bf16.msra.mxu0 0
        %1375 = vmatprep.subr.bf16.mxu0 0
        %1376 = vmatpush1.bf16.msra.mxu0 0
        %1377 = vmatprep.subr.bf16.mxu0 0
        %1378 = vmatpush1.bf16.msra.mxu0 0
        %1379 = vmatprep.subr.bf16.mxu0 0
        %1380 = vmatpush1.bf16.msra.mxu0 0
        %1381 = vmatprep.subr.bf16.mxu0 0
        %1382 = vmatpush1.bf16.msra.mxu0 0
        %1383 = vmatprep.mubr.bf16.mxu0 0
        %1384 = vmatmul.mubr.bf16.gmra.mrb[0].mxu0 %v1340
        %v1385 = vpop.f32.mrb[0].mxu0
        %v1386 = vadd.f32 %v1293, %v1385
        %v1387 = vpop.f32.mrb[0].mxu0
        %v1388 = vadd.f32 %v1295, %v1387
        %v1389 = vpop.f32.mrb[0].mxu0
        %v1390 = vpop.f32.mrb[0].mxu0
        %1391 = vdwg.mxu0
        %1392 = vmatprep.subr.bf16.mxu0 0
        %1393 = vmatpush1.bf16.msra.mxu0 %v1349
        %1394 = vmatprep.subr.bf16.mxu0 0
        %1395 = vmatpush1.bf16.msra.mxu0 0
        %1396 = vmatprep.subr.bf16.mxu0 0
        %1397 = vmatpush1.bf16.msra.mxu0 0
        %1398 = vmatprep.subr.bf16.mxu0 0
        %1399 = vmatpush1.bf16.msra.mxu0 0
        %1400 = vmatprep.subr.bf16.mxu0 0
        %1401 = vmatpush1.bf16.msra.mxu0 0
        %1402 = vmatprep.subr.bf16.mxu0 0
        %1403 = vmatpush1.bf16.msra.mxu0 0
        %1404 = vmatprep.subr.bf16.mxu0 0
        %1405 = vmatpush1.bf16.msra.mxu0 0
        %1406 = vmatprep.subr.bf16.mxu0 0
        %1407 = vmatpush1.bf16.msra.mxu0 0
        %1408 = vmatprep.subr.bf16.mxu0 0
        %1409 = vmatpush1.bf16.msra.mxu0 0
        %1410 = vmatprep.subr.bf16.mxu0 0
        %1411 = vmatpush1.bf16.msra.mxu0 0
        %1412 = vmatprep.subr.bf16.mxu0 0
        %1413 = vmatpush1.bf16.msra.mxu0 0
        %1414 = vmatprep.subr.bf16.mxu0 0
        %1415 = vmatpush1.bf16.msra.mxu0 0
        %1416 = vmatprep.subr.bf16.mxu0 0
        %1417 = vmatpush1.bf16.msra.mxu0 0
        %1418 = vmatprep.subr.bf16.mxu0 0
        %1419 = vmatpush1.bf16.msra.mxu0 0
        %1420 = vmatprep.subr.bf16.mxu0 0
        %1421 = vmatpush1.bf16.msra.mxu0 0
        %1422 = vmatprep.subr.bf16.mxu0 0
        %1423 = vmatpush1.bf16.msra.mxu0 0
        %1424 = vmatprep.mubr.bf16.mxu0 0
        %1425 = vmatmul.mubr.bf16.gmra.mrb[0].mxu0 %v1340
        %v1426 = vpop.f32.mrb[0].mxu0
        %v1427 = vadd.f32 %v1334, %v1426
        %v1428 = vpop.f32.mrb[0].mxu0
        %v1429 = vpop.f32.mrb[0].mxu0
        %v1430 = vpop.f32.mrb[0].mxu0
        %1431 = vdwg.mxu0
        %s1432 = scalar_lea.vmem %s2, 8
        %v1433 = vld [vmem:[%s1432] sm:$0xf]
        %1434 = vrot.lane.b32.xlu0 %v1232, 126
        %v1435 = vpop.permute.xlu0 %1434
        %1436 = vrot.lane.b32.xlu0 %v1233, 126
        %v1437 = vpop.permute.xlu0 %1436
        %1438 = vrot.lane.b32.xlu0 %v1234, 126
        %v1439 = vpop.permute.xlu0 %1438
        %vm1440 = vcmask 1031168
        %v1441 = vsel %vm1440, %v1435, %v1437
        %v1442 = vsel %vm1440, %v1437, %v1439
        %v1444 = vsel %vm1244, %v1433, 0
        %v1447 = vsel %vm1248, %v1441, 0
        %v1450 = vsel %vm1248, %v1442, 0
        %v1453 = vsel %vm1248, %v1439, 0
        %1455 = vmatprep.subr.bf16.mxu0 %v1450
        %1456 = vmatpush1.bf16.msra.mxu0 %v1447
        %1457 = vmatprep.subr.bf16.mxu0 0
        %1458 = vmatpush1.bf16.msra.mxu0 0
        %1459 = vmatprep.subr.bf16.mxu0 0
        %1460 = vmatpush1.bf16.msra.mxu0 0
        %1461 = vmatprep.subr.bf16.mxu0 0
        %1462 = vmatpush1.bf16.msra.mxu0 0
        %1463 = vmatprep.subr.bf16.mxu0 0
        %1464 = vmatpush1.bf16.msra.mxu0 0
        %1465 = vmatprep.subr.bf16.mxu0 0
        %1466 = vmatpush1.bf16.msra.mxu0 0
        %1467 = vmatprep.subr.bf16.mxu0 0
        %1468 = vmatpush1.bf16.msra.mxu0 0
        %1469 = vmatprep.subr.bf16.mxu0 0
        %1470 = vmatpush1.bf16.msra.mxu0 0
        %1471 = vmatprep.subr.bf16.mxu0 0
        %1472 = vmatpush1.bf16.msra.mxu0 0
        %1473 = vmatprep.subr.bf16.mxu0 0
        %1474 = vmatpush1.bf16.msra.mxu0 0
        %1475 = vmatprep.subr.bf16.mxu0 0
        %1476 = vmatpush1.bf16.msra.mxu0 0
        %1477 = vmatprep.subr.bf16.mxu0 0
        %1478 = vmatpush1.bf16.msra.mxu0 0
        %1479 = vmatprep.subr.bf16.mxu0 0
        %1480 = vmatpush1.bf16.msra.mxu0 0
        %1481 = vmatprep.subr.bf16.mxu0 0
        %1482 = vmatpush1.bf16.msra.mxu0 0
        %1483 = vmatprep.subr.bf16.mxu0 0
        %1484 = vmatpush1.bf16.msra.mxu0 0
        %1485 = vmatprep.subr.bf16.mxu0 0
        %1486 = vmatpush1.bf16.msra.mxu0 0
        %1487 = vmatprep.mubr.bf16.mxu0 0
        %1488 = vmatmul.mubr.bf16.gmra.mrb[0].mxu0 %v1444
        %v1489 = vpop.f32.mrb[0].mxu0
        %v1490 = vadd.f32 0.0, %v1489
        %v1491 = vpop.f32.mrb[0].mxu0
        %v1492 = vadd.f32 0.0, %v1491
        %v1493 = vpop.f32.mrb[0].mxu0
        %v1494 = vpop.f32.mrb[0].mxu0
        %1495 = vdwg.mxu0
        %1496 = vmatprep.subr.bf16.mxu0 0
        %1497 = vmatpush1.bf16.msra.mxu0 %v1453
        %1498 = vmatprep.subr.bf16.mxu0 0
        %1499 = vmatpush1.bf16.msra.mxu0 0
        %1500 = vmatprep.subr.bf16.mxu0 0
        %1501 = vmatpush1.bf16.msra.mxu0 0
        %1502 = vmatprep.subr.bf16.mxu0 0
        %1503 = vmatpush1.bf16.msra.mxu0 0
        %1504 = vmatprep.subr.bf16.mxu0 0
        %1505 = vmatpush1.bf16.msra.mxu0 0
        %1506 = vmatprep.subr.bf16.mxu0 0
        %1507 = vmatpush1.bf16.msra.mxu0 0
        %1508 = vmatprep.subr.bf16.mxu0 0
        %1509 = vmatpush1.bf16.msra.mxu0 0
        %1510 = vmatprep.subr.bf16.mxu0 0
        %1511 = vmatpush1.bf16.msra.mxu0 0
        %1512 = vmatprep.subr.bf16.mxu0 0
        %1513 = vmatpush1.bf16.msra.mxu0 0
        %1514 = vmatprep.subr.bf16.mxu0 0
        %1515 = vmatpush1.bf16.msra.mxu0 0
        %1516 = vmatprep.subr.bf16.mxu0 0
        %1517 = vmatpush1.bf16.msra.mxu0 0
        %1518 = vmatprep.subr.bf16.mxu0 0
        %1519 = vmatpush1.bf16.msra.mxu0 0
        %1520 = vmatprep.subr.bf16.mxu0 0
        %1521 = vmatpush1.bf16.msra.mxu0 0
        %1522 = vmatprep.subr.bf16.mxu0 0
        %1523 = vmatpush1.bf16.msra.mxu0 0
        %1524 = vmatprep.subr.bf16.mxu0 0
        %1525 = vmatpush1.bf16.msra.mxu0 0
        %1526 = vmatprep.subr.bf16.mxu0 0
        %1527 = vmatpush1.bf16.msra.mxu0 0
        %1528 = vmatprep.mubr.bf16.mxu0 0
        %1529 = vmatmul.mubr.bf16.gmra.mrb[0].mxu0 %v1444
        %v1530 = vpop.f32.mrb[0].mxu0
        %v1531 = vadd.f32 0.0, %v1530
        %v1532 = vpop.f32.mrb[0].mxu0
        %v1533 = vpop.f32.mrb[0].mxu0
        %v1534 = vpop.f32.mrb[0].mxu0
        %1535 = vdwg.mxu0
        %v1536 = vadd.f32 %v1386, %v1490
        %v1537 = vadd.f32 %v1388, %v1492
        %v1538 = vadd.f32 %v1427, %v1531
        %s1539 = scalar_lea.vmem %s2, 12
        %v1540 = vld [vmem:[%s1539] sm:$0xf]
        %1541 = vrot.lane.b32.xlu0 %v1232, 110
        %v1542 = vpop.permute.xlu0 %1541
        %1543 = vrot.lane.b32.xlu0 %v1233, 110
        %v1544 = vpop.permute.xlu0 %1543
        %1545 = vrot.lane.b32.xlu0 %v1234, 110
        %v1546 = vpop.permute.xlu0 %1545
        %vm1547 = vcmask 900096
        %v1548 = vsel %vm1547, %v1542, %v1544
        %v1549 = vsel %vm1547, %v1544, %v1546
        %v1551 = vsel %vm1244, %v1540, 0
        %v1554 = vsel %vm1248, %v1548, 0
        %v1557 = vsel %vm1248, %v1549, 0
        %v1560 = vsel %vm1248, %v1546, 0
        %1562 = vmatprep.subr.bf16.mxu0 %v1557
        %1563 = vmatpush1.bf16.msra.mxu0 %v1554
        %1564 = vmatprep.subr.bf16.mxu0 0
        %1565 = vmatpush1.bf16.msra.mxu0 0
        %1566 = vmatprep.subr.bf16.mxu0 0
        %1567 = vmatpush1.bf16.msra.mxu0 0
        %1568 = vmatprep.subr.bf16.mxu0 0
        %1569 = vmatpush1.bf16.msra.mxu0 0
        %1570 = vmatprep.subr.bf16.mxu0 0
        %1571 = vmatpush1.bf16.msra.mxu0 0
        %1572 = vmatprep.subr.bf16.mxu0 0
        %1573 = vmatpush1.bf16.msra.mxu0 0
        %1574 = vmatprep.subr.bf16.mxu0 0
        %1575 = vmatpush1.bf16.msra.mxu0 0
        %1576 = vmatprep.subr.bf16.mxu0 0
        %1577 = vmatpush1.bf16.msra.mxu0 0
        %1578 = vmatprep.subr.bf16.mxu0 0
        %1579 = vmatpush1.bf16.msra.mxu0 0
        %1580 = vmatprep.subr.bf16.mxu0 0
        %1581 = vmatpush1.bf16.msra.mxu0 0
        %1582 = vmatprep.subr.bf16.mxu0 0
        %1583 = vmatpush1.bf16.msra.mxu0 0
        %1584 = vmatprep.subr.bf16.mxu0 0
        %1585 = vmatpush1.bf16.msra.mxu0 0
        %1586 = vmatprep.subr.bf16.mxu0 0
        %1587 = vmatpush1.bf16.msra.mxu0 0
        %1588 = vmatprep.subr.bf16.mxu0 0
        %1589 = vmatpush1.bf16.msra.mxu0 0
        %1590 = vmatprep.subr.bf16.mxu0 0
        %1591 = vmatpush1.bf16.msra.mxu0 0
        %1592 = vmatprep.subr.bf16.mxu0 0
        %1593 = vmatpush1.bf16.msra.mxu0 0
        %1594 = vmatprep.mubr.bf16.mxu0 0
        %1595 = vmatmul.mubr.bf16.gmra.mrb[0].mxu0 %v1551
        %v1596 = vpop.f32.mrb[0].mxu0
        %v1597 = vadd.f32 0.0, %v1596
        %v1598 = vpop.f32.mrb[0].mxu0
        %v1599 = vadd.f32 0.0, %v1598
        %v1600 = vpop.f32.mrb[0].mxu0
        %v1601 = vpop.f32.mrb[0].mxu0
        %1602 = vdwg.mxu0
        %1603 = vmatprep.subr.bf16.mxu0 0
        %1604 = vmatpush1.bf16.msra.mxu0 %v1560
        %1605 = vmatprep.subr.bf16.mxu0 0
        %1606 = vmatpush1.bf16.msra.mxu0 0
        %1607 = vmatprep.subr.bf16.mxu0 0
        %1608 = vmatpush1.bf16.msra.mxu0 0
        %1609 = vmatprep.subr.bf16.mxu0 0
        %1610 = vmatpush1.bf16.msra.mxu0 0
        %1611 = vmatprep.subr.bf16.mxu0 0
        %1612 = vmatpush1.bf16.msra.mxu0 0
        %1613 = vmatprep.subr.bf16.mxu0 0
        %1614 = vmatpush1.bf16.msra.mxu0 0
        %1615 = vmatprep.subr.bf16.mxu0 0
        %1616 = vmatpush1.bf16.msra.mxu0 0
        %1617 = vmatprep.subr.bf16.mxu0 0
        %1618 = vmatpush1.bf16.msra.mxu0 0
        %1619 = vmatprep.subr.bf16.mxu0 0
        %1620 = vmatpush1.bf16.msra.mxu0 0
        %1621 = vmatprep.subr.bf16.mxu0 0
        %1622 = vmatpush1.bf16.msra.mxu0 0
        %1623 = vmatprep.subr.bf16.mxu0 0
        %1624 = vmatpush1.bf16.msra.mxu0 0
        %1625 = vmatprep.subr.bf16.mxu0 0
        %1626 = vmatpush1.bf16.msra.mxu0 0
        %1627 = vmatprep.subr.bf16.mxu0 0
        %1628 = vmatpush1.bf16.msra.mxu0 0
        %1629 = vmatprep.subr.bf16.mxu0 0
        %1630 = vmatpush1.bf16.msra.mxu0 0
        %1631 = vmatprep.subr.bf16.mxu0 0
        %1632 = vmatpush1.bf16.msra.mxu0 0
        %1633 = vmatprep.subr.bf16.mxu0 0
        %1634 = vmatpush1.bf16.msra.mxu0 0
        %1635 = vmatprep.mubr.bf16.mxu0 0
        %1636 = vmatmul.mubr.bf16.gmra.mrb[0].mxu0 %v1551
        %v1637 = vpop.f32.mrb[0].mxu0
        %v1638 = vadd.f32 0.0, %v1637
        %v1639 = vpop.f32.mrb[0].mxu0
        %v1640 = vpop.f32.mrb[0].mxu0
        %v1641 = vpop.f32.mrb[0].mxu0
        %1642 = vdwg.mxu0
        %v1643 = vadd.f32 %v1536, %v1597
        %v1644 = vadd.f32 %v1537, %v1599
        %v1645 = vadd.f32 %v1538, %v1638
        %s1646 = scalar_lea.vmem %s2, 16
        %v1647 = vld [vmem:[%s1646] sm:$0xf]
        %1648 = vrot.lane.b32.xlu0 %v1232, 109
        %v1649 = vpop.permute.xlu0 %1648
        %1650 = vrot.lane.b32.xlu0 %v1233, 109
        %v1651 = vpop.permute.xlu0 %1650
        %1652 = vrot.lane.b32.xlu0 %v1234, 109
        %v1653 = vpop.permute.xlu0 %1652
        %vm1654 = vcmask 891904
        %v1655 = vsel %vm1654, %v1649, %v1651
        %v1656 = vsel %vm1654, %v1651, %v1653
        %v1658 = vsel %vm1244, %v1647, 0
        %v1661 = vsel %vm1248, %v1655, 0
        %v1664 = vsel %vm1248, %v1656, 0
        %v1667 = vsel %vm1248, %v1653, 0
        %1669 = vmatprep.subr.bf16.mxu0 %v1664
        %1670 = vmatpush1.bf16.msra.mxu0 %v1661
        %1671 = vmatprep.subr.bf16.mxu0 0
        %1672 = vmatpush1.bf16.msra.mxu0 0
        %1673 = vmatprep.subr.bf16.mxu0 0
        %1674 = vmatpush1.bf16.msra.mxu0 0
        %1675 = vmatprep.subr.bf16.mxu0 0
        %1676 = vmatpush1.bf16.msra.mxu0 0
        %1677 = vmatprep.subr.bf16.mxu0 0
        %1678 = vmatpush1.bf16.msra.mxu0 0
        %1679 = vmatprep.subr.bf16.mxu0 0
        %1680 = vmatpush1.bf16.msra.mxu0 0
        %1681 = vmatprep.subr.bf16.mxu0 0
        %1682 = vmatpush1.bf16.msra.mxu0 0
        %1683 = vmatprep.subr.bf16.mxu0 0
        %1684 = vmatpush1.bf16.msra.mxu0 0
        %1685 = vmatprep.subr.bf16.mxu0 0
        %1686 = vmatpush1.bf16.msra.mxu0 0
        %1687 = vmatprep.subr.bf16.mxu0 0
        %1688 = vmatpush1.bf16.msra.mxu0 0
        %1689 = vmatprep.subr.bf16.mxu0 0
        %1690 = vmatpush1.bf16.msra.mxu0 0
        %1691 = vmatprep.subr.bf16.mxu0 0
        %1692 = vmatpush1.bf16.msra.mxu0 0
        %1693 = vmatprep.subr.bf16.mxu0 0
        %1694 = vmatpush1.bf16.msra.mxu0 0
        %1695 = vmatprep.subr.bf16.mxu0 0
        %1696 = vmatpush1.bf16.msra.mxu0 0
        %1697 = vmatprep.subr.bf16.mxu0 0
        %1698 = vmatpush1.bf16.msra.mxu0 0
        %1699 = vmatprep.subr.bf16.mxu0 0
        %1700 = vmatpush1.bf16.msra.mxu0 0
        %1701 = vmatprep.mubr.bf16.mxu0 0
        %1702 = vmatmul.mubr.bf16.gmra.mrb[0].mxu0 %v1658
        %v1703 = vpop.f32.mrb[0].mxu0
        %v1704 = vadd.f32 0.0, %v1703
        %v1705 = vpop.f32.mrb[0].mxu0
        %v1706 = vadd.f32 0.0, %v1705
        %v1707 = vpop.f32.mrb[0].mxu0
        %v1708 = vpop.f32.mrb[0].mxu0
        %1709 = vdwg.mxu0
        %1710 = vmatprep.subr.bf16.mxu0 0
        %1711 = vmatpush1.bf16.msra.mxu0 %v1667
        %1712 = vmatprep.subr.bf16.mxu0 0
        %1713 = vmatpush1.bf16.msra.mxu0 0
        %1714 = vmatprep.subr.bf16.mxu0 0
        %1715 = vmatpush1.bf16.msra.mxu0 0
        %1716 = vmatprep.subr.bf16.mxu0 0
        %1717 = vmatpush1.bf16.msra.mxu0 0
        %1718 = vmatprep.subr.bf16.mxu0 0
        %1719 = vmatpush1.bf16.msra.mxu0 0
        %1720 = vmatprep.subr.bf16.mxu0 0
        %1721 = vmatpush1.bf16.msra.mxu0 0
        %1722 = vmatprep.subr.bf16.mxu0 0
        %1723 = vmatpush1.bf16.msra.mxu0 0
        %1724 = vmatprep.subr.bf16.mxu0 0
        %1725 = vmatpush1.bf16.msra.mxu0 0
        %1726 = vmatprep.subr.bf16.mxu0 0
        %1727 = vmatpush1.bf16.msra.mxu0 0
        %1728 = vmatprep.subr.bf16.mxu0 0
        %1729 = vmatpush1.bf16.msra.mxu0 0
        %1730 = vmatprep.subr.bf16.mxu0 0
        %1731 = vmatpush1.bf16.msra.mxu0 0
        %1732 = vmatprep.subr.bf16.mxu0 0
        %1733 = vmatpush1.bf16.msra.mxu0 0
        %1734 = vmatprep.subr.bf16.mxu0 0
        %1735 = vmatpush1.bf16.msra.mxu0 0
        %1736 = vmatprep.subr.bf16.mxu0 0
        %1737 = vmatpush1.bf16.msra.mxu0 0
        %1738 = vmatprep.subr.bf16.mxu0 0
        %1739 = vmatpush1.bf16.msra.mxu0 0
        %1740 = vmatprep.subr.bf16.mxu0 0
        %1741 = vmatpush1.bf16.msra.mxu0 0
        %1742 = vmatprep.mubr.bf16.mxu0 0
        %1743 = vmatmul.mubr.bf16.gmra.mrb[0].mxu0 %v1658
        %v1744 = vpop.f32.mrb[0].mxu0
        %v1745 = vadd.f32 0.0, %v1744
        %v1746 = vpop.f32.mrb[0].mxu0
        %v1747 = vpop.f32.mrb[0].mxu0
        %v1748 = vpop.f32.mrb[0].mxu0
        %1749 = vdwg.mxu0
        %v1750 = vadd.f32 %v1643, %v1704
        %v1751 = vadd.f32 %v1644, %v1706
        %v1752 = vadd.f32 %v1645, %v1745
        %s1753 = scalar_lea.vmem %s2, 20
        %v1754 = vld [vmem:[%s1753] sm:$0xf]
        %1755 = vrot.lane.b32.xlu0 %v1232, 108
        %v1756 = vpop.permute.xlu0 %1755
        %1757 = vrot.lane.b32.xlu0 %v1233, 108
        %v1758 = vpop.permute.xlu0 %1757
        %1759 = vrot.lane.b32.xlu0 %v1234, 108
        %v1760 = vpop.permute.xlu0 %1759
        %vm1761 = vcmask 883712
        %v1762 = vsel %vm1761, %v1756, %v1758
        %v1763 = vsel %vm1761, %v1758, %v1760
        %v1765 = vsel %vm1244, %v1754, 0
        %v1768 = vsel %vm1248, %v1762, 0
        %v1771 = vsel %vm1248, %v1763, 0
        %v1774 = vsel %vm1248, %v1760, 0
        %1776 = vmatprep.subr.bf16.mxu0 %v1771
        %1777 = vmatpush1.bf16.msra.mxu0 %v1768
        %1778 = vmatprep.subr.bf16.mxu0 0
        %1779 = vmatpush1.bf16.msra.mxu0 0
        %1780 = vmatprep.subr.bf16.mxu0 0
        %1781 = vmatpush1.bf16.msra.mxu0 0
        %1782 = vmatprep.subr.bf16.mxu0 0
        %1783 = vmatpush1.bf16.msra.mxu0 0
        %1784 = vmatprep.subr.bf16.mxu0 0
        %1785 = vmatpush1.bf16.msra.mxu0 0
        %1786 = vmatprep.subr.bf16.mxu0 0
        %1787 = vmatpush1.bf16.msra.mxu0 0
        %1788 = vmatprep.subr.bf16.mxu0 0
        %1789 = vmatpush1.bf16.msra.mxu0 0
        %1790 = vmatprep.subr.bf16.mxu0 0
        %1791 = vmatpush1.bf16.msra.mxu0 0
        %1792 = vmatprep.subr.bf16.mxu0 0
        %1793 = vmatpush1.bf16.msra.mxu0 0
        %1794 = vmatprep.subr.bf16.mxu0 0
        %1795 = vmatpush1.bf16.msra.mxu0 0
        %1796 = vmatprep.subr.bf16.mxu0 0
        %1797 = vmatpush1.bf16.msra.mxu0 0
        %1798 = vmatprep.subr.bf16.mxu0 0
        %1799 = vmatpush1.bf16.msra.mxu0 0
        %1800 = vmatprep.subr.bf16.mxu0 0
        %1801 = vmatpush1.bf16.msra.mxu0 0
        %1802 = vmatprep.subr.bf16.mxu0 0
        %1803 = vmatpush1.bf16.msra.mxu0 0
        %1804 = vmatprep.subr.bf16.mxu0 0
        %1805 = vmatpush1.bf16.msra.mxu0 0
        %1806 = vmatprep.subr.bf16.mxu0 0
        %1807 = vmatpush1.bf16.msra.mxu0 0
        %1808 = vmatprep.mubr.bf16.mxu0 0
        %1809 = vmatmul.mubr.bf16.gmra.mrb[0].mxu0 %v1765
        %v1810 = vpop.f32.mrb[0].mxu0
        %v1811 = vadd.f32 0.0, %v1810
        %v1812 = vpop.f32.mrb[0].mxu0
        %v1813 = vadd.f32 0.0, %v1812
        %v1814 = vpop.f32.mrb[0].mxu0
        %v1815 = vpop.f32.mrb[0].mxu0
        %1816 = vdwg.mxu0
        %1817 = vmatprep.subr.bf16.mxu0 0
        %1818 = vmatpush1.bf16.msra.mxu0 %v1774
        %1819 = vmatprep.subr.bf16.mxu0 0
        %1820 = vmatpush1.bf16.msra.mxu0 0
        %1821 = vmatprep.subr.bf16.mxu0 0
        %1822 = vmatpush1.bf16.msra.mxu0 0
        %1823 = vmatprep.subr.bf16.mxu0 0
        %1824 = vmatpush1.bf16.msra.mxu0 0
        %1825 = vmatprep.subr.bf16.mxu0 0
        %1826 = vmatpush1.bf16.msra.mxu0 0
        %1827 = vmatprep.subr.bf16.mxu0 0
        %1828 = vmatpush1.bf16.msra.mxu0 0
        %1829 = vmatprep.subr.bf16.mxu0 0
        %1830 = vmatpush1.bf16.msra.mxu0 0
        %1831 = vmatprep.subr.bf16.mxu0 0
        %1832 = vmatpush1.bf16.msra.mxu0 0
        %1833 = vmatprep.subr.bf16.mxu0 0
        %1834 = vmatpush1.bf16.msra.mxu0 0
        %1835 = vmatprep.subr.bf16.mxu0 0
        %1836 = vmatpush1.bf16.msra.mxu0 0
        %1837 = vmatprep.subr.bf16.mxu0 0
        %1838 = vmatpush1.bf16.msra.mxu0 0
        %1839 = vmatprep.subr.bf16.mxu0 0
        %1840 = vmatpush1.bf16.msra.mxu0 0
        %1841 = vmatprep.subr.bf16.mxu0 0
        %1842 = vmatpush1.bf16.msra.mxu0 0
        %1843 = vmatprep.subr.bf16.mxu0 0
        %1844 = vmatpush1.bf16.msra.mxu0 0
        %1845 = vmatprep.subr.bf16.mxu0 0
        %1846 = vmatpush1.bf16.msra.mxu0 0
        %1847 = vmatprep.subr.bf16.mxu0 0
        %1848 = vmatpush1.bf16.msra.mxu0 0
        %1849 = vmatprep.mubr.bf16.mxu0 0
        %1850 = vmatmul.mubr.bf16.gmra.mrb[0].mxu0 %v1765
        %v1851 = vpop.f32.mrb[0].mxu0
        %v1852 = vadd.f32 0.0, %v1851
        %v1853 = vpop.f32.mrb[0].mxu0
        %v1854 = vpop.f32.mrb[0].mxu0
        %v1855 = vpop.f32.mrb[0].mxu0
        %1856 = vdwg.mxu0
        %v1857 = vadd.f32 %v1750, %v1811
        %v1858 = vadd.f32 %v1751, %v1813
        %v1859 = vadd.f32 %v1752, %v1852
        %s1860 = scalar_lea.vmem %s2, 24
        %v1861 = vld [vmem:[%s1860] sm:$0xf]
        %1862 = vrot.lane.b32.xlu0 %v1232, 92
        %v1863 = vpop.permute.xlu0 %1862
        %1864 = vrot.lane.b32.xlu0 %v1233, 92
        %v1865 = vpop.permute.xlu0 %1864
        %1866 = vrot.lane.b32.xlu0 %v1234, 92
        %v1867 = vpop.permute.xlu0 %1866
        %vm1868 = vcmask 752640
        %v1869 = vsel %vm1868, %v1863, %v1865
        %v1870 = vsel %vm1868, %v1865, %v1867
        %v1872 = vsel %vm1244, %v1861, 0
        %v1875 = vsel %vm1248, %v1869, 0
        %v1878 = vsel %vm1248, %v1870, 0
        %v1881 = vsel %vm1248, %v1867, 0
        %1883 = vmatprep.subr.bf16.mxu0 %v1878
        %1884 = vmatpush1.bf16.msra.mxu0 %v1875
        %1885 = vmatprep.subr.bf16.mxu0 0
        %1886 = vmatpush1.bf16.msra.mxu0 0
        %1887 = vmatprep.subr.bf16.mxu0 0
        %1888 = vmatpush1.bf16.msra.mxu0 0
        %1889 = vmatprep.subr.bf16.mxu0 0
        %1890 = vmatpush1.bf16.msra.mxu0 0
        %1891 = vmatprep.subr.bf16.mxu0 0
        %1892 = vmatpush1.bf16.msra.mxu0 0
        %1893 = vmatprep.subr.bf16.mxu0 0
        %1894 = vmatpush1.bf16.msra.mxu0 0
        %1895 = vmatprep.subr.bf16.mxu0 0
        %1896 = vmatpush1.bf16.msra.mxu0 0
        %1897 = vmatprep.subr.bf16.mxu0 0
        %1898 = vmatpush1.bf16.msra.mxu0 0
        %1899 = vmatprep.subr.bf16.mxu0 0
        %1900 = vmatpush1.bf16.msra.mxu0 0
        %1901 = vmatprep.subr.bf16.mxu0 0
        %1902 = vmatpush1.bf16.msra.mxu0 0
        %1903 = vmatprep.subr.bf16.mxu0 0
        %1904 = vmatpush1.bf16.msra.mxu0 0
        %1905 = vmatprep.subr.bf16.mxu0 0
        %1906 = vmatpush1.bf16.msra.mxu0 0
        %1907 = vmatprep.subr.bf16.mxu0 0
        %1908 = vmatpush1.bf16.msra.mxu0 0
        %1909 = vmatprep.subr.bf16.mxu0 0
        %1910 = vmatpush1.bf16.msra.mxu0 0
        %1911 = vmatprep.subr.bf16.mxu0 0
        %1912 = vmatpush1.bf16.msra.mxu0 0
        %1913 = vmatprep.subr.bf16.mxu0 0
        %1914 = vmatpush1.bf16.msra.mxu0 0
        %1915 = vmatprep.mubr.bf16.mxu0 0
        %1916 = vmatmul.mubr.bf16.gmra.mrb[0].mxu0 %v1872
        %v1917 = vpop.f32.mrb[0].mxu0
        %v1918 = vadd.f32 0.0, %v1917
        %v1919 = vpop.f32.mrb[0].mxu0
        %v1920 = vadd.f32 0.0, %v1919
        %v1921 = vpop.f32.mrb[0].mxu0
        %v1922 = vpop.f32.mrb[0].mxu0
        %1923 = vdwg.mxu0
        %1924 = vmatprep.subr.bf16.mxu0 0
        %1925 = vmatpush1.bf16.msra.mxu0 %v1881
        %1926 = vmatprep.subr.bf16.mxu0 0
        %1927 = vmatpush1.bf16.msra.mxu0 0
        %1928 = vmatprep.subr.bf16.mxu0 0
        %1929 = vmatpush1.bf16.msra.mxu0 0
        %1930 = vmatprep.subr.bf16.mxu0 0
        %1931 = vmatpush1.bf16.msra.mxu0 0
        %1932 = vmatprep.subr.bf16.mxu0 0
        %1933 = vmatpush1.bf16.msra.mxu0 0
        %1934 = vmatprep.subr.bf16.mxu0 0
        %1935 = vmatpush1.bf16.msra.mxu0 0
        %1936 = vmatprep.subr.bf16.mxu0 0
        %1937 = vmatpush1.bf16.msra.mxu0 0
        %1938 = vmatprep.subr.bf16.mxu0 0
        %1939 = vmatpush1.bf16.msra.mxu0 0
        %1940 = vmatprep.subr.bf16.mxu0 0
        %1941 = vmatpush1.bf16.msra.mxu0 0
        %1942 = vmatprep.subr.bf16.mxu0 0
        %1943 = vmatpush1.bf16.msra.mxu0 0
        %1944 = vmatprep.subr.bf16.mxu0 0
        %1945 = vmatpush1.bf16.msra.mxu0 0
        %1946 = vmatprep.subr.bf16.mxu0 0
        %1947 = vmatpush1.bf16.msra.mxu0 0
        %1948 = vmatprep.subr.bf16.mxu0 0
        %1949 = vmatpush1.bf16.msra.mxu0 0
        %1950 = vmatprep.subr.bf16.mxu0 0
        %1951 = vmatpush1.bf16.msra.mxu0 0
        %1952 = vmatprep.subr.bf16.mxu0 0
        %1953 = vmatpush1.bf16.msra.mxu0 0
        %1954 = vmatprep.subr.bf16.mxu0 0
        %1955 = vmatpush1.bf16.msra.mxu0 0
        %1956 = vmatprep.mubr.bf16.mxu0 0
        %1957 = vmatmul.mubr.bf16.gmra.mrb[0].mxu0 %v1872
        %v1958 = vpop.f32.mrb[0].mxu0
        %v1959 = vadd.f32 0.0, %v1958
        %v1960 = vpop.f32.mrb[0].mxu0
        %v1961 = vpop.f32.mrb[0].mxu0
        %v1962 = vpop.f32.mrb[0].mxu0
        %1963 = vdwg.mxu0
        %v1964 = vadd.f32 %v1857, %v1918
        %v1965 = vadd.f32 %v1858, %v1920
        %v1966 = vadd.f32 %v1859, %v1959
        %s1967 = scalar_lea.vmem %s2, 28
        %v1968 = vld [vmem:[%s1967] sm:$0xf]
        %1969 = vrot.lane.b32.xlu0 %v1232, 91
        %v1970 = vpop.permute.xlu0 %1969
        %1971 = vrot.lane.b32.xlu0 %v1233, 91
        %v1972 = vpop.permute.xlu0 %1971
        %1973 = vrot.lane.b32.xlu0 %v1234, 91
        %v1974 = vpop.permute.xlu0 %1973
        %vm1975 = vcmask 744448
        %v1976 = vsel %vm1975, %v1970, %v1972
        %v1977 = vsel %vm1975, %v1972, %v1974
        %v1979 = vsel %vm1244, %v1968, 0
        %v1982 = vsel %vm1248, %v1976, 0
        %v1985 = vsel %vm1248, %v1977, 0
        %v1988 = vsel %vm1248, %v1974, 0
        %1990 = vmatprep.subr.bf16.mxu0 %v1985
        %1991 = vmatpush1.bf16.msra.mxu0 %v1982
        %1992 = vmatprep.subr.bf16.mxu0 0
        %1993 = vmatpush1.bf16.msra.mxu0 0
        %1994 = vmatprep.subr.bf16.mxu0 0
        %1995 = vmatpush1.bf16.msra.mxu0 0
        %1996 = vmatprep.subr.bf16.mxu0 0
        %1997 = vmatpush1.bf16.msra.mxu0 0
        %1998 = vmatprep.subr.bf16.mxu0 0
        %1999 = vmatpush1.bf16.msra.mxu0 0
        %2000 = vmatprep.subr.bf16.mxu0 0
        %2001 = vmatpush1.bf16.msra.mxu0 0
        %2002 = vmatprep.subr.bf16.mxu0 0
        %2003 = vmatpush1.bf16.msra.mxu0 0
        %2004 = vmatprep.subr.bf16.mxu0 0
        %2005 = vmatpush1.bf16.msra.mxu0 0
        %2006 = vmatprep.subr.bf16.mxu0 0
        %2007 = vmatpush1.bf16.msra.mxu0 0
        %2008 = vmatprep.subr.bf16.mxu0 0
        %2009 = vmatpush1.bf16.msra.mxu0 0
        %2010 = vmatprep.subr.bf16.mxu0 0
        %2011 = vmatpush1.bf16.msra.mxu0 0
        %2012 = vmatprep.subr.bf16.mxu0 0
        %2013 = vmatpush1.bf16.msra.mxu0 0
        %2014 = vmatprep.subr.bf16.mxu0 0
        %2015 = vmatpush1.bf16.msra.mxu0 0
        %2016 = vmatprep.subr.bf16.mxu0 0
        %2017 = vmatpush1.bf16.msra.mxu0 0
        %2018 = vmatprep.subr.bf16.mxu0 0
        %2019 = vmatpush1.bf16.msra.mxu0 0
        %2020 = vmatprep.subr.bf16.mxu0 0
        %2021 = vmatpush1.bf16.msra.mxu0 0
        %2022 = vmatprep.mubr.bf16.mxu0 0
        %2023 = vmatmul.mubr.bf16.gmra.mrb[0].mxu0 %v1979
        %v2024 = vpop.f32.mrb[0].mxu0
        %v2025 = vadd.f32 0.0, %v2024
        %v2026 = vpop.f32.mrb[0].mxu0
        %v2027 = vadd.f32 0.0, %v2026
        %v2028 = vpop.f32.mrb[0].mxu0
        %v2029 = vpop.f32.mrb[0].mxu0
        %2030 = vdwg.mxu0
        %2031 = vmatprep.subr.bf16.mxu0 0
        %2032 = vmatpush1.bf16.msra.mxu0 %v1988
        %2033 = vmatprep.subr.bf16.mxu0 0
        %2034 = vmatpush1.bf16.msra.mxu0 0
        %2035 = vmatprep.subr.bf16.mxu0 0
        %2036 = vmatpush1.bf16.msra.mxu0 0
        %2037 = vmatprep.subr.bf16.mxu0 0
        %2038 = vmatpush1.bf16.msra.mxu0 0
        %2039 = vmatprep.subr.bf16.mxu0 0
        %2040 = vmatpush1.bf16.msra.mxu0 0
        %2041 = vmatprep.subr.bf16.mxu0 0
        %2042 = vmatpush1.bf16.msra.mxu0 0
        %2043 = vmatprep.subr.bf16.mxu0 0
        %2044 = vmatpush1.bf16.msra.mxu0 0
        %2045 = vmatprep.subr.bf16.mxu0 0
        %2046 = vmatpush1.bf16.msra.mxu0 0
        %2047 = vmatprep.subr.bf16.mxu0 0
        %2048 = vmatpush1.bf16.msra.mxu0 0
        %2049 = vmatprep.subr.bf16.mxu0 0
        %2050 = vmatpush1.bf16.msra.mxu0 0
        %2051 = vmatprep.subr.bf16.mxu0 0
        %2052 = vmatpush1.bf16.msra.mxu0 0
        %2053 = vmatprep.subr.bf16.mxu0 0
        %2054 = vmatpush1.bf16.msra.mxu0 0
        %2055 = vmatprep.subr.bf16.mxu0 0
        %2056 = vmatpush1.bf16.msra.mxu0 0
        %2057 = vmatprep.subr.bf16.mxu0 0
        %2058 = vmatpush1.bf16.msra.mxu0 0
        %2059 = vmatprep.subr.bf16.mxu0 0
        %2060 = vmatpush1.bf16.msra.mxu0 0
        %2061 = vmatprep.subr.bf16.mxu0 0
        %2062 = vmatpush1.bf16.msra.mxu0 0
        %2063 = vmatprep.mubr.bf16.mxu0 0
        %2064 = vmatmul.mubr.bf16.gmra.mrb[0].mxu0 %v1979
        %v2065 = vpop.f32.mrb[0].mxu0
        %v2066 = vadd.f32 0.0, %v2065
        %v2067 = vpop.f32.mrb[0].mxu0
        %v2068 = vpop.f32.mrb[0].mxu0
        %v2069 = vpop.f32.mrb[0].mxu0
        %2070 = vdwg.mxu0
        %v2071 = vadd.f32 %v1964, %v2025
        %v2072 = vadd.f32 %v1965, %v2027
        %v2073 = vadd.f32 %v1966, %v2066
        %s2074 = scalar_lea.vmem %s2, 32
        %v2075 = vld [vmem:[%s2074] sm:$0xf]
        %2076 = vrot.lane.b32.xlu0 %v1232, 90
        %v2077 = vpop.permute.xlu0 %2076
        %2078 = vrot.lane.b32.xlu0 %v1233, 90
        %v2079 = vpop.permute.xlu0 %2078
        %2080 = vrot.lane.b32.xlu0 %v1234, 90
        %v2081 = vpop.permute.xlu0 %2080
        %vm2082 = vcmask 736256
        %v2083 = vsel %vm2082, %v2077, %v2079
        %v2084 = vsel %vm2082, %v2079, %v2081
        %v2086 = vsel %vm1244, %v2075, 0
        %v2089 = vsel %vm1248, %v2083, 0
        %v2092 = vsel %vm1248, %v2084, 0
        %v2095 = vsel %vm1248, %v2081, 0
        %2097 = vmatprep.subr.bf16.mxu0 %v2092
        %2098 = vmatpush1.bf16.msra.mxu0 %v2089
        %2099 = vmatprep.subr.bf16.mxu0 0
        %2100 = vmatpush1.bf16.msra.mxu0 0
        %2101 = vmatprep.subr.bf16.mxu0 0
        %2102 = vmatpush1.bf16.msra.mxu0 0
        %2103 = vmatprep.subr.bf16.mxu0 0
        %2104 = vmatpush1.bf16.msra.mxu0 0
        %2105 = vmatprep.subr.bf16.mxu0 0
        %2106 = vmatpush1.bf16.msra.mxu0 0
        %2107 = vmatprep.subr.bf16.mxu0 0
        %2108 = vmatpush1.bf16.msra.mxu0 0
        %2109 = vmatprep.subr.bf16.mxu0 0
        %2110 = vmatpush1.bf16.msra.mxu0 0
        %2111 = vmatprep.subr.bf16.mxu0 0
        %2112 = vmatpush1.bf16.msra.mxu0 0
        %2113 = vmatprep.subr.bf16.mxu0 0
        %2114 = vmatpush1.bf16.msra.mxu0 0
        %2115 = vmatprep.subr.bf16.mxu0 0
        %2116 = vmatpush1.bf16.msra.mxu0 0
        %2117 = vmatprep.subr.bf16.mxu0 0
        %2118 = vmatpush1.bf16.msra.mxu0 0
        %2119 = vmatprep.subr.bf16.mxu0 0
        %2120 = vmatpush1.bf16.msra.mxu0 0
        %2121 = vmatprep.subr.bf16.mxu0 0
        %2122 = vmatpush1.bf16.msra.mxu0 0
        %2123 = vmatprep.subr.bf16.mxu0 0
        %2124 = vmatpush1.bf16.msra.mxu0 0
        %2125 = vmatprep.subr.bf16.mxu0 0
        %2126 = vmatpush1.bf16.msra.mxu0 0
        %2127 = vmatprep.subr.bf16.mxu0 0
        %2128 = vmatpush1.bf16.msra.mxu0 0
        %2129 = vmatprep.mubr.bf16.mxu0 0
        %2130 = vmatmul.mubr.bf16.gmra.mrb[0].mxu0 %v2086
        %v2131 = vpop.f32.mrb[0].mxu0
        %v2132 = vadd.f32 0.0, %v2131
        %v2133 = vpop.f32.mrb[0].mxu0
        %v2134 = vadd.f32 0.0, %v2133
        %v2135 = vpop.f32.mrb[0].mxu0
        %v2136 = vpop.f32.mrb[0].mxu0
        %2137 = vdwg.mxu0
        %2138 = vmatprep.subr.bf16.mxu0 0
        %2139 = vmatpush1.bf16.msra.mxu0 %v2095
        %2140 = vmatprep.subr.bf16.mxu0 0
        %2141 = vmatpush1.bf16.msra.mxu0 0
        %2142 = vmatprep.subr.bf16.mxu0 0
        %2143 = vmatpush1.bf16.msra.mxu0 0
        %2144 = vmatprep.subr.bf16.mxu0 0
        %2145 = vmatpush1.bf16.msra.mxu0 0
        %2146 = vmatprep.subr.bf16.mxu0 0
        %2147 = vmatpush1.bf16.msra.mxu0 0
        %2148 = vmatprep.subr.bf16.mxu0 0
        %2149 = vmatpush1.bf16.msra.mxu0 0
        %2150 = vmatprep.subr.bf16.mxu0 0
        %2151 = vmatpush1.bf16.msra.mxu0 0
        %2152 = vmatprep.subr.bf16.mxu0 0
        %2153 = vmatpush1.bf16.msra.mxu0 0
        %2154 = vmatprep.subr.bf16.mxu0 0
        %2155 = vmatpush1.bf16.msra.mxu0 0
        %2156 = vmatprep.subr.bf16.mxu0 0
        %2157 = vmatpush1.bf16.msra.mxu0 0
        %2158 = vmatprep.subr.bf16.mxu0 0
        %2159 = vmatpush1.bf16.msra.mxu0 0
        %2160 = vmatprep.subr.bf16.mxu0 0
        %2161 = vmatpush1.bf16.msra.mxu0 0
        %2162 = vmatprep.subr.bf16.mxu0 0
        %2163 = vmatpush1.bf16.msra.mxu0 0
        %2164 = vmatprep.subr.bf16.mxu0 0
        %2165 = vmatpush1.bf16.msra.mxu0 0
        %2166 = vmatprep.subr.bf16.mxu0 0
        %2167 = vmatpush1.bf16.msra.mxu0 0
        %2168 = vmatprep.subr.bf16.mxu0 0
        %2169 = vmatpush1.bf16.msra.mxu0 0
        %2170 = vmatprep.mubr.bf16.mxu0 0
        %2171 = vmatmul.mubr.bf16.gmra.mrb[0].mxu0 %v2086
        %v2172 = vpop.f32.mrb[0].mxu0
        %v2173 = vadd.f32 0.0, %v2172
        %v2174 = vpop.f32.mrb[0].mxu0
        %v2175 = vpop.f32.mrb[0].mxu0
        %v2176 = vpop.f32.mrb[0].mxu0
        %2177 = vdwg.mxu0
        %v2178 = vadd.f32 %v2071, %v2132
        %v2179 = vadd.f32 %v2072, %v2134
        %v2180 = vadd.f32 %v2073, %v2173
        %v2181 = vld [vmem:[%s3] sm:$0xf]
        %v2182 = vld [vmem:[#allocation3] sm:$0xf]
        %s2183 = scalar_lea.vmem %s3, 4
        %v2184 = vld [vmem:[%s2183] sm:$0xf]
        %v2186 = vunpack.c.l.b16 %v2182
        %v2187 = vpack.c.b16 %v2186, %v2186
        %2188 = vrot.lane.b32.xlu0 %v2187, 127
        %v2189 = vpop.permute.xlu0 %2188
        %v2191 = vsel %vm1244, %v2184, 0
        %v2194 = vsel %vm1248, %v2189, 0
        %2196 = vmatprep.subr.bf16.mxu0 0
        %2197 = vmatpush1.bf16.msra.mxu0 %v2194
        %2198 = vmatprep.subr.bf16.mxu0 0
        %2199 = vmatpush1.bf16.msra.mxu0 0
        %2200 = vmatprep.subr.bf16.mxu0 0
        %2201 = vmatpush1.bf16.msra.mxu0 0
        %2202 = vmatprep.subr.bf16.mxu0 0
        %2203 = vmatpush1.bf16.msra.mxu0 0
        %2204 = vmatprep.subr.bf16.mxu0 0
        %2205 = vmatpush1.bf16.msra.mxu0 0
        %2206 = vmatprep.subr.bf16.mxu0 0
        %2207 = vmatpush1.bf16.msra.mxu0 0
        %2208 = vmatprep.subr.bf16.mxu0 0
        %2209 = vmatpush1.bf16.msra.mxu0 0
        %2210 = vmatprep.subr.bf16.mxu0 0
        %2211 = vmatpush1.bf16.msra.mxu0 0
        %2212 = vmatprep.subr.bf16.mxu0 0
        %2213 = vmatpush1.bf16.msra.mxu0 0
        %2214 = vmatprep.subr.bf16.mxu0 0
        %2215 = vmatpush1.bf16.msra.mxu0 0
        %2216 = vmatprep.subr.bf16.mxu0 0
        %2217 = vmatpush1.bf16.msra.mxu0 0
        %2218 = vmatprep.subr.bf16.mxu0 0
        %2219 = vmatpush1.bf16.msra.mxu0 0
        %2220 = vmatprep.subr.bf16.mxu0 0
        %2221 = vmatpush1.bf16.msra.mxu0 0
        %2222 = vmatprep.subr.bf16.mxu0 0
        %2223 = vmatpush1.bf16.msra.mxu0 0
        %2224 = vmatprep.subr.bf16.mxu0 0
        %2225 = vmatpush1.bf16.msra.mxu0 0
        %2226 = vmatprep.subr.bf16.mxu0 0
        %2227 = vmatpush1.bf16.msra.mxu0 0
        %2228 = vmatprep.mubr.bf16.mxu0 0
        %2229 = vmatmul.mubr.bf16.gmra.mrb[0].mxu0 %v2191
        %v2230 = vpop.f32.mrb[0].mxu0
        %v2231 = vadd.f32 0.0, %v2230
        %v2232 = vpop.f32.mrb[0].mxu0
        %v2233 = vpop.f32.mrb[0].mxu0
        %v2234 = vpop.f32.mrb[0].mxu0
        %2235 = vdwg.mxu0
        %v2237 = vsel %vm1244, %v2181, 0
        %v2240 = vsel %vm1248, %v2182, 0
        %2242 = vmatprep.subr.bf16.mxu0 0
        %2243 = vmatpush1.bf16.msra.mxu0 %v2240
        %2244 = vmatprep.subr.bf16.mxu0 0
        %2245 = vmatpush1.bf16.msra.mxu0 0
        %2246 = vmatprep.subr.bf16.mxu0 0
        %2247 = vmatpush1.bf16.msra.mxu0 0
        %2248 = vmatprep.subr.bf16.mxu0 0
        %2249 = vmatpush1.bf16.msra.mxu0 0
        %2250 = vmatprep.subr.bf16.mxu0 0
        %2251 = vmatpush1.bf16.msra.mxu0 0
        %2252 = vmatprep.subr.bf16.mxu0 0
        %2253 = vmatpush1.bf16.msra.mxu0 0
        %2254 = vmatprep.subr.bf16.mxu0 0
        %2255 = vmatpush1.bf16.msra.mxu0 0
        %2256 = vmatprep.subr.bf16.mxu0 0
        %2257 = vmatpush1.bf16.msra.mxu0 0
        %2258 = vmatprep.subr.bf16.mxu0 0
        %2259 = vmatpush1.bf16.msra.mxu0 0
        %2260 = vmatprep.subr.bf16.mxu0 0
        %2261 = vmatpush1.bf16.msra.mxu0 0
        %2262 = vmatprep.subr.bf16.mxu0 0
        %2263 = vmatpush1.bf16.msra.mxu0 0
        %2264 = vmatprep.subr.bf16.mxu0 0
        %2265 = vmatpush1.bf16.msra.mxu0 0
        %2266 = vmatprep.subr.bf16.mxu0 0
        %2267 = vmatpush1.bf16.msra.mxu0 0
        %2268 = vmatprep.subr.bf16.mxu0 0
        %2269 = vmatpush1.bf16.msra.mxu0 0
        %2270 = vmatprep.subr.bf16.mxu0 0
        %2271 = vmatpush1.bf16.msra.mxu0 0
        %2272 = vmatprep.subr.bf16.mxu0 0
        %2273 = vmatpush1.bf16.msra.mxu0 0
        %2274 = vmatprep.mubr.bf16.mxu0 0
        %2275 = vmatmul.mubr.bf16.gmra.mrb[0].mxu0 %v2237
        %v2276 = vpop.f32.mrb[0].mxu0
        %v2277 = vadd.f32 %v2231, %v2276
        %v2278 = vpop.f32.mrb[0].mxu0
        %v2279 = vpop.f32.mrb[0].mxu0
        %v2280 = vpop.f32.mrb[0].mxu0
        %2281 = vdwg.mxu0
        %s2282 = scalar_lea.vmem %s3, 8
        %v2283 = vld [vmem:[%s2282] sm:$0xf]
        %2284 = vrot.lane.b32.xlu0 %v2187, 126
        %v2285 = vpop.permute.xlu0 %2284
        %v2287 = vsel %vm1244, %v2283, 0
        %v2290 = vsel %vm1248, %v2285, 0
        %2292 = vmatprep.subr.bf16.mxu0 0
        %2293 = vmatpush1.bf16.msra.mxu0 %v2290
        %2294 = vmatprep.subr.bf16.mxu0 0
        %2295 = vmatpush1.bf16.msra.mxu0 0
        %2296 = vmatprep.subr.bf16.mxu0 0
        %2297 = vmatpush1.bf16.msra.mxu0 0
        %2298 = vmatprep.subr.bf16.mxu0 0
        %2299 = vmatpush1.bf16.msra.mxu0 0
        %2300 = vmatprep.subr.bf16.mxu0 0
        %2301 = vmatpush1.bf16.msra.mxu0 0
        %2302 = vmatprep.subr.bf16.mxu0 0
        %2303 = vmatpush1.bf16.msra.mxu0 0
        %2304 = vmatprep.subr.bf16.mxu0 0
        %2305 = vmatpush1.bf16.msra.mxu0 0
        %2306 = vmatprep.subr.bf16.mxu0 0
        %2307 = vmatpush1.bf16.msra.mxu0 0
        %2308 = vmatprep.subr.bf16.mxu0 0
        %2309 = vmatpush1.bf16.msra.mxu0 0
        %2310 = vmatprep.subr.bf16.mxu0 0
        %2311 = vmatpush1.bf16.msra.mxu0 0
        %2312 = vmatprep.subr.bf16.mxu0 0
        %2313 = vmatpush1.bf16.msra.mxu0 0
        %2314 = vmatprep.subr.bf16.mxu0 0
        %2315 = vmatpush1.bf16.msra.mxu0 0
        %2316 = vmatprep.subr.bf16.mxu0 0
        %2317 = vmatpush1.bf16.msra.mxu0 0
        %2318 = vmatprep.subr.bf16.mxu0 0
        %2319 = vmatpush1.bf16.msra.mxu0 0
        %2320 = vmatprep.subr.bf16.mxu0 0
        %2321 = vmatpush1.bf16.msra.mxu0 0
        %2322 = vmatprep.subr.bf16.mxu0 0
        %2323 = vmatpush1.bf16.msra.mxu0 0
        %2324 = vmatprep.mubr.bf16.mxu0 0
        %2325 = vmatmul.mubr.bf16.gmra.mrb[0].mxu0 %v2287
        %v2326 = vpop.f32.mrb[0].mxu0
        %v2327 = vadd.f32 0.0, %v2326
        %v2328 = vpop.f32.mrb[0].mxu0
        %v2329 = vpop.f32.mrb[0].mxu0
        %v2330 = vpop.f32.mrb[0].mxu0
        %2331 = vdwg.mxu0
        %v2332 = vadd.f32 %v2277, %v2327
        %s2333 = scalar_lea.vmem %s3, 12
        %v2334 = vld [vmem:[%s2333] sm:$0xf]
        %2335 = vrot.lane.b32.xlu0 %v2187, 118
        %v2336 = vpop.permute.xlu0 %2335
        %v2338 = vsel %vm1244, %v2334, 0
        %v2341 = vsel %vm1248, %v2336, 0
        %2343 = vmatprep.subr.bf16.mxu0 0
        %2344 = vmatpush1.bf16.msra.mxu0 %v2341
        %2345 = vmatprep.subr.bf16.mxu0 0
        %2346 = vmatpush1.bf16.msra.mxu0 0
        %2347 = vmatprep.subr.bf16.mxu0 0
        %2348 = vmatpush1.bf16.msra.mxu0 0
        %2349 = vmatprep.subr.bf16.mxu0 0
        %2350 = vmatpush1.bf16.msra.mxu0 0
        %2351 = vmatprep.subr.bf16.mxu0 0
        %2352 = vmatpush1.bf16.msra.mxu0 0
        %2353 = vmatprep.subr.bf16.mxu0 0
        %2354 = vmatpush1.bf16.msra.mxu0 0
        %2355 = vmatprep.subr.bf16.mxu0 0
        %2356 = vmatpush1.bf16.msra.mxu0 0
        %2357 = vmatprep.subr.bf16.mxu0 0
        %2358 = vmatpush1.bf16.msra.mxu0 0
        %2359 = vmatprep.subr.bf16.mxu0 0
        %2360 = vmatpush1.bf16.msra.mxu0 0
        %2361 = vmatprep.subr.bf16.mxu0 0
        %2362 = vmatpush1.bf16.msra.mxu0 0
        %2363 = vmatprep.subr.bf16.mxu0 0
        %2364 = vmatpush1.bf16.msra.mxu0 0
        %2365 = vmatprep.subr.bf16.mxu0 0
        %2366 = vmatpush1.bf16.msra.mxu0 0
        %2367 = vmatprep.subr.bf16.mxu0 0
        %2368 = vmatpush1.bf16.msra.mxu0 0
        %2369 = vmatprep.subr.bf16.mxu0 0
        %2370 = vmatpush1.bf16.msra.mxu0 0
        %2371 = vmatprep.subr.bf16.mxu0 0
        %2372 = vmatpush1.bf16.msra.mxu0 0
        %2373 = vmatprep.subr.bf16.mxu0 0
        %2374 = vmatpush1.bf16.msra.mxu0 0
        %2375 = vmatprep.mubr.bf16.mxu0 0
        %2376 = vmatmul.mubr.bf16.gmra.mrb[0].mxu0 %v2338
        %v2377 = vpop.f32.mrb[0].mxu0
        %v2378 = vadd.f32 0.0, %v2377
        %v2379 = vpop.f32.mrb[0].mxu0
        %v2380 = vpop.f32.mrb[0].mxu0
        %v2381 = vpop.f32.mrb[0].mxu0
        %2382 = vdwg.mxu0
        %v2383 = vadd.f32 %v2332, %v2378
        %s2384 = scalar_lea.vmem %s3, 16
        %v2385 = vld [vmem:[%s2384] sm:$0xf]
        %2386 = vrot.lane.b32.xlu0 %v2187, 117
        %v2387 = vpop.permute.xlu0 %2386
        %v2389 = vsel %vm1244, %v2385, 0
        %v2392 = vsel %vm1248, %v2387, 0
        %2394 = vmatprep.subr.bf16.mxu0 0
        %2395 = vmatpush1.bf16.msra.mxu0 %v2392
        %2396 = vmatprep.subr.bf16.mxu0 0
        %2397 = vmatpush1.bf16.msra.mxu0 0
        %2398 = vmatprep.subr.bf16.mxu0 0
        %2399 = vmatpush1.bf16.msra.mxu0 0
        %2400 = vmatprep.subr.bf16.mxu0 0
        %2401 = vmatpush1.bf16.msra.mxu0 0
        %2402 = vmatprep.subr.bf16.mxu0 0
        %2403 = vmatpush1.bf16.msra.mxu0 0
        %2404 = vmatprep.subr.bf16.mxu0 0
        %2405 = vmatpush1.bf16.msra.mxu0 0
        %2406 = vmatprep.subr.bf16.mxu0 0
        %2407 = vmatpush1.bf16.msra.mxu0 0
        %2408 = vmatprep.subr.bf16.mxu0 0
        %2409 = vmatpush1.bf16.msra.mxu0 0
        %2410 = vmatprep.subr.bf16.mxu0 0
        %2411 = vmatpush1.bf16.msra.mxu0 0
        %2412 = vmatprep.subr.bf16.mxu0 0
        %2413 = vmatpush1.bf16.msra.mxu0 0
        %2414 = vmatprep.subr.bf16.mxu0 0
        %2415 = vmatpush1.bf16.msra.mxu0 0
        %2416 = vmatprep.subr.bf16.mxu0 0
        %2417 = vmatpush1.bf16.msra.mxu0 0
        %2418 = vmatprep.subr.bf16.mxu0 0
        %2419 = vmatpush1.bf16.msra.mxu0 0
        %2420 = vmatprep.subr.bf16.mxu0 0
        %2421 = vmatpush1.bf16.msra.mxu0 0
        %2422 = vmatprep.subr.bf16.mxu0 0
        %2423 = vmatpush1.bf16.msra.mxu0 0
        %2424 = vmatprep.subr.bf16.mxu0 0
        %2425 = vmatpush1.bf16.msra.mxu0 0
        %2426 = vmatprep.mubr.bf16.mxu0 0
        %2427 = vmatmul.mubr.bf16.gmra.mrb[0].mxu0 %v2389
        %v2428 = vpop.f32.mrb[0].mxu0
        %v2429 = vadd.f32 0.0, %v2428
        %v2430 = vpop.f32.mrb[0].mxu0
        %v2431 = vpop.f32.mrb[0].mxu0
        %v2432 = vpop.f32.mrb[0].mxu0
        %2433 = vdwg.mxu0
        %v2434 = vadd.f32 %v2383, %v2429
        %s2435 = scalar_lea.vmem %s3, 20
        %v2436 = vld [vmem:[%s2435] sm:$0xf]
        %2437 = vrot.lane.b32.xlu0 %v2187, 116
        %v2438 = vpop.permute.xlu0 %2437
        %v2440 = vsel %vm1244, %v2436, 0
        %v2443 = vsel %vm1248, %v2438, 0
        %2445 = vmatprep.subr.bf16.mxu0 0
        %2446 = vmatpush1.bf16.msra.mxu0 %v2443
        %2447 = vmatprep.subr.bf16.mxu0 0
        %2448 = vmatpush1.bf16.msra.mxu0 0
        %2449 = vmatprep.subr.bf16.mxu0 0
        %2450 = vmatpush1.bf16.msra.mxu0 0
        %2451 = vmatprep.subr.bf16.mxu0 0
        %2452 = vmatpush1.bf16.msra.mxu0 0
        %2453 = vmatprep.subr.bf16.mxu0 0
        %2454 = vmatpush1.bf16.msra.mxu0 0
        %2455 = vmatprep.subr.bf16.mxu0 0
        %2456 = vmatpush1.bf16.msra.mxu0 0
        %2457 = vmatprep.subr.bf16.mxu0 0
        %2458 = vmatpush1.bf16.msra.mxu0 0
        %2459 = vmatprep.subr.bf16.mxu0 0
        %2460 = vmatpush1.bf16.msra.mxu0 0
        %2461 = vmatprep.subr.bf16.mxu0 0
        %2462 = vmatpush1.bf16.msra.mxu0 0
        %2463 = vmatprep.subr.bf16.mxu0 0
        %2464 = vmatpush1.bf16.msra.mxu0 0
        %2465 = vmatprep.subr.bf16.mxu0 0
        %2466 = vmatpush1.bf16.msra.mxu0 0
        %2467 = vmatprep.subr.bf16.mxu0 0
        %2468 = vmatpush1.bf16.msra.mxu0 0
        %2469 = vmatprep.subr.bf16.mxu0 0
        %2470 = vmatpush1.bf16.msra.mxu0 0
        %2471 = vmatprep.subr.bf16.mxu0 0
        %2472 = vmatpush1.bf16.msra.mxu0 0
        %2473 = vmatprep.subr.bf16.mxu0 0
        %2474 = vmatpush1.bf16.msra.mxu0 0
        %2475 = vmatprep.subr.bf16.mxu0 0
        %2476 = vmatpush1.bf16.msra.mxu0 0
        %2477 = vmatprep.mubr.bf16.mxu0 0
        %2478 = vmatmul.mubr.bf16.gmra.mrb[0].mxu0 %v2440
        %v2479 = vpop.f32.mrb[0].mxu0
        %v2480 = vadd.f32 0.0, %v2479
        %v2481 = vpop.f32.mrb[0].mxu0
        %v2482 = vpop.f32.mrb[0].mxu0
        %v2483 = vpop.f32.mrb[0].mxu0
        %2484 = vdwg.mxu0
        %v2485 = vadd.f32 %v2434, %v2480
        %s2486 = scalar_lea.vmem %s3, 24
        %v2487 = vld [vmem:[%s2486] sm:$0xf]
        %2488 = vrot.lane.b32.xlu0 %v2187, 108
        %v2489 = vpop.permute.xlu0 %2488
        %v2491 = vsel %vm1244, %v2487, 0
        %v2494 = vsel %vm1248, %v2489, 0
        %2496 = vmatprep.subr.bf16.mxu0 0
        %2497 = vmatpush1.bf16.msra.mxu0 %v2494
        %2498 = vmatprep.subr.bf16.mxu0 0
        %2499 = vmatpush1.bf16.msra.mxu0 0
        %2500 = vmatprep.subr.bf16.mxu0 0
        %2501 = vmatpush1.bf16.msra.mxu0 0
        %2502 = vmatprep.subr.bf16.mxu0 0
        %2503 = vmatpush1.bf16.msra.mxu0 0
        %2504 = vmatprep.subr.bf16.mxu0 0
        %2505 = vmatpush1.bf16.msra.mxu0 0
        %2506 = vmatprep.subr.bf16.mxu0 0
        %2507 = vmatpush1.bf16.msra.mxu0 0
        %2508 = vmatprep.subr.bf16.mxu0 0
        %2509 = vmatpush1.bf16.msra.mxu0 0
        %2510 = vmatprep.subr.bf16.mxu0 0
        %2511 = vmatpush1.bf16.msra.mxu0 0
        %2512 = vmatprep.subr.bf16.mxu0 0
        %2513 = vmatpush1.bf16.msra.mxu0 0
        %2514 = vmatprep.subr.bf16.mxu0 0
        %2515 = vmatpush1.bf16.msra.mxu0 0
        %2516 = vmatprep.subr.bf16.mxu0 0
        %2517 = vmatpush1.bf16.msra.mxu0 0
        %2518 = vmatprep.subr.bf16.mxu0 0
        %2519 = vmatpush1.bf16.msra.mxu0 0
        %2520 = vmatprep.subr.bf16.mxu0 0
        %2521 = vmatpush1.bf16.msra.mxu0 0
        %2522 = vmatprep.subr.bf16.mxu0 0
        %2523 = vmatpush1.bf16.msra.mxu0 0
        %2524 = vmatprep.subr.bf16.mxu0 0
        %2525 = vmatpush1.bf16.msra.mxu0 0
        %2526 = vmatprep.subr.bf16.mxu0 0
        %2527 = vmatpush1.bf16.msra.mxu0 0
        %2528 = vmatprep.mubr.bf16.mxu0 0
        %2529 = vmatmul.mubr.bf16.gmra.mrb[0].mxu0 %v2491
        %v2530 = vpop.f32.mrb[0].mxu0
        %v2531 = vadd.f32 0.0, %v2530
        %v2532 = vpop.f32.mrb[0].mxu0
        %v2533 = vpop.f32.mrb[0].mxu0
        %v2534 = vpop.f32.mrb[0].mxu0
        %2535 = vdwg.mxu0
        %v2536 = vadd.f32 %v2485, %v2531
        %s2537 = scalar_lea.vmem %s3, 28
        %v2538 = vld [vmem:[%s2537] sm:$0xf]
        %2539 = vrot.lane.b32.xlu0 %v2187, 107
        %v2540 = vpop.permute.xlu0 %2539
        %v2542 = vsel %vm1244, %v2538, 0
        %v2545 = vsel %vm1248, %v2540, 0
        %2547 = vmatprep.subr.bf16.mxu0 0
        %2548 = vmatpush1.bf16.msra.mxu0 %v2545
        %2549 = vmatprep.subr.bf16.mxu0 0
        %2550 = vmatpush1.bf16.msra.mxu0 0
        %2551 = vmatprep.subr.bf16.mxu0 0
        %2552 = vmatpush1.bf16.msra.mxu0 0
        %2553 = vmatprep.subr.bf16.mxu0 0
        %2554 = vmatpush1.bf16.msra.mxu0 0
        %2555 = vmatprep.subr.bf16.mxu0 0
        %2556 = vmatpush1.bf16.msra.mxu0 0
        %2557 = vmatprep.subr.bf16.mxu0 0
        %2558 = vmatpush1.bf16.msra.mxu0 0
        %2559 = vmatprep.subr.bf16.mxu0 0
        %2560 = vmatpush1.bf16.msra.mxu0 0
        %2561 = vmatprep.subr.bf16.mxu0 0
        %2562 = vmatpush1.bf16.msra.mxu0 0
        %2563 = vmatprep.subr.bf16.mxu0 0
        %2564 = vmatpush1.bf16.msra.mxu0 0
        %2565 = vmatprep.subr.bf16.mxu0 0
        %2566 = vmatpush1.bf16.msra.mxu0 0
        %2567 = vmatprep.subr.bf16.mxu0 0
        %2568 = vmatpush1.bf16.msra.mxu0 0
        %2569 = vmatprep.subr.bf16.mxu0 0
        %2570 = vmatpush1.bf16.msra.mxu0 0
        %2571 = vmatprep.subr.bf16.mxu0 0
        %2572 = vmatpush1.bf16.msra.mxu0 0
        %2573 = vmatprep.subr.bf16.mxu0 0
        %2574 = vmatpush1.bf16.msra.mxu0 0
        %2575 = vmatprep.subr.bf16.mxu0 0
        %2576 = vmatpush1.bf16.msra.mxu0 0
        %2577 = vmatprep.subr.bf16.mxu0 0
        %2578 = vmatpush1.bf16.msra.mxu0 0
        %2579 = vmatprep.mubr.bf16.mxu0 0
        %2580 = vmatmul.mubr.bf16.gmra.mrb[0].mxu0 %v2542
        %v2581 = vpop.f32.mrb[0].mxu0
        %v2582 = vadd.f32 0.0, %v2581
        %v2583 = vpop.f32.mrb[0].mxu0
        %v2584 = vpop.f32.mrb[0].mxu0
        %v2585 = vpop.f32.mrb[0].mxu0
        %2586 = vdwg.mxu0
        %v2587 = vadd.f32 %v2536, %v2582
        %s2588 = scalar_lea.vmem %s3, 32
        %v2589 = vld [vmem:[%s2588] sm:$0xf]
        %2590 = vrot.lane.b32.xlu0 %v2187, 106
        %v2591 = vpop.permute.xlu0 %2590
        %v2593 = vsel %vm1244, %v2589, 0
        %v2596 = vsel %vm1248, %v2591, 0
        %2598 = vmatprep.subr.bf16.mxu0 0
        %2599 = vmatpush1.bf16.msra.mxu0 %v2596
        %2600 = vmatprep.subr.bf16.mxu0 0
        %2601 = vmatpush1.bf16.msra.mxu0 0
        %2602 = vmatprep.subr.bf16.mxu0 0
        %2603 = vmatpush1.bf16.msra.mxu0 0
        %2604 = vmatprep.subr.bf16.mxu0 0
        %2605 = vmatpush1.bf16.msra.mxu0 0
        %2606 = vmatprep.subr.bf16.mxu0 0
        %2607 = vmatpush1.bf16.msra.mxu0 0
        %2608 = vmatprep.subr.bf16.mxu0 0
        %2609 = vmatpush1.bf16.msra.mxu0 0
        %2610 = vmatprep.subr.bf16.mxu0 0
        %2611 = vmatpush1.bf16.msra.mxu0 0
        %2612 = vmatprep.subr.bf16.mxu0 0
        %2613 = vmatpush1.bf16.msra.mxu0 0
        %2614 = vmatprep.subr.bf16.mxu0 0
        %2615 = vmatpush1.bf16.msra.mxu0 0
        %2616 = vmatprep.subr.bf16.mxu0 0
        %2617 = vmatpush1.bf16.msra.mxu0 0
        %2618 = vmatprep.subr.bf16.mxu0 0
        %2619 = vmatpush1.bf16.msra.mxu0 0
        %2620 = vmatprep.subr.bf16.mxu0 0
        %2621 = vmatpush1.bf16.msra.mxu0 0
        %2622 = vmatprep.subr.bf16.mxu0 0
        %2623 = vmatpush1.bf16.msra.mxu0 0
        %2624 = vmatprep.subr.bf16.mxu0 0
        %2625 = vmatpush1.bf16.msra.mxu0 0
        %2626 = vmatprep.subr.bf16.mxu0 0
        %2627 = vmatpush1.bf16.msra.mxu0 0
        %2628 = vmatprep.subr.bf16.mxu0 0
        %2629 = vmatpush1.bf16.msra.mxu0 0
        %2630 = vmatprep.mubr.bf16.mxu0 0
        %2631 = vmatmul.mubr.bf16.gmra.mrb[0].mxu0 %v2593
        %v2632 = vpop.f32.mrb[0].mxu0
        %v2633 = vadd.f32 0.0, %v2632
        %v2634 = vpop.f32.mrb[0].mxu0
        %v2635 = vpop.f32.mrb[0].mxu0
        %v2636 = vpop.f32.mrb[0].mxu0
        %2637 = vdwg.mxu0
        %v2638 = vadd.f32 %v2587, %v2633
        %v2639 = vld [vmem:[%s4] sm:$0xf]
        %s2640 = scalar_lea.vmem %s4, 4
        %v2641 = vld [vmem:[%s2640] sm:$0xf]
        %v2643 = vsel %vm1244, %v2641, 0
        %2645 = vmatprep.subr.bf16.mxu0 0
        %2646 = vmatpush1.bf16.msra.mxu0 %v2194
        %2647 = vmatprep.subr.bf16.mxu0 0
        %2648 = vmatpush1.bf16.msra.mxu0 0
        %2649 = vmatprep.subr.bf16.mxu0 0
        %2650 = vmatpush1.bf16.msra.mxu0 0
        %2651 = vmatprep.subr.bf16.mxu0 0
        %2652 = vmatpush1.bf16.msra.mxu0 0
        %2653 = vmatprep.subr.bf16.mxu0 0
        %2654 = vmatpush1.bf16.msra.mxu0 0
        %2655 = vmatprep.subr.bf16.mxu0 0
        %2656 = vmatpush1.bf16.msra.mxu0 0
        %2657 = vmatprep.subr.bf16.mxu0 0
        %2658 = vmatpush1.bf16.msra.mxu0 0
        %2659 = vmatprep.subr.bf16.mxu0 0
        %2660 = vmatpush1.bf16.msra.mxu0 0
        %2661 = vmatprep.subr.bf16.mxu0 0
        %2662 = vmatpush1.bf16.msra.mxu0 0
        %2663 = vmatprep.subr.bf16.mxu0 0
        %2664 = vmatpush1.bf16.msra.mxu0 0
        %2665 = vmatprep.subr.bf16.mxu0 0
        %2666 = vmatpush1.bf16.msra.mxu0 0
        %2667 = vmatprep.subr.bf16.mxu0 0
        %2668 = vmatpush1.bf16.msra.mxu0 0
        %2669 = vmatprep.subr.bf16.mxu0 0
        %2670 = vmatpush1.bf16.msra.mxu0 0
        %2671 = vmatprep.subr.bf16.mxu0 0
        %2672 = vmatpush1.bf16.msra.mxu0 0
        %2673 = vmatprep.subr.bf16.mxu0 0
        %2674 = vmatpush1.bf16.msra.mxu0 0
        %2675 = vmatprep.subr.bf16.mxu0 0
        %2676 = vmatpush1.bf16.msra.mxu0 0
        %2677 = vmatprep.mubr.bf16.mxu0 0
        %2678 = vmatmul.mubr.bf16.gmra.mrb[0].mxu0 %v2643
        %v2679 = vpop.f32.mrb[0].mxu0
        %v2680 = vadd.f32 0.0, %v2679
        %v2681 = vpop.f32.mrb[0].mxu0
        %v2682 = vpop.f32.mrb[0].mxu0
        %v2683 = vpop.f32.mrb[0].mxu0
        %2684 = vdwg.mxu0
        %v2686 = vsel %vm1244, %v2639, 0
        %2688 = vmatprep.subr.bf16.mxu0 0
        %2689 = vmatpush1.bf16.msra.mxu0 %v2240
        %2690 = vmatprep.subr.bf16.mxu0 0
        %2691 = vmatpush1.bf16.msra.mxu0 0
        %2692 = vmatprep.subr.bf16.mxu0 0
        %2693 = vmatpush1.bf16.msra.mxu0 0
        %2694 = vmatprep.subr.bf16.mxu0 0
        %2695 = vmatpush1.bf16.msra.mxu0 0
        %2696 = vmatprep.subr.bf16.mxu0 0
        %2697 = vmatpush1.bf16.msra.mxu0 0
        %2698 = vmatprep.subr.bf16.mxu0 0
        %2699 = vmatpush1.bf16.msra.mxu0 0
        %2700 = vmatprep.subr.bf16.mxu0 0
        %2701 = vmatpush1.bf16.msra.mxu0 0
        %2702 = vmatprep.subr.bf16.mxu0 0
        %2703 = vmatpush1.bf16.msra.mxu0 0
        %2704 = vmatprep.subr.bf16.mxu0 0
        %2705 = vmatpush1.bf16.msra.mxu0 0
        %2706 = vmatprep.subr.bf16.mxu0 0
        %2707 = vmatpush1.bf16.msra.mxu0 0
        %2708 = vmatprep.subr.bf16.mxu0 0
        %2709 = vmatpush1.bf16.msra.mxu0 0
        %2710 = vmatprep.subr.bf16.mxu0 0
        %2711 = vmatpush1.bf16.msra.mxu0 0
        %2712 = vmatprep.subr.bf16.mxu0 0
        %2713 = vmatpush1.bf16.msra.mxu0 0
        %2714 = vmatprep.subr.bf16.mxu0 0
        %2715 = vmatpush1.bf16.msra.mxu0 0
        %2716 = vmatprep.subr.bf16.mxu0 0
        %2717 = vmatpush1.bf16.msra.mxu0 0
        %2718 = vmatprep.subr.bf16.mxu0 0
        %2719 = vmatpush1.bf16.msra.mxu0 0
        %2720 = vmatprep.mubr.bf16.mxu0 0
        %2721 = vmatmul.mubr.bf16.gmra.mrb[0].mxu0 %v2686
        %v2722 = vpop.f32.mrb[0].mxu0
        %v2723 = vadd.f32 %v2680, %v2722
        %v2724 = vpop.f32.mrb[0].mxu0
        %v2725 = vpop.f32.mrb[0].mxu0
        %v2726 = vpop.f32.mrb[0].mxu0
        %2727 = vdwg.mxu0
        %s2728 = scalar_lea.vmem %s4, 8
        %v2729 = vld [vmem:[%s2728] sm:$0xf]
        %v2731 = vsel %vm1244, %v2729, 0
        %2733 = vmatprep.subr.bf16.mxu0 0
        %2734 = vmatpush1.bf16.msra.mxu0 %v2290
        %2735 = vmatprep.subr.bf16.mxu0 0
        %2736 = vmatpush1.bf16.msra.mxu0 0
        %2737 = vmatprep.subr.bf16.mxu0 0
        %2738 = vmatpush1.bf16.msra.mxu0 0
        %2739 = vmatprep.subr.bf16.mxu0 0
        %2740 = vmatpush1.bf16.msra.mxu0 0
        %2741 = vmatprep.subr.bf16.mxu0 0
        %2742 = vmatpush1.bf16.msra.mxu0 0
        %2743 = vmatprep.subr.bf16.mxu0 0
        %2744 = vmatpush1.bf16.msra.mxu0 0
        %2745 = vmatprep.subr.bf16.mxu0 0
        %2746 = vmatpush1.bf16.msra.mxu0 0
        %2747 = vmatprep.subr.bf16.mxu0 0
        %2748 = vmatpush1.bf16.msra.mxu0 0
        %2749 = vmatprep.subr.bf16.mxu0 0
        %2750 = vmatpush1.bf16.msra.mxu0 0
        %2751 = vmatprep.subr.bf16.mxu0 0
        %2752 = vmatpush1.bf16.msra.mxu0 0
        %2753 = vmatprep.subr.bf16.mxu0 0
        %2754 = vmatpush1.bf16.msra.mxu0 0
        %2755 = vmatprep.subr.bf16.mxu0 0
        %2756 = vmatpush1.bf16.msra.mxu0 0
        %2757 = vmatprep.subr.bf16.mxu0 0
        %2758 = vmatpush1.bf16.msra.mxu0 0
        %2759 = vmatprep.subr.bf16.mxu0 0
        %2760 = vmatpush1.bf16.msra.mxu0 0
        %2761 = vmatprep.subr.bf16.mxu0 0
        %2762 = vmatpush1.bf16.msra.mxu0 0
        %2763 = vmatprep.subr.bf16.mxu0 0
        %2764 = vmatpush1.bf16.msra.mxu0 0
        %2765 = vmatprep.mubr.bf16.mxu0 0
        %2766 = vmatmul.mubr.bf16.gmra.mrb[0].mxu0 %v2731
        %v2767 = vpop.f32.mrb[0].mxu0
        %v2768 = vadd.f32 0.0, %v2767
        %v2769 = vpop.f32.mrb[0].mxu0
        %v2770 = vpop.f32.mrb[0].mxu0
        %v2771 = vpop.f32.mrb[0].mxu0
        %2772 = vdwg.mxu0
        %v2773 = vadd.f32 %v2723, %v2768
        %s2774 = scalar_lea.vmem %s4, 12
        %v2775 = vld [vmem:[%s2774] sm:$0xf]
        %v2777 = vsel %vm1244, %v2775, 0
        %2779 = vmatprep.subr.bf16.mxu0 0
        %2780 = vmatpush1.bf16.msra.mxu0 %v2341
        %2781 = vmatprep.subr.bf16.mxu0 0
        %2782 = vmatpush1.bf16.msra.mxu0 0
        %2783 = vmatprep.subr.bf16.mxu0 0
        %2784 = vmatpush1.bf16.msra.mxu0 0
        %2785 = vmatprep.subr.bf16.mxu0 0
        %2786 = vmatpush1.bf16.msra.mxu0 0
        %2787 = vmatprep.subr.bf16.mxu0 0
        %2788 = vmatpush1.bf16.msra.mxu0 0
        %2789 = vmatprep.subr.bf16.mxu0 0
        %2790 = vmatpush1.bf16.msra.mxu0 0
        %2791 = vmatprep.subr.bf16.mxu0 0
        %2792 = vmatpush1.bf16.msra.mxu0 0
        %2793 = vmatprep.subr.bf16.mxu0 0
        %2794 = vmatpush1.bf16.msra.mxu0 0
        %2795 = vmatprep.subr.bf16.mxu0 0
        %2796 = vmatpush1.bf16.msra.mxu0 0
        %2797 = vmatprep.subr.bf16.mxu0 0
        %2798 = vmatpush1.bf16.msra.mxu0 0
        %2799 = vmatprep.subr.bf16.mxu0 0
        %2800 = vmatpush1.bf16.msra.mxu0 0
        %2801 = vmatprep.subr.bf16.mxu0 0
        %2802 = vmatpush1.bf16.msra.mxu0 0
        %2803 = vmatprep.subr.bf16.mxu0 0
        %2804 = vmatpush1.bf16.msra.mxu0 0
        %2805 = vmatprep.subr.bf16.mxu0 0
        %2806 = vmatpush1.bf16.msra.mxu0 0
        %2807 = vmatprep.subr.bf16.mxu0 0
        %2808 = vmatpush1.bf16.msra.mxu0 0
        %2809 = vmatprep.subr.bf16.mxu0 0
        %2810 = vmatpush1.bf16.msra.mxu0 0
        %2811 = vmatprep.mubr.bf16.mxu0 0
        %2812 = vmatmul.mubr.bf16.gmra.mrb[0].mxu0 %v2777
        %v2813 = vpop.f32.mrb[0].mxu0
        %v2814 = vadd.f32 0.0, %v2813
        %v2815 = vpop.f32.mrb[0].mxu0
        %v2816 = vpop.f32.mrb[0].mxu0
        %v2817 = vpop.f32.mrb[0].mxu0
        %2818 = vdwg.mxu0
        %v2819 = vadd.f32 %v2773, %v2814
        %s2820 = scalar_lea.vmem %s4, 16
        %v2821 = vld [vmem:[%s2820] sm:$0xf]
        %v2823 = vsel %vm1244, %v2821, 0
        %2825 = vmatprep.subr.bf16.mxu0 0
        %2826 = vmatpush1.bf16.msra.mxu0 %v2392
        %2827 = vmatprep.subr.bf16.mxu0 0
        %2828 = vmatpush1.bf16.msra.mxu0 0
        %2829 = vmatprep.subr.bf16.mxu0 0
        %2830 = vmatpush1.bf16.msra.mxu0 0
        %2831 = vmatprep.subr.bf16.mxu0 0
        %2832 = vmatpush1.bf16.msra.mxu0 0
        %2833 = vmatprep.subr.bf16.mxu0 0
        %2834 = vmatpush1.bf16.msra.mxu0 0
        %2835 = vmatprep.subr.bf16.mxu0 0
        %2836 = vmatpush1.bf16.msra.mxu0 0
        %2837 = vmatprep.subr.bf16.mxu0 0
        %2838 = vmatpush1.bf16.msra.mxu0 0
        %2839 = vmatprep.subr.bf16.mxu0 0
        %2840 = vmatpush1.bf16.msra.mxu0 0
        %2841 = vmatprep.subr.bf16.mxu0 0
        %2842 = vmatpush1.bf16.msra.mxu0 0
        %2843 = vmatprep.subr.bf16.mxu0 0
        %2844 = vmatpush1.bf16.msra.mxu0 0
        %2845 = vmatprep.subr.bf16.mxu0 0
        %2846 = vmatpush1.bf16.msra.mxu0 0
        %2847 = vmatprep.subr.bf16.mxu0 0
        %2848 = vmatpush1.bf16.msra.mxu0 0
        %2849 = vmatprep.subr.bf16.mxu0 0
        %2850 = vmatpush1.bf16.msra.mxu0 0
        %2851 = vmatprep.subr.bf16.mxu0 0
        %2852 = vmatpush1.bf16.msra.mxu0 0
        %2853 = vmatprep.subr.bf16.mxu0 0
        %2854 = vmatpush1.bf16.msra.mxu0 0
        %2855 = vmatprep.subr.bf16.mxu0 0
        %2856 = vmatpush1.bf16.msra.mxu0 0
        %2857 = vmatprep.mubr.bf16.mxu0 0
        %2858 = vmatmul.mubr.bf16.gmra.mrb[0].mxu0 %v2823
        %v2859 = vpop.f32.mrb[0].mxu0
        %v2860 = vadd.f32 0.0, %v2859
        %v2861 = vpop.f32.mrb[0].mxu0
        %v2862 = vpop.f32.mrb[0].mxu0
        %v2863 = vpop.f32.mrb[0].mxu0
        %2864 = vdwg.mxu0
        %v2865 = vadd.f32 %v2819, %v2860
        %s2866 = scalar_lea.vmem %s4, 20
        %v2867 = vld [vmem:[%s2866] sm:$0xf]
        %v2869 = vsel %vm1244, %v2867, 0
        %2871 = vmatprep.subr.bf16.mxu0 0
        %2872 = vmatpush1.bf16.msra.mxu0 %v2443
        %2873 = vmatprep.subr.bf16.mxu0 0
        %2874 = vmatpush1.bf16.msra.mxu0 0
        %2875 = vmatprep.subr.bf16.mxu0 0
        %2876 = vmatpush1.bf16.msra.mxu0 0
        %2877 = vmatprep.subr.bf16.mxu0 0
        %2878 = vmatpush1.bf16.msra.mxu0 0
        %2879 = vmatprep.subr.bf16.mxu0 0
        %2880 = vmatpush1.bf16.msra.mxu0 0
        %2881 = vmatprep.subr.bf16.mxu0 0
        %2882 = vmatpush1.bf16.msra.mxu0 0
        %2883 = vmatprep.subr.bf16.mxu0 0
        %2884 = vmatpush1.bf16.msra.mxu0 0
        %2885 = vmatprep.subr.bf16.mxu0 0
        %2886 = vmatpush1.bf16.msra.mxu0 0
        %2887 = vmatprep.subr.bf16.mxu0 0
        %2888 = vmatpush1.bf16.msra.mxu0 0
        %2889 = vmatprep.subr.bf16.mxu0 0
        %2890 = vmatpush1.bf16.msra.mxu0 0
        %2891 = vmatprep.subr.bf16.mxu0 0
        %2892 = vmatpush1.bf16.msra.mxu0 0
        %2893 = vmatprep.subr.bf16.mxu0 0
        %2894 = vmatpush1.bf16.msra.mxu0 0
        %2895 = vmatprep.subr.bf16.mxu0 0
        %2896 = vmatpush1.bf16.msra.mxu0 0
        %2897 = vmatprep.subr.bf16.mxu0 0
        %2898 = vmatpush1.bf16.msra.mxu0 0
        %2899 = vmatprep.subr.bf16.mxu0 0
        %2900 = vmatpush1.bf16.msra.mxu0 0
        %2901 = vmatprep.subr.bf16.mxu0 0
        %2902 = vmatpush1.bf16.msra.mxu0 0
        %2903 = vmatprep.mubr.bf16.mxu0 0
        %2904 = vmatmul.mubr.bf16.gmra.mrb[0].mxu0 %v2869
        %v2905 = vpop.f32.mrb[0].mxu0
        %v2906 = vadd.f32 0.0, %v2905
        %v2907 = vpop.f32.mrb[0].mxu0
        %v2908 = vpop.f32.mrb[0].mxu0
        %v2909 = vpop.f32.mrb[0].mxu0
        %2910 = vdwg.mxu0
        %v2911 = vadd.f32 %v2865, %v2906
        %s2912 = scalar_lea.vmem %s4, 24
        %v2913 = vld [vmem:[%s2912] sm:$0xf]
        %v2915 = vsel %vm1244, %v2913, 0
        %2917 = vmatprep.subr.bf16.mxu0 0
        %2918 = vmatpush1.bf16.msra.mxu0 %v2494
        %2919 = vmatprep.subr.bf16.mxu0 0
        %2920 = vmatpush1.bf16.msra.mxu0 0
        %2921 = vmatprep.subr.bf16.mxu0 0
        %2922 = vmatpush1.bf16.msra.mxu0 0
        %2923 = vmatprep.subr.bf16.mxu0 0
        %2924 = vmatpush1.bf16.msra.mxu0 0
        %2925 = vmatprep.subr.bf16.mxu0 0
        %2926 = vmatpush1.bf16.msra.mxu0 0
        %2927 = vmatprep.subr.bf16.mxu0 0
        %2928 = vmatpush1.bf16.msra.mxu0 0
        %2929 = vmatprep.subr.bf16.mxu0 0
        %2930 = vmatpush1.bf16.msra.mxu0 0
        %2931 = vmatprep.subr.bf16.mxu0 0
        %2932 = vmatpush1.bf16.msra.mxu0 0
        %2933 = vmatprep.subr.bf16.mxu0 0
        %2934 = vmatpush1.bf16.msra.mxu0 0
        %2935 = vmatprep.subr.bf16.mxu0 0
        %2936 = vmatpush1.bf16.msra.mxu0 0
        %2937 = vmatprep.subr.bf16.mxu0 0
        %2938 = vmatpush1.bf16.msra.mxu0 0
        %2939 = vmatprep.subr.bf16.mxu0 0
        %2940 = vmatpush1.bf16.msra.mxu0 0
        %2941 = vmatprep.subr.bf16.mxu0 0
        %2942 = vmatpush1.bf16.msra.mxu0 0
        %2943 = vmatprep.subr.bf16.mxu0 0
        %2944 = vmatpush1.bf16.msra.mxu0 0
        %2945 = vmatprep.subr.bf16.mxu0 0
        %2946 = vmatpush1.bf16.msra.mxu0 0
        %2947 = vmatprep.subr.bf16.mxu0 0
        %2948 = vmatpush1.bf16.msra.mxu0 0
        %2949 = vmatprep.mubr.bf16.mxu0 0
        %2950 = vmatmul.mubr.bf16.gmra.mrb[0].mxu0 %v2915
        %v2951 = vpop.f32.mrb[0].mxu0
        %v2952 = vadd.f32 0.0, %v2951
        %v2953 = vpop.f32.mrb[0].mxu0
        %v2954 = vpop.f32.mrb[0].mxu0
        %v2955 = vpop.f32.mrb[0].mxu0
        %2956 = vdwg.mxu0
        %v2957 = vadd.f32 %v2911, %v2952
        %s2958 = scalar_lea.vmem %s4, 28
        %v2959 = vld [vmem:[%s2958] sm:$0xf]
        %v2961 = vsel %vm1244, %v2959, 0
        %2963 = vmatprep.subr.bf16.mxu0 0
        %2964 = vmatpush1.bf16.msra.mxu0 %v2545
        %2965 = vmatprep.subr.bf16.mxu0 0
        %2966 = vmatpush1.bf16.msra.mxu0 0
        %2967 = vmatprep.subr.bf16.mxu0 0
        %2968 = vmatpush1.bf16.msra.mxu0 0
        %2969 = vmatprep.subr.bf16.mxu0 0
        %2970 = vmatpush1.bf16.msra.mxu0 0
        %2971 = vmatprep.subr.bf16.mxu0 0
        %2972 = vmatpush1.bf16.msra.mxu0 0
        %2973 = vmatprep.subr.bf16.mxu0 0
        %2974 = vmatpush1.bf16.msra.mxu0 0
        %2975 = vmatprep.subr.bf16.mxu0 0
        %2976 = vmatpush1.bf16.msra.mxu0 0
        %2977 = vmatprep.subr.bf16.mxu0 0
        %2978 = vmatpush1.bf16.msra.mxu0 0
        %2979 = vmatprep.subr.bf16.mxu0 0
        %2980 = vmatpush1.bf16.msra.mxu0 0
        %2981 = vmatprep.subr.bf16.mxu0 0
        %2982 = vmatpush1.bf16.msra.mxu0 0
        %2983 = vmatprep.subr.bf16.mxu0 0
        %2984 = vmatpush1.bf16.msra.mxu0 0
        %2985 = vmatprep.subr.bf16.mxu0 0
        %2986 = vmatpush1.bf16.msra.mxu0 0
        %2987 = vmatprep.subr.bf16.mxu0 0
        %2988 = vmatpush1.bf16.msra.mxu0 0
        %2989 = vmatprep.subr.bf16.mxu0 0
        %2990 = vmatpush1.bf16.msra.mxu0 0
        %2991 = vmatprep.subr.bf16.mxu0 0
        %2992 = vmatpush1.bf16.msra.mxu0 0
        %2993 = vmatprep.subr.bf16.mxu0 0
        %2994 = vmatpush1.bf16.msra.mxu0 0
        %2995 = vmatprep.mubr.bf16.mxu0 0
        %2996 = vmatmul.mubr.bf16.gmra.mrb[0].mxu0 %v2961
        %v2997 = vpop.f32.mrb[0].mxu0
        %v2998 = vadd.f32 0.0, %v2997
        %v2999 = vpop.f32.mrb[0].mxu0
        %v3000 = vpop.f32.mrb[0].mxu0
        %v3001 = vpop.f32.mrb[0].mxu0
        %3002 = vdwg.mxu0
        %v3003 = vadd.f32 %v2957, %v2998
        %s3004 = scalar_lea.vmem %s4, 32
        %v3005 = vld [vmem:[%s3004] sm:$0xf]
        %v3007 = vsel %vm1244, %v3005, 0
        %3009 = vmatprep.subr.bf16.mxu0 0
        %3010 = vmatpush1.bf16.msra.mxu0 %v2596
        %3011 = vmatprep.subr.bf16.mxu0 0
        %3012 = vmatpush1.bf16.msra.mxu0 0
        %3013 = vmatprep.subr.bf16.mxu0 0
        %3014 = vmatpush1.bf16.msra.mxu0 0
        %3015 = vmatprep.subr.bf16.mxu0 0
        %3016 = vmatpush1.bf16.msra.mxu0 0
        %3017 = vmatprep.subr.bf16.mxu0 0
        %3018 = vmatpush1.bf16.msra.mxu0 0
        %3019 = vmatprep.subr.bf16.mxu0 0
        %3020 = vmatpush1.bf16.msra.mxu0 0
        %3021 = vmatprep.subr.bf16.mxu0 0
        %3022 = vmatpush1.bf16.msra.mxu0 0
        %3023 = vmatprep.subr.bf16.mxu0 0
        %3024 = vmatpush1.bf16.msra.mxu0 0
        %3025 = vmatprep.subr.bf16.mxu0 0
        %3026 = vmatpush1.bf16.msra.mxu0 0
        %3027 = vmatprep.subr.bf16.mxu0 0
        %3028 = vmatpush1.bf16.msra.mxu0 0
        %3029 = vmatprep.subr.bf16.mxu0 0
        %3030 = vmatpush1.bf16.msra.mxu0 0
        %3031 = vmatprep.subr.bf16.mxu0 0
        %3032 = vmatpush1.bf16.msra.mxu0 0
        %3033 = vmatprep.subr.bf16.mxu0 0
        %3034 = vmatpush1.bf16.msra.mxu0 0
        %3035 = vmatprep.subr.bf16.mxu0 0
        %3036 = vmatpush1.bf16.msra.mxu0 0
        %3037 = vmatprep.subr.bf16.mxu0 0
        %3038 = vmatpush1.bf16.msra.mxu0 0
        %3039 = vmatprep.subr.bf16.mxu0 0
        %3040 = vmatpush1.bf16.msra.mxu0 0
        %3041 = vmatprep.mubr.bf16.mxu0 0
        %3042 = vmatmul.mubr.bf16.gmra.mrb[0].mxu0 %v3007
        %v3043 = vpop.f32.mrb[0].mxu0
        %v3044 = vadd.f32 0.0, %v3043
        %v3045 = vpop.f32.mrb[0].mxu0
        %v3046 = vpop.f32.mrb[0].mxu0
        %v3047 = vpop.f32.mrb[0].mxu0
        %3048 = vdwg.mxu0
        %v3049 = vadd.f32 %v3003, %v3044
        %v3050 = vld [vmem:[%s5] sm:$0xf]
        %v3051 = vld [vmem:[#allocation4] sm:$0xf]
        %s3052 = scalar_lea.vmem %s5, 4
        %v3053 = vld [vmem:[%s3052] sm:$0xf]
        %v3055 = vunpack.c.l.b16 %v3051
        %v3056 = vpack.c.b16 %v3055, %v3055
        %3057 = vrot.lane.b32.xlu0 %v3056, 127
        %v3058 = vpop.permute.xlu0 %3057
        %v3060 = vsel %vm1244, %v3053, 0
        %v3063 = vsel %vm1248, %v3058, 0
        %3065 = vmatprep.subr.bf16.mxu0 0
        %3066 = vmatpush1.bf16.msra.mxu0 %v3063
        %3067 = vmatprep.subr.bf16.mxu0 0
        %3068 = vmatpush1.bf16.msra.mxu0 0
        %3069 = vmatprep.subr.bf16.mxu0 0
        %3070 = vmatpush1.bf16.msra.mxu0 0
        %3071 = vmatprep.subr.bf16.mxu0 0
        %3072 = vmatpush1.bf16.msra.mxu0 0
        %3073 = vmatprep.subr.bf16.mxu0 0
        %3074 = vmatpush1.bf16.msra.mxu0 0
        %3075 = vmatprep.subr.bf16.mxu0 0
        %3076 = vmatpush1.bf16.msra.mxu0 0
        %3077 = vmatprep.subr.bf16.mxu0 0
        %3078 = vmatpush1.bf16.msra.mxu0 0
        %3079 = vmatprep.subr.bf16.mxu0 0
        %3080 = vmatpush1.bf16.msra.mxu0 0
        %3081 = vmatprep.subr.bf16.mxu0 0
        %3082 = vmatpush1.bf16.msra.mxu0 0
        %3083 = vmatprep.subr.bf16.mxu0 0
        %3084 = vmatpush1.bf16.msra.mxu0 0
        %3085 = vmatprep.subr.bf16.mxu0 0
        %3086 = vmatpush1.bf16.msra.mxu0 0
        %3087 = vmatprep.subr.bf16.mxu0 0
        %3088 = vmatpush1.bf16.msra.mxu0 0
        %3089 = vmatprep.subr.bf16.mxu0 0
        %3090 = vmatpush1.bf16.msra.mxu0 0
        %3091 = vmatprep.subr.bf16.mxu0 0
        %3092 = vmatpush1.bf16.msra.mxu0 0
        %3093 = vmatprep.subr.bf16.mxu0 0
        %3094 = vmatpush1.bf16.msra.mxu0 0
        %3095 = vmatprep.subr.bf16.mxu0 0
        %3096 = vmatpush1.bf16.msra.mxu0 0
        %3097 = vmatprep.mubr.bf16.mxu0 0
        %3098 = vmatmul.mubr.bf16.gmra.mrb[0].mxu0 %v3060
        %v3099 = vpop.f32.mrb[0].mxu0
        %v3100 = vadd.f32 0.0, %v3099
        %v3101 = vpop.f32.mrb[0].mxu0
        %v3102 = vpop.f32.mrb[0].mxu0
        %v3103 = vpop.f32.mrb[0].mxu0
        %3104 = vdwg.mxu0
        %v3106 = vsel %vm1244, %v3050, 0
        %v3109 = vsel %vm1248, %v3051, 0
        %3111 = vmatprep.subr.bf16.mxu0 0
        %3112 = vmatpush1.bf16.msra.mxu0 %v3109
        %3113 = vmatprep.subr.bf16.mxu0 0
        %3114 = vmatpush1.bf16.msra.mxu0 0
        %3115 = vmatprep.subr.bf16.mxu0 0
        %3116 = vmatpush1.bf16.msra.mxu0 0
        %3117 = vmatprep.subr.bf16.mxu0 0
        %3118 = vmatpush1.bf16.msra.mxu0 0
        %3119 = vmatprep.subr.bf16.mxu0 0
        %3120 = vmatpush1.bf16.msra.mxu0 0
        %3121 = vmatprep.subr.bf16.mxu0 0
        %3122 = vmatpush1.bf16.msra.mxu0 0
        %3123 = vmatprep.subr.bf16.mxu0 0
        %3124 = vmatpush1.bf16.msra.mxu0 0
        %3125 = vmatprep.subr.bf16.mxu0 0
        %3126 = vmatpush1.bf16.msra.mxu0 0
        %3127 = vmatprep.subr.bf16.mxu0 0
        %3128 = vmatpush1.bf16.msra.mxu0 0
        %3129 = vmatprep.subr.bf16.mxu0 0
        %3130 = vmatpush1.bf16.msra.mxu0 0
        %3131 = vmatprep.subr.bf16.mxu0 0
        %3132 = vmatpush1.bf16.msra.mxu0 0
        %3133 = vmatprep.subr.bf16.mxu0 0
        %3134 = vmatpush1.bf16.msra.mxu0 0
        %3135 = vmatprep.subr.bf16.mxu0 0
        %3136 = vmatpush1.bf16.msra.mxu0 0
        %3137 = vmatprep.subr.bf16.mxu0 0
        %3138 = vmatpush1.bf16.msra.mxu0 0
        %3139 = vmatprep.subr.bf16.mxu0 0
        %3140 = vmatpush1.bf16.msra.mxu0 0
        %3141 = vmatprep.subr.bf16.mxu0 0
        %3142 = vmatpush1.bf16.msra.mxu0 0
        %3143 = vmatprep.mubr.bf16.mxu0 0
        %3144 = vmatmul.mubr.bf16.gmra.mrb[0].mxu0 %v3106
        %v3145 = vpop.f32.mrb[0].mxu0
        %v3146 = vadd.f32 %v3100, %v3145
        %v3147 = vpop.f32.mrb[0].mxu0
        %v3148 = vpop.f32.mrb[0].mxu0
        %v3149 = vpop.f32.mrb[0].mxu0
        %3150 = vdwg.mxu0
        %s3151 = scalar_lea.vmem %s5, 8
        %v3152 = vld [vmem:[%s3151] sm:$0xf]
        %3153 = vrot.lane.b32.xlu0 %v3056, 126
        %v3154 = vpop.permute.xlu0 %3153
        %v3156 = vsel %vm1244, %v3152, 0
        %v3159 = vsel %vm1248, %v3154, 0
        %3161 = vmatprep.subr.bf16.mxu0 0
        %3162 = vmatpush1.bf16.msra.mxu0 %v3159
        %3163 = vmatprep.subr.bf16.mxu0 0
        %3164 = vmatpush1.bf16.msra.mxu0 0
        %3165 = vmatprep.subr.bf16.mxu0 0
        %3166 = vmatpush1.bf16.msra.mxu0 0
        %3167 = vmatprep.subr.bf16.mxu0 0
        %3168 = vmatpush1.bf16.msra.mxu0 0
        %3169 = vmatprep.subr.bf16.mxu0 0
        %3170 = vmatpush1.bf16.msra.mxu0 0
        %3171 = vmatprep.subr.bf16.mxu0 0
        %3172 = vmatpush1.bf16.msra.mxu0 0
        %3173 = vmatprep.subr.bf16.mxu0 0
        %3174 = vmatpush1.bf16.msra.mxu0 0
        %3175 = vmatprep.subr.bf16.mxu0 0
        %3176 = vmatpush1.bf16.msra.mxu0 0
        %3177 = vmatprep.subr.bf16.mxu0 0
        %3178 = vmatpush1.bf16.msra.mxu0 0
        %3179 = vmatprep.subr.bf16.mxu0 0
        %3180 = vmatpush1.bf16.msra.mxu0 0
        %3181 = vmatprep.subr.bf16.mxu0 0
        %3182 = vmatpush1.bf16.msra.mxu0 0
        %3183 = vmatprep.subr.bf16.mxu0 0
        %3184 = vmatpush1.bf16.msra.mxu0 0
        %3185 = vmatprep.subr.bf16.mxu0 0
        %3186 = vmatpush1.bf16.msra.mxu0 0
        %3187 = vmatprep.subr.bf16.mxu0 0
        %3188 = vmatpush1.bf16.msra.mxu0 0
        %3189 = vmatprep.subr.bf16.mxu0 0
        %3190 = vmatpush1.bf16.msra.mxu0 0
        %3191 = vmatprep.subr.bf16.mxu0 0
        %3192 = vmatpush1.bf16.msra.mxu0 0
        %3193 = vmatprep.mubr.bf16.mxu0 0
        %3194 = vmatmul.mubr.bf16.gmra.mrb[0].mxu0 %v3156
        %v3195 = vpop.f32.mrb[0].mxu0
        %v3196 = vadd.f32 0.0, %v3195
        %v3197 = vpop.f32.mrb[0].mxu0
        %v3198 = vpop.f32.mrb[0].mxu0
        %v3199 = vpop.f32.mrb[0].mxu0
        %3200 = vdwg.mxu0
        %v3201 = vadd.f32 %v3146, %v3196
        %s3202 = scalar_lea.vmem %s5, 12
        %v3203 = vld [vmem:[%s3202] sm:$0xf]
        %3204 = vrot.lane.b32.xlu0 %v3056, 118
        %v3205 = vpop.permute.xlu0 %3204
        %v3207 = vsel %vm1244, %v3203, 0
        %v3210 = vsel %vm1248, %v3205, 0
        %3212 = vmatprep.subr.bf16.mxu0 0
        %3213 = vmatpush1.bf16.msra.mxu0 %v3210
        %3214 = vmatprep.subr.bf16.mxu0 0
        %3215 = vmatpush1.bf16.msra.mxu0 0
        %3216 = vmatprep.subr.bf16.mxu0 0
        %3217 = vmatpush1.bf16.msra.mxu0 0
        %3218 = vmatprep.subr.bf16.mxu0 0
        %3219 = vmatpush1.bf16.msra.mxu0 0
        %3220 = vmatprep.subr.bf16.mxu0 0
        %3221 = vmatpush1.bf16.msra.mxu0 0
        %3222 = vmatprep.subr.bf16.mxu0 0
        %3223 = vmatpush1.bf16.msra.mxu0 0
        %3224 = vmatprep.subr.bf16.mxu0 0
        %3225 = vmatpush1.bf16.msra.mxu0 0
        %3226 = vmatprep.subr.bf16.mxu0 0
        %3227 = vmatpush1.bf16.msra.mxu0 0
        %3228 = vmatprep.subr.bf16.mxu0 0
        %3229 = vmatpush1.bf16.msra.mxu0 0
        %3230 = vmatprep.subr.bf16.mxu0 0
        %3231 = vmatpush1.bf16.msra.mxu0 0
        %3232 = vmatprep.subr.bf16.mxu0 0
        %3233 = vmatpush1.bf16.msra.mxu0 0
        %3234 = vmatprep.subr.bf16.mxu0 0
        %3235 = vmatpush1.bf16.msra.mxu0 0
        %3236 = vmatprep.subr.bf16.mxu0 0
        %3237 = vmatpush1.bf16.msra.mxu0 0
        %3238 = vmatprep.subr.bf16.mxu0 0
        %3239 = vmatpush1.bf16.msra.mxu0 0
        %3240 = vmatprep.subr.bf16.mxu0 0
        %3241 = vmatpush1.bf16.msra.mxu0 0
        %3242 = vmatprep.subr.bf16.mxu0 0
        %3243 = vmatpush1.bf16.msra.mxu0 0
        %3244 = vmatprep.mubr.bf16.mxu0 0
        %3245 = vmatmul.mubr.bf16.gmra.mrb[0].mxu0 %v3207
        %v3246 = vpop.f32.mrb[0].mxu0
        %v3247 = vadd.f32 0.0, %v3246
        %v3248 = vpop.f32.mrb[0].mxu0
        %v3249 = vpop.f32.mrb[0].mxu0
        %v3250 = vpop.f32.mrb[0].mxu0
        %3251 = vdwg.mxu0
        %v3252 = vadd.f32 %v3201, %v3247
        %s3253 = scalar_lea.vmem %s5, 16
        %v3254 = vld [vmem:[%s3253] sm:$0xf]
        %3255 = vrot.lane.b32.xlu0 %v3056, 117
        %v3256 = vpop.permute.xlu0 %3255
        %v3258 = vsel %vm1244, %v3254, 0
        %v3261 = vsel %vm1248, %v3256, 0
        %3263 = vmatprep.subr.bf16.mxu0 0
        %3264 = vmatpush1.bf16.msra.mxu0 %v3261
        %3265 = vmatprep.subr.bf16.mxu0 0
        %3266 = vmatpush1.bf16.msra.mxu0 0
        %3267 = vmatprep.subr.bf16.mxu0 0
        %3268 = vmatpush1.bf16.msra.mxu0 0
        %3269 = vmatprep.subr.bf16.mxu0 0
        %3270 = vmatpush1.bf16.msra.mxu0 0
        %3271 = vmatprep.subr.bf16.mxu0 0
        %3272 = vmatpush1.bf16.msra.mxu0 0
        %3273 = vmatprep.subr.bf16.mxu0 0
        %3274 = vmatpush1.bf16.msra.mxu0 0
        %3275 = vmatprep.subr.bf16.mxu0 0
        %3276 = vmatpush1.bf16.msra.mxu0 0
        %3277 = vmatprep.subr.bf16.mxu0 0
        %3278 = vmatpush1.bf16.msra.mxu0 0
        %3279 = vmatprep.subr.bf16.mxu0 0
        %3280 = vmatpush1.bf16.msra.mxu0 0
        %3281 = vmatprep.subr.bf16.mxu0 0
        %3282 = vmatpush1.bf16.msra.mxu0 0
        %3283 = vmatprep.subr.bf16.mxu0 0
        %3284 = vmatpush1.bf16.msra.mxu0 0
        %3285 = vmatprep.subr.bf16.mxu0 0
        %3286 = vmatpush1.bf16.msra.mxu0 0
        %3287 = vmatprep.subr.bf16.mxu0 0
        %3288 = vmatpush1.bf16.msra.mxu0 0
        %3289 = vmatprep.subr.bf16.mxu0 0
        %3290 = vmatpush1.bf16.msra.mxu0 0
        %3291 = vmatprep.subr.bf16.mxu0 0
        %3292 = vmatpush1.bf16.msra.mxu0 0
        %3293 = vmatprep.subr.bf16.mxu0 0
        %3294 = vmatpush1.bf16.msra.mxu0 0
        %3295 = vmatprep.mubr.bf16.mxu0 0
        %3296 = vmatmul.mubr.bf16.gmra.mrb[0].mxu0 %v3258
        %v3297 = vpop.f32.mrb[0].mxu0
        %v3298 = vadd.f32 0.0, %v3297
        %v3299 = vpop.f32.mrb[0].mxu0
        %v3300 = vpop.f32.mrb[0].mxu0
        %v3301 = vpop.f32.mrb[0].mxu0
        %3302 = vdwg.mxu0
        %v3303 = vadd.f32 %v3252, %v3298
        %s3304 = scalar_lea.vmem %s5, 20
        %v3305 = vld [vmem:[%s3304] sm:$0xf]
        %3306 = vrot.lane.b32.xlu0 %v3056, 116
        %v3307 = vpop.permute.xlu0 %3306
        %v3309 = vsel %vm1244, %v3305, 0
        %v3312 = vsel %vm1248, %v3307, 0
        %3314 = vmatprep.subr.bf16.mxu0 0
        %3315 = vmatpush1.bf16.msra.mxu0 %v3312
        %3316 = vmatprep.subr.bf16.mxu0 0
        %3317 = vmatpush1.bf16.msra.mxu0 0
        %3318 = vmatprep.subr.bf16.mxu0 0
        %3319 = vmatpush1.bf16.msra.mxu0 0
        %3320 = vmatprep.subr.bf16.mxu0 0
        %3321 = vmatpush1.bf16.msra.mxu0 0
        %3322 = vmatprep.subr.bf16.mxu0 0
        %3323 = vmatpush1.bf16.msra.mxu0 0
        %3324 = vmatprep.subr.bf16.mxu0 0
        %3325 = vmatpush1.bf16.msra.mxu0 0
        %3326 = vmatprep.subr.bf16.mxu0 0
        %3327 = vmatpush1.bf16.msra.mxu0 0
        %3328 = vmatprep.subr.bf16.mxu0 0
        %3329 = vmatpush1.bf16.msra.mxu0 0
        %3330 = vmatprep.subr.bf16.mxu0 0
        %3331 = vmatpush1.bf16.msra.mxu0 0
        %3332 = vmatprep.subr.bf16.mxu0 0
        %3333 = vmatpush1.bf16.msra.mxu0 0
        %3334 = vmatprep.subr.bf16.mxu0 0
        %3335 = vmatpush1.bf16.msra.mxu0 0
        %3336 = vmatprep.subr.bf16.mxu0 0
        %3337 = vmatpush1.bf16.msra.mxu0 0
        %3338 = vmatprep.subr.bf16.mxu0 0
        %3339 = vmatpush1.bf16.msra.mxu0 0
        %3340 = vmatprep.subr.bf16.mxu0 0
        %3341 = vmatpush1.bf16.msra.mxu0 0
        %3342 = vmatprep.subr.bf16.mxu0 0
        %3343 = vmatpush1.bf16.msra.mxu0 0
        %3344 = vmatprep.subr.bf16.mxu0 0
        %3345 = vmatpush1.bf16.msra.mxu0 0
        %3346 = vmatprep.mubr.bf16.mxu0 0
        %3347 = vmatmul.mubr.bf16.gmra.mrb[0].mxu0 %v3309
        %v3348 = vpop.f32.mrb[0].mxu0
        %v3349 = vadd.f32 0.0, %v3348
        %v3350 = vpop.f32.mrb[0].mxu0
        %v3351 = vpop.f32.mrb[0].mxu0
        %v3352 = vpop.f32.mrb[0].mxu0
        %3353 = vdwg.mxu0
        %v3354 = vadd.f32 %v3303, %v3349
        %s3355 = scalar_lea.vmem %s5, 24
        %v3356 = vld [vmem:[%s3355] sm:$0xf]
        %3357 = vrot.lane.b32.xlu0 %v3056, 108
        %v3358 = vpop.permute.xlu0 %3357
        %v3360 = vsel %vm1244, %v3356, 0
        %v3363 = vsel %vm1248, %v3358, 0
        %3365 = vmatprep.subr.bf16.mxu0 0
        %3366 = vmatpush1.bf16.msra.mxu0 %v3363
        %3367 = vmatprep.subr.bf16.mxu0 0
        %3368 = vmatpush1.bf16.msra.mxu0 0
        %3369 = vmatprep.subr.bf16.mxu0 0
        %3370 = vmatpush1.bf16.msra.mxu0 0
        %3371 = vmatprep.subr.bf16.mxu0 0
        %3372 = vmatpush1.bf16.msra.mxu0 0
        %3373 = vmatprep.subr.bf16.mxu0 0
        %3374 = vmatpush1.bf16.msra.mxu0 0
        %3375 = vmatprep.subr.bf16.mxu0 0
        %3376 = vmatpush1.bf16.msra.mxu0 0
        %3377 = vmatprep.subr.bf16.mxu0 0
        %3378 = vmatpush1.bf16.msra.mxu0 0
        %3379 = vmatprep.subr.bf16.mxu0 0
        %3380 = vmatpush1.bf16.msra.mxu0 0
        %3381 = vmatprep.subr.bf16.mxu0 0
        %3382 = vmatpush1.bf16.msra.mxu0 0
        %3383 = vmatprep.subr.bf16.mxu0 0
        %3384 = vmatpush1.bf16.msra.mxu0 0
        %3385 = vmatprep.subr.bf16.mxu0 0
        %3386 = vmatpush1.bf16.msra.mxu0 0
        %3387 = vmatprep.subr.bf16.mxu0 0
        %3388 = vmatpush1.bf16.msra.mxu0 0
        %3389 = vmatprep.subr.bf16.mxu0 0
        %3390 = vmatpush1.bf16.msra.mxu0 0
        %3391 = vmatprep.subr.bf16.mxu0 0
        %3392 = vmatpush1.bf16.msra.mxu0 0
        %3393 = vmatprep.subr.bf16.mxu0 0
        %3394 = vmatpush1.bf16.msra.mxu0 0
        %3395 = vmatprep.subr.bf16.mxu0 0
        %3396 = vmatpush1.bf16.msra.mxu0 0
        %3397 = vmatprep.mubr.bf16.mxu0 0
        %3398 = vmatmul.mubr.bf16.gmra.mrb[0].mxu0 %v3360
        %v3399 = vpop.f32.mrb[0].mxu0
        %v3400 = vadd.f32 0.0, %v3399
        %v3401 = vpop.f32.mrb[0].mxu0
        %v3402 = vpop.f32.mrb[0].mxu0
        %v3403 = vpop.f32.mrb[0].mxu0
        %3404 = vdwg.mxu0
        %v3405 = vadd.f32 %v3354, %v3400
        %s3406 = scalar_lea.vmem %s5, 28
        %v3407 = vld [vmem:[%s3406] sm:$0xf]
        %3408 = vrot.lane.b32.xlu0 %v3056, 107
        %v3409 = vpop.permute.xlu0 %3408
        %v3411 = vsel %vm1244, %v3407, 0
        %v3414 = vsel %vm1248, %v3409, 0
        %3416 = vmatprep.subr.bf16.mxu0 0
        %3417 = vmatpush1.bf16.msra.mxu0 %v3414
        %3418 = vmatprep.subr.bf16.mxu0 0
        %3419 = vmatpush1.bf16.msra.mxu0 0
        %3420 = vmatprep.subr.bf16.mxu0 0
        %3421 = vmatpush1.bf16.msra.mxu0 0
        %3422 = vmatprep.subr.bf16.mxu0 0
        %3423 = vmatpush1.bf16.msra.mxu0 0
        %3424 = vmatprep.subr.bf16.mxu0 0
        %3425 = vmatpush1.bf16.msra.mxu0 0
        %3426 = vmatprep.subr.bf16.mxu0 0
        %3427 = vmatpush1.bf16.msra.mxu0 0
        %3428 = vmatprep.subr.bf16.mxu0 0
        %3429 = vmatpush1.bf16.msra.mxu0 0
        %3430 = vmatprep.subr.bf16.mxu0 0
        %3431 = vmatpush1.bf16.msra.mxu0 0
        %3432 = vmatprep.subr.bf16.mxu0 0
        %3433 = vmatpush1.bf16.msra.mxu0 0
        %3434 = vmatprep.subr.bf16.mxu0 0
        %3435 = vmatpush1.bf16.msra.mxu0 0
        %3436 = vmatprep.subr.bf16.mxu0 0
        %3437 = vmatpush1.bf16.msra.mxu0 0
        %3438 = vmatprep.subr.bf16.mxu0 0
        %3439 = vmatpush1.bf16.msra.mxu0 0
        %3440 = vmatprep.subr.bf16.mxu0 0
        %3441 = vmatpush1.bf16.msra.mxu0 0
        %3442 = vmatprep.subr.bf16.mxu0 0
        %3443 = vmatpush1.bf16.msra.mxu0 0
        %3444 = vmatprep.subr.bf16.mxu0 0
        %3445 = vmatpush1.bf16.msra.mxu0 0
        %3446 = vmatprep.subr.bf16.mxu0 0
        %3447 = vmatpush1.bf16.msra.mxu0 0
        %3448 = vmatprep.mubr.bf16.mxu0 0
        %3449 = vmatmul.mubr.bf16.gmra.mrb[0].mxu0 %v3411
        %v3450 = vpop.f32.mrb[0].mxu0
        %v3451 = vadd.f32 0.0, %v3450
        %v3452 = vpop.f32.mrb[0].mxu0
        %v3453 = vpop.f32.mrb[0].mxu0
        %v3454 = vpop.f32.mrb[0].mxu0
        %3455 = vdwg.mxu0
        %v3456 = vadd.f32 %v3405, %v3451
        %s3457 = scalar_lea.vmem %s5, 32
        %v3458 = vld [vmem:[%s3457] sm:$0xf]
        %3459 = vrot.lane.b32.xlu0 %v3056, 106
        %v3460 = vpop.permute.xlu0 %3459
        %v3462 = vsel %vm1244, %v3458, 0
        %v3465 = vsel %vm1248, %v3460, 0
        %3467 = vmatprep.subr.bf16.mxu0 0
        %3468 = vmatpush1.bf16.msra.mxu0 %v3465
        %3469 = vmatprep.subr.bf16.mxu0 0
        %3470 = vmatpush1.bf16.msra.mxu0 0
        %3471 = vmatprep.subr.bf16.mxu0 0
        %3472 = vmatpush1.bf16.msra.mxu0 0
        %3473 = vmatprep.subr.bf16.mxu0 0
        %3474 = vmatpush1.bf16.msra.mxu0 0
        %3475 = vmatprep.subr.bf16.mxu0 0
        %3476 = vmatpush1.bf16.msra.mxu0 0
        %3477 = vmatprep.subr.bf16.mxu0 0
        %3478 = vmatpush1.bf16.msra.mxu0 0
        %3479 = vmatprep.subr.bf16.mxu0 0
        %3480 = vmatpush1.bf16.msra.mxu0 0
        %3481 = vmatprep.subr.bf16.mxu0 0
        %3482 = vmatpush1.bf16.msra.mxu0 0
        %3483 = vmatprep.subr.bf16.mxu0 0
        %3484 = vmatpush1.bf16.msra.mxu0 0
        %3485 = vmatprep.subr.bf16.mxu0 0
        %3486 = vmatpush1.bf16.msra.mxu0 0
        %3487 = vmatprep.subr.bf16.mxu0 0
        %3488 = vmatpush1.bf16.msra.mxu0 0
        %3489 = vmatprep.subr.bf16.mxu0 0
        %3490 = vmatpush1.bf16.msra.mxu0 0
        %3491 = vmatprep.subr.bf16.mxu0 0
        %3492 = vmatpush1.bf16.msra.mxu0 0
        %3493 = vmatprep.subr.bf16.mxu0 0
        %3494 = vmatpush1.bf16.msra.mxu0 0
        %3495 = vmatprep.subr.bf16.mxu0 0
        %3496 = vmatpush1.bf16.msra.mxu0 0
        %3497 = vmatprep.subr.bf16.mxu0 0
        %3498 = vmatpush1.bf16.msra.mxu0 0
        %3499 = vmatprep.mubr.bf16.mxu0 0
        %3500 = vmatmul.mubr.bf16.gmra.mrb[0].mxu0 %v3462
        %v3501 = vpop.f32.mrb[0].mxu0
        %v3502 = vadd.f32 0.0, %v3501
        %v3503 = vpop.f32.mrb[0].mxu0
        %v3504 = vpop.f32.mrb[0].mxu0
        %v3505 = vpop.f32.mrb[0].mxu0
        %3506 = vdwg.mxu0
        %v3507 = vadd.f32 %v3456, %v3502
        %v3508 = vld [vmem:[%s11] sm:$0xff]
        %v3509 = vld [vmem:[%s11 + $0x8] sm:$0xff]
        %v3510 = vld [vmem:[%s11 + $0x10] sm:$0xff]
        %v3511 = vld [vmem:[%s11 + $0x18] sm:$0xff]
        %v3512 = vld [vmem:[%s11 + $0x20] sm:$0xff]
        %v3513 = vld [vmem:[%s11 + $0x28] sm:$0xff]
        %v3514 = vld [vmem:[%s11 + $0x30] sm:$0xff]
        %v3515 = vld [vmem:[%s11 + $0x38] sm:$0xff]
        %v3516 = vld [vmem:[%s11 + $0x40] sm:$0xff]
        %v3517 = vld [vmem:[%s11 + $0x48] sm:$0xff]
        %v3518 = vld [vmem:[%s11 + $0x50] sm:$0xff]
        %v3519 = vld [vmem:[%s11 + $0x58] sm:$0xff]
        %v3520 = vld [vmem:[%s11 + $0x60] sm:$0xff]
        %v3521 = vld [vmem:[%s11 + $0x68] sm:$0xff]
        %v3522 = vld [vmem:[%s11 + $0x70] sm:$0xff]
        %v3523 = vld [vmem:[%s11 + $0x78] sm:$0xff]
        %v3524 = vld [vmem:[%s11 + $0x80] sm:$0xff]
        %v3525 = vld [vmem:[%s11 + $0x88] sm:$0xff]
        %v3526 = vld [vmem:[%s11 + $0x90] sm:$0xff]
        %v3527 = vld [vmem:[%s11 + $0x98] sm:$0xff]
        %v3528 = vld [vmem:[%s11 + $0xa0] sm:$0xff]
        %v3529 = vld [vmem:[%s11 + $0xa8] sm:$0xff]
        %v3530 = vld [vmem:[%s11 + $0xb0] sm:$0xff]
        %v3531 = vld [vmem:[%s11 + $0xb8] sm:$0xff]
        %v3532 = vld [vmem:[%s11 + $0xc0] sm:$0xff]
        %v3533 = vld [vmem:[%s11 + $0xc8] sm:$0xff]
        %v3534 = vld [vmem:[%s11 + $0xd0] sm:$0xff]
        %v3535 = vld [vmem:[%s11 + $0xd8] sm:$0xff]
        %v3536 = vld [vmem:[%s11 + $0xe0] sm:$0xff]
        %v3537 = vld [vmem:[%s11 + $0xe8] sm:$0xff]
        %v3538 = vld [vmem:[%s11 + $0xf0] sm:$0xff]
        %v3539 = vld [vmem:[%s11 + $0xf8] sm:$0xff]
        %v3540 = vld [vmem:[%s11 + $0x100] sm:$0xff]
        %v3541 = vld [vmem:[%s11 + $0x108] sm:$0xff]
        %v3542 = vld [vmem:[%s11 + $0x110] sm:$0xff]
        %v3543 = vld [vmem:[%s11 + $0x118] sm:$0xff]
        %v3544 = vld [vmem:[%s11 + $0x120] sm:$0xff]
        %v3545 = vld [vmem:[%s11 + $0x128] sm:$0xff]
        %v3546 = vld [vmem:[%s11 + $0x130] sm:$0xff]
        %v3547 = vld [vmem:[%s11 + $0x138] sm:$0xff]
        %v3548 = vld [vmem:[%s11 + $0x140] sm:$0xff]
        %v3549 = vld [vmem:[%s11 + $0x148] sm:$0xff]
        %v3550 = vld [vmem:[%s11 + $0x150] sm:$0xff]
        %v3551 = vld [vmem:[%s11 + $0x158] sm:$0xff]
        %v3552 = vld [vmem:[%s11 + $0x160] sm:$0xff]
        %v3553 = vld [vmem:[%s11 + $0x168] sm:$0xff]
        %v3554 = vld [vmem:[%s11 + $0x170] sm:$0xff]
        %v3555 = vld [vmem:[%s11 + $0x178] sm:$0xff]
        %v3556 = vld [vmem:[%s11 + $0x180] sm:$0xff]
        %v3557 = vld [vmem:[%s11 + $0x188] sm:$0xff]
        %v3558 = vld [vmem:[%s11 + $0x190] sm:$0xff]
        %v3559 = vld [vmem:[%s11 + $0x198] sm:$0xff]
        %v3560 = vld [vmem:[%s11 + $0x1a0] sm:$0xff]
        %v3561 = vld [vmem:[%s11 + $0x1a8] sm:$0xff]
        %v3562 = vld [vmem:[%s11 + $0x1b0] sm:$0xff]
        %v3563 = vld [vmem:[%s11 + $0x1b8] sm:$0xff]
        %v3564 = vld [vmem:[%s11 + $0x1c0] sm:$0xff]
        %v3565 = vld [vmem:[%s11 + $0x1c8] sm:$0xff]
        %v3566 = vld [vmem:[%s11 + $0x1d0] sm:$0xff]
        %v3567 = vld [vmem:[%s11 + $0x1d8] sm:$0xff]
        %v3568 = vld [vmem:[%s11 + $0x1e0] sm:$0xff]
        %v3569 = vld [vmem:[%s11 + $0x1e8] sm:$0xff]
        %v3570 = vld [vmem:[%s11 + $0x1f0] sm:$0xff]
        %v3571 = vld [vmem:[%s11 + $0x1f8] sm:$0xff]
        %v3572 = vld [vmem:[%s11 + $0x200] sm:$0xff]
        %v3573 = vld [vmem:[%s11 + $0x208] sm:$0xff]
        %v3574 = vld [vmem:[%s11 + $0x210] sm:$0xff]
        %v3575 = vld [vmem:[%s11 + $0x218] sm:$0xff]
        %v3576 = vld [vmem:[%s11 + $0x220] sm:$0xff]
        %v3577 = vld [vmem:[%s11 + $0x228] sm:$0xff]
        %v3578 = vld [vmem:[%s11 + $0x230] sm:$0xff]
        %v3579 = vld [vmem:[%s11 + $0x238] sm:$0xff]
        %v3580 = vld [vmem:[%s11 + $0x240] sm:$0xff]
        %v3581 = vld [vmem:[%s11 + $0x248] sm:$0xff]
        %v3582 = vld [vmem:[%s11 + $0x250] sm:$0xff]
        %v3583 = vld [vmem:[%s11 + $0x258] sm:$0xff]
        %v3584 = vld [vmem:[%s11 + $0x260] sm:$0xff]
        %v3585 = vld [vmem:[%s11 + $0x268] sm:$0xff]
        %v3586 = vld [vmem:[%s11 + $0x270] sm:$0xff]
        %v3587 = vld [vmem:[%s11 + $0x278] sm:$0xff]
        %v3588 = vld [vmem:[%s11 + $0x280] sm:$0xf]
        %v3589 = vld [vmem:[%s11 + $0x288] sm:$0xf]
        %v3590 = vld [vmem:[%s12] sm:$0xff]
        %v3591 = vld [vmem:[%s12 + $0x8] sm:$0xff]
        %v3592 = vld [vmem:[%s12 + $0x10] sm:$0xff]
        %v3593 = vld [vmem:[%s12 + $0x18] sm:$0xff]
        %v3594 = vld [vmem:[%s12 + $0x20] sm:$0xff]
        %v3595 = vld [vmem:[%s12 + $0x28] sm:$0xff]
        %v3596 = vld [vmem:[%s12 + $0x30] sm:$0xff]
        %v3597 = vld [vmem:[%s12 + $0x38] sm:$0xff]
        %v3598 = vld [vmem:[%s12 + $0x40] sm:$0xff]
        %v3599 = vld [vmem:[%s12 + $0x48] sm:$0xff]
        %v3600 = vld [vmem:[%s12 + $0x50] sm:$0xff]
        %v3601 = vld [vmem:[%s12 + $0x58] sm:$0xff]
        %v3602 = vld [vmem:[%s12 + $0x60] sm:$0xff]
        %v3603 = vld [vmem:[%s12 + $0x68] sm:$0xff]
        %v3604 = vld [vmem:[%s12 + $0x70] sm:$0xff]
        %v3605 = vld [vmem:[%s12 + $0x78] sm:$0xff]
        %v3606 = vld [vmem:[%s12 + $0x80] sm:$0xff]
        %v3607 = vld [vmem:[%s12 + $0x88] sm:$0xff]
        %v3608 = vld [vmem:[%s12 + $0x90] sm:$0xff]
        %v3609 = vld [vmem:[%s12 + $0x98] sm:$0xff]
        %v3610 = vld [vmem:[%s12 + $0xa0] sm:$0xff]
        %v3611 = vld [vmem:[%s12 + $0xa8] sm:$0xff]
        %v3612 = vld [vmem:[%s12 + $0xb0] sm:$0xff]
        %v3613 = vld [vmem:[%s12 + $0xb8] sm:$0xff]
        %v3614 = vld [vmem:[%s12 + $0xc0] sm:$0xf]
        %v3615 = vld [vmem:[%s12 + $0xc8] sm:$0xf]
        %vm3616 = vcmask 818176
        %v3618 = vsel %vm3616, %v2638, 0
        %v3621 = vsel %vm1248, %v3614, 0
        %v3624 = vsel %vm1248, %v3615, 0
        %3626 = vmatprep.subr.mxu0 %v3591
        %3627 = vmatpush1.msra.mxu0 %v3590
        %3628 = vmatprep.subr.mxu0 %v3593
        %3629 = vmatpush1.msra.mxu0 %v3592
        %3630 = vmatprep.subr.mxu0 %v3595
        %3631 = vmatpush1.msra.mxu0 %v3594
        %3632 = vmatprep.subr.mxu0 %v3597
        %3633 = vmatpush1.msra.mxu0 %v3596
        %3634 = vmatprep.subr.mxu0 %v3599
        %3635 = vmatpush1.msra.mxu0 %v3598
        %3636 = vmatprep.subr.mxu0 %v3601
        %3637 = vmatpush1.msra.mxu0 %v3600
        %3638 = vmatprep.subr.mxu0 %v3603
        %3639 = vmatpush1.msra.mxu0 %v3602
        %3640 = vmatprep.subr.mxu0 %v3605
        %3641 = vmatpush1.msra.mxu0 %v3604
        %3642 = vmatprep.subr.mxu0 %v3607
        %3643 = vmatpush1.msra.mxu0 %v3606
        %3644 = vmatprep.subr.mxu0 %v3609
        %3645 = vmatpush1.msra.mxu0 %v3608
        %3646 = vmatprep.subr.mxu0 %v3611
        %3647 = vmatpush1.msra.mxu0 %v3610
        %3648 = vmatprep.subr.mxu0 %v3613
        %3649 = vmatpush1.msra.mxu0 %v3612
        %3650 = vmatprep.subr.mxu0 %v3624
        %3651 = vmatpush1.msra.mxu0 %v3621
        %3652 = vmatprep.subr.mxu0 0.0
        %3653 = vmatpush1.msra.mxu0 0.0
        %3654 = vmatprep.subr.mxu0 0.0
        %3655 = vmatpush1.msra.mxu0 0.0
        %3656 = vmatprep.subr.mxu0 0.0
        %3657 = vmatpush1.msra.mxu0 0.0
        %3658 = vmatprep.subr.mxu0 0.0
        %3659 = vmatpush1.msra.mxu0 0.0
        %3660 = vmatprep.subr.mxu0 0.0
        %3661 = vmatpush1.msra.mxu0 0.0
        %3662 = vmatprep.subr.mxu0 0.0
        %3663 = vmatpush1.msra.mxu0 0.0
        %3664 = vmatprep.subr.mxu0 0.0
        %3665 = vmatpush1.msra.mxu0 0.0
        %3666 = vmatprep.subr.mxu0 0.0
        %3667 = vmatpush1.msra.mxu0 0.0
        %3668 = vmatprep.subr.mxu0 0.0
        %3669 = vmatpush1.msra.mxu0 0.0
        %3670 = vmatprep.subr.mxu0 0.0
        %3671 = vmatpush1.msra.mxu0 0.0
        %3672 = vmatprep.subr.mxu0 0.0
        %3673 = vmatpush1.msra.mxu0 0.0
        %3674 = vmatprep.subr.mxu0 0.0
        %3675 = vmatpush1.msra.mxu0 0.0
        %3676 = vmatprep.subr.mxu0 0.0
        %3677 = vmatpush1.msra.mxu0 0.0
        %3678 = vmatprep.subr.mxu0 0.0
        %3679 = vmatpush1.msra.mxu0 0.0
        %3680 = vmatprep.subr.mxu0 0.0
        %3681 = vmatpush1.msra.mxu0 0.0
        %3682 = vmatprep.subr.mxu0 0.0
        %3683 = vmatpush1.msra.mxu0 0.0
        %3684 = vmatprep.subr.mxu0 0.0
        %3685 = vmatpush1.msra.mxu0 0.0
        %3686 = vmatprep.subr.mxu0 0.0
        %3687 = vmatpush1.msra.mxu0 0.0
        %3688 = vmatprep.subr.mxu0 0.0
        %3689 = vmatpush1.msra.mxu0 0.0
        %3690 = vmatprep.mubr.f32.mxu0 0.0
        %3691 = vmatmul.mubr.f32.gmra.mrb[0].mxu0 %v3618
        %v3692 = vpop.f32.mrb[0].mxu0
        %v3693 = vadd.f32 0.0, %v3692
        %v3694 = vpop.f32.mrb[0].mxu0
        %v3695 = vadd.f32 0.0, %v3694
        %3696 = vdwg.mxu0
        %vm3697 = vcmask 556032
        %v3699 = vsel %vm3697, %v2180, 0
        %v3702 = vsel %vm1248, %v3588, 0
        %v3705 = vsel %vm1248, %v3589, 0
        %3707 = vmatprep.subr.mxu0 %v3509
        %3708 = vmatpush1.msra.mxu0 %v3508
        %3709 = vmatprep.subr.mxu0 %v3511
        %3710 = vmatpush1.msra.mxu0 %v3510
        %3711 = vmatprep.subr.mxu0 %v3513
        %3712 = vmatpush1.msra.mxu0 %v3512
        %3713 = vmatprep.subr.mxu0 %v3515
        %3714 = vmatpush1.msra.mxu0 %v3514
        %3715 = vmatprep.subr.mxu0 %v3517
        %3716 = vmatpush1.msra.mxu0 %v3516
        %3717 = vmatprep.subr.mxu0 %v3519
        %3718 = vmatpush1.msra.mxu0 %v3518
        %3719 = vmatprep.subr.mxu0 %v3521
        %3720 = vmatpush1.msra.mxu0 %v3520
        %3721 = vmatprep.subr.mxu0 %v3523
        %3722 = vmatpush1.msra.mxu0 %v3522
        %3723 = vmatprep.subr.mxu0 %v3525
        %3724 = vmatpush1.msra.mxu0 %v3524
        %3725 = vmatprep.subr.mxu0 %v3527
        %3726 = vmatpush1.msra.mxu0 %v3526
        %3727 = vmatprep.subr.mxu0 %v3529
        %3728 = vmatpush1.msra.mxu0 %v3528
        %3729 = vmatprep.subr.mxu0 %v3531
        %3730 = vmatpush1.msra.mxu0 %v3530
        %3731 = vmatprep.subr.mxu0 %v3533
        %3732 = vmatpush1.msra.mxu0 %v3532
        %3733 = vmatprep.subr.mxu0 %v3535
        %3734 = vmatpush1.msra.mxu0 %v3534
        %3735 = vmatprep.subr.mxu0 %v3537
        %3736 = vmatpush1.msra.mxu0 %v3536
        %3737 = vmatprep.subr.mxu0 %v3539
        %3738 = vmatpush1.msra.mxu0 %v3538
        %3739 = vmatprep.subr.mxu0 %v3541
        %3740 = vmatpush1.msra.mxu0 %v3540
        %3741 = vmatprep.subr.mxu0 %v3543
        %3742 = vmatpush1.msra.mxu0 %v3542
        %3743 = vmatprep.subr.mxu0 %v3545
        %3744 = vmatpush1.msra.mxu0 %v3544
        %3745 = vmatprep.subr.mxu0 %v3547
        %3746 = vmatpush1.msra.mxu0 %v3546
        %3747 = vmatprep.subr.mxu0 %v3549
        %3748 = vmatpush1.msra.mxu0 %v3548
        %3749 = vmatprep.subr.mxu0 %v3551
        %3750 = vmatpush1.msra.mxu0 %v3550
        %3751 = vmatprep.subr.mxu0 %v3553
        %3752 = vmatpush1.msra.mxu0 %v3552
        %3753 = vmatprep.subr.mxu0 %v3555
        %3754 = vmatpush1.msra.mxu0 %v3554
        %3755 = vmatprep.subr.mxu0 %v3557
        %3756 = vmatpush1.msra.mxu0 %v3556
        %3757 = vmatprep.subr.mxu0 %v3559
        %3758 = vmatpush1.msra.mxu0 %v3558
        %3759 = vmatprep.subr.mxu0 %v3561
        %3760 = vmatpush1.msra.mxu0 %v3560
        %3761 = vmatprep.subr.mxu0 %v3563
        %3762 = vmatpush1.msra.mxu0 %v3562
        %3763 = vmatprep.subr.mxu0 %v3565
        %3764 = vmatpush1.msra.mxu0 %v3564
        %3765 = vmatprep.subr.mxu0 %v3567
        %3766 = vmatpush1.msra.mxu0 %v3566
        %3767 = vmatprep.subr.mxu0 %v3569
        %3768 = vmatpush1.msra.mxu0 %v3568
        %3769 = vmatprep.subr.mxu0 %v3571
        %3770 = vmatpush1.msra.mxu0 %v3570
        %3771 = vmatprep.mubr.f32.mxu0 %v2179
        %3772 = vmatmul.mubr.f32.gmra.mrb[0].mxu0 %v2178
        %v3773 = vpop.f32.mrb[0].mxu0
        %v3774 = vadd.f32 %v3693, %v3773
        %v3775 = vpop.f32.mrb[0].mxu0
        %v3776 = vadd.f32 %v3695, %v3775
        %3777 = vdwg.mxu0
        %3778 = vmatprep.subr.mxu0 %v3573
        %3779 = vmatpush1.msra.mxu0 %v3572
        %3780 = vmatprep.subr.mxu0 %v3575
        %3781 = vmatpush1.msra.mxu0 %v3574
        %3782 = vmatprep.subr.mxu0 %v3577
        %3783 = vmatpush1.msra.mxu0 %v3576
        %3784 = vmatprep.subr.mxu0 %v3579
        %3785 = vmatpush1.msra.mxu0 %v3578
        %3786 = vmatprep.subr.mxu0 %v3581
        %3787 = vmatpush1.msra.mxu0 %v3580
        %3788 = vmatprep.subr.mxu0 %v3583
        %3789 = vmatpush1.msra.mxu0 %v3582
        %3790 = vmatprep.subr.mxu0 %v3585
        %3791 = vmatpush1.msra.mxu0 %v3584
        %3792 = vmatprep.subr.mxu0 %v3587
        %3793 = vmatpush1.msra.mxu0 %v3586
        %3794 = vmatprep.subr.mxu0 %v3705
        %3795 = vmatpush1.msra.mxu0 %v3702
        %3796 = vmatprep.subr.mxu0 0.0
        %3797 = vmatpush1.msra.mxu0 0.0
        %3798 = vmatprep.subr.mxu0 0.0
        %3799 = vmatpush1.msra.mxu0 0.0
        %3800 = vmatprep.subr.mxu0 0.0
        %3801 = vmatpush1.msra.mxu0 0.0
        %3802 = vmatprep.subr.mxu0 0.0
        %3803 = vmatpush1.msra.mxu0 0.0
        %3804 = vmatprep.subr.mxu0 0.0
        %3805 = vmatpush1.msra.mxu0 0.0
        %3806 = vmatprep.subr.mxu0 0.0
        %3807 = vmatpush1.msra.mxu0 0.0
        %3808 = vmatprep.subr.mxu0 0.0
        %3809 = vmatpush1.msra.mxu0 0.0
        %3810 = vmatprep.subr.mxu0 0.0
        %3811 = vmatpush1.msra.mxu0 0.0
        %3812 = vmatprep.subr.mxu0 0.0
        %3813 = vmatpush1.msra.mxu0 0.0
        %3814 = vmatprep.subr.mxu0 0.0
        %3815 = vmatpush1.msra.mxu0 0.0
        %3816 = vmatprep.subr.mxu0 0.0
        %3817 = vmatpush1.msra.mxu0 0.0
        %3818 = vmatprep.subr.mxu0 0.0
        %3819 = vmatpush1.msra.mxu0 0.0
        %3820 = vmatprep.subr.mxu0 0.0
        %3821 = vmatpush1.msra.mxu0 0.0
        %3822 = vmatprep.subr.mxu0 0.0
        %3823 = vmatpush1.msra.mxu0 0.0
        %3824 = vmatprep.subr.mxu0 0.0
        %3825 = vmatpush1.msra.mxu0 0.0
        %3826 = vmatprep.subr.mxu0 0.0
        %3827 = vmatpush1.msra.mxu0 0.0
        %3828 = vmatprep.subr.mxu0 0.0
        %3829 = vmatpush1.msra.mxu0 0.0
        %3830 = vmatprep.subr.mxu0 0.0
        %3831 = vmatpush1.msra.mxu0 0.0
        %3832 = vmatprep.subr.mxu0 0.0
        %3833 = vmatpush1.msra.mxu0 0.0
        %3834 = vmatprep.subr.mxu0 0.0
        %3835 = vmatpush1.msra.mxu0 0.0
        %3836 = vmatprep.subr.mxu0 0.0
        %3837 = vmatpush1.msra.mxu0 0.0
        %3838 = vmatprep.subr.mxu0 0.0
        %3839 = vmatpush1.msra.mxu0 0.0
        %3840 = vmatprep.subr.mxu0 0.0
        %3841 = vmatpush1.msra.mxu0 0.0
        %3842 = vmatprep.mubr.f32.mxu0 0.0
        %3843 = vmatmul.mubr.f32.gmra.mrb[0].mxu0 %v3699
        %v3844 = vpop.f32.mrb[0].mxu0
        %v3845 = vadd.f32 %v3774, %v3844
        %v3846 = vpop.f32.mrb[0].mxu0
        %v3847 = vadd.f32 %v3776, %v3846
        %3848 = vdwg.mxu0
        %v3849 = vld [vmem:[%s6] sm:$0xff]
        %3851 = vset.pattern.permute.xlu0 0
        %3852 = vperm.xlu0 %3851, %v3849
        %v3853 = vpop.permute.xlu0 %3852
        %v3855 = vadd.f32 %v3845, %v3853
        %v3856 = vadd.f32 %v3847, %v3853
        %v3857 = vadd.f32 %v3049, %v3507
        %v3858 = vld [vmem:[#allocation5] sm:$0xff]
        %v3859 = vld [vmem:[#allocation5 + $0x8] sm:$0xff]
        %v3860 = vld [vmem:[#allocation5 + $0x10] sm:$0xff]
        %v3861 = vld [vmem:[#allocation5 + $0x18] sm:$0xff]
        %v3862 = vld [vmem:[#allocation5 + $0x20] sm:$0xff]
        %v3863 = vld [vmem:[#allocation5 + $0x28] sm:$0xff]
        %v3864 = vld [vmem:[#allocation5 + $0x30] sm:$0xff]
        %v3865 = vld [vmem:[#allocation5 + $0x38] sm:$0xff]
        %v3866 = vld [vmem:[#allocation5 + $0x40] sm:$0xff]
        %v3867 = vld [vmem:[#allocation5 + $0x48] sm:$0xff]
        %v3868 = vld [vmem:[#allocation5 + $0x50] sm:$0xff]
        %v3869 = vld [vmem:[#allocation5 + $0x58] sm:$0xff]
        %v3870 = vld [vmem:[#allocation5 + $0x60] sm:$0xf]
        %v3871 = vld [vmem:[%s7] sm:$0xff]
        %3873 = vset.pattern.permute.xlu0 0
        %3874 = vperm.xlu0 %3873, %v3871
        %v3875 = vpop.permute.xlu0 %3874
        %v3878 = vsel %vm3616, %v3857, 0
        %v3881 = vsel %vm1248, %v3870, 0
        %3883 = vmatprep.subr.mxu0 0.0
        %3884 = vmatpush1.msra.mxu0 %v3858
        %3885 = vmatprep.subr.mxu0 0.0
        %3886 = vmatpush1.msra.mxu0 %v3859
        %3887 = vmatprep.subr.mxu0 0.0
        %3888 = vmatpush1.msra.mxu0 %v3860
        %3889 = vmatprep.subr.mxu0 0.0
        %3890 = vmatpush1.msra.mxu0 %v3861
        %3891 = vmatprep.subr.mxu0 0.0
        %3892 = vmatpush1.msra.mxu0 %v3862
        %3893 = vmatprep.subr.mxu0 0.0
        %3894 = vmatpush1.msra.mxu0 %v3863
        %3895 = vmatprep.subr.mxu0 0.0
        %3896 = vmatpush1.msra.mxu0 %v3864
        %3897 = vmatprep.subr.mxu0 0.0
        %3898 = vmatpush1.msra.mxu0 %v3865
        %3899 = vmatprep.subr.mxu0 0.0
        %3900 = vmatpush1.msra.mxu0 %v3866
        %3901 = vmatprep.subr.mxu0 0.0
        %3902 = vmatpush1.msra.mxu0 %v3867
        %3903 = vmatprep.subr.mxu0 0.0
        %3904 = vmatpush1.msra.mxu0 %v3868
        %3905 = vmatprep.subr.mxu0 0.0
        %3906 = vmatpush1.msra.mxu0 %v3869
        %3907 = vmatprep.subr.mxu0 0.0
        %3908 = vmatpush1.msra.mxu0 %v3881
        %3909 = vmatprep.subr.mxu0 0.0
        %3910 = vmatpush1.msra.mxu0 0.0
        %3911 = vmatprep.subr.mxu0 0.0
        %3912 = vmatpush1.msra.mxu0 0.0
        %3913 = vmatprep.subr.mxu0 0.0
        %3914 = vmatpush1.msra.mxu0 0.0
        %3915 = vmatprep.subr.mxu0 0.0
        %3916 = vmatpush1.msra.mxu0 0.0
        %3917 = vmatprep.subr.mxu0 0.0
        %3918 = vmatpush1.msra.mxu0 0.0
        %3919 = vmatprep.subr.mxu0 0.0
        %3920 = vmatpush1.msra.mxu0 0.0
        %3921 = vmatprep.subr.mxu0 0.0
        %3922 = vmatpush1.msra.mxu0 0.0
        %3923 = vmatprep.subr.mxu0 0.0
        %3924 = vmatpush1.msra.mxu0 0.0
        %3925 = vmatprep.subr.mxu0 0.0
        %3926 = vmatpush1.msra.mxu0 0.0
        %3927 = vmatprep.subr.mxu0 0.0
        %3928 = vmatpush1.msra.mxu0 0.0
        %3929 = vmatprep.subr.mxu0 0.0
        %3930 = vmatpush1.msra.mxu0 0.0
        %3931 = vmatprep.subr.mxu0 0.0
        %3932 = vmatpush1.msra.mxu0 0.0
        %3933 = vmatprep.subr.mxu0 0.0
        %3934 = vmatpush1.msra.mxu0 0.0
        %3935 = vmatprep.subr.mxu0 0.0
        %3936 = vmatpush1.msra.mxu0 0.0
        %3937 = vmatprep.subr.mxu0 0.0
        %3938 = vmatpush1.msra.mxu0 0.0
        %3939 = vmatprep.subr.mxu0 0.0
        %3940 = vmatpush1.msra.mxu0 0.0
        %3941 = vmatprep.subr.mxu0 0.0
        %3942 = vmatpush1.msra.mxu0 0.0
        %3943 = vmatprep.subr.mxu0 0.0
        %3944 = vmatpush1.msra.mxu0 0.0
        %3945 = vmatprep.subr.mxu0 0.0
        %3946 = vmatpush1.msra.mxu0 0.0
        %3947 = vmatprep.mubr.f32.mxu0 0.0
        %3948 = vmatmul.mubr.f32.gmra.mrb[0].mxu0 %v3878
        %v3949 = vpop.f32.mrb[0].mxu0
        %v3950 = vadd.f32 %v3875, %v3949
        %v3951 = vpop.f32.mrb[0].mxu0
        %3952 = vdwg.mxu0
        %v3955 = vcombine.low %v3855, %v3856
        %v3957 = vunpack.c.l.s4 1983009808
        %v3958 = vunpack.c.0.s8 %v3957
        %v3959 = vlaneseq
        %v3960 = vshrl.u32 %v3959, 7
        %v3961 = vsub.s32 %v3958, %v3960
        %v3962 = vrot.slane %v3955, %v3961
        %3964 = vst [vmem:[%s533] sm:$0xf] %v3962
        %vm3965 = vcmask 517120
        %3966 = vst.msk [vmem:[%s537] sm:$0x3] %vm3965, %v3950
        %p3967 = scmp.lt.s32.totalorder %s28, 1
        %s3968 = scalar_select %p3967, %s28, 1
        %s3969 = smul.addr %s3968, 2
        %s3970 = smul.addr %s3969, 2
        %s3971 = scalar_lea.vmem %s14, %s3970
        %p3972 = scmp.lt.s32.totalorder %s28, 1
        %s3973 = scalar_select %p3972, %s28, 1
        %s3974 = smul.addr %s3973, 2
        %s3975 = scalar_lea.vmem %s15, %s3974
        // Predicated region
        $region81: #{octconv2d_forward.1} parent=75 // pred_check
          %p3976 = pneg %p350
        $region82: #{octconv2d_forward.1} parent=75 // pred_check_branch
          %3978 = sbr.rel (%p3976) target = $region84
        $region83: #{octconv2d_forward.1} parent=75 // pred_region
          _
        $region84: #{octconv2d_forward.1} parent=75 // pred_fallthru
          _
        // Predicated region
        $region85: #{octconv2d_forward.1} parent=75 // pred_check
          %p3979 = pneg %p376
        $region86: #{octconv2d_forward.1} parent=75 // pred_check_branch
          %3981 = sbr.rel (%p3979) target = $region88
        $region87: #{octconv2d_forward.1} parent=75 // pred_region
          _
        $region88: #{octconv2d_forward.1} parent=75 // pred_fallthru
          _
      $region76: #{octconv2d_forward.1} parent=5 // pred_fallthru
        _
      %p3982 = scmp.le.s32.totalorder 2, %s23
      // Predicated region
      $region89: #{octconv2d_forward.1} parent=5 // pred_check
        %p3983 = pneg %p3982
      $region90: #{octconv2d_forward.1} parent=5 // pred_check_branch
        %3985 = sbr.rel (%p3983) target = $region92
      $region91: #{octconv2d_forward.1} parent=5 // pred_region
        %s3986 = ssub.s32 %s23, 2
        // Predicated region
        $region93: #{octconv2d_forward.1} parent=91 // pred_check
          %p3987 = pneg %p356
        $region94: #{octconv2d_forward.1} parent=91 // pred_check_branch
          %3989 = sbr.rel (%p3987) target = $region96
        $region95: #{octconv2d_forward.1} parent=91 // pred_region
          %p3990 = scmp.lt.s32.totalorder %s29, 1
          %s3991 = scalar_select %p3990, %s29, 1
          %s3992 = smul.addr %s3991, 2
          %s3993 = smul.addr %s3992, 2
          %s3994 = scalar_lea.vmem %s14, %s3993
        $region96: #{octconv2d_forward.1} parent=91 // pred_fallthru
          _
        // Predicated region
        $region97: #{octconv2d_forward.1} parent=91 // pred_check
          %p3995 = pneg %p382
        $region98: #{octconv2d_forward.1} parent=91 // pred_check_branch
          %3997 = sbr.rel (%p3995) target = $region100
        $region99: #{octconv2d_forward.1} parent=91 // pred_region
          %p3998 = scmp.lt.s32.totalorder %s29, 1
          %s3999 = scalar_select %p3998, %s29, 1
          %s4000 = smul.addr %s3999, 2
          %s4001 = scalar_lea.vmem %s15, %s4000
        $region100: #{octconv2d_forward.1} parent=91 // pred_fallthru
          _
      $region92: #{octconv2d_forward.1} parent=5 // pred_fallthru
        _
    $region6: #{octconv2d_forward.1} parent=1 // loop_footer
      %s27 = sadd.s32 1, %s23
    $region7: #{octconv2d_forward.1} parent=1 // loop_footer_branch
      %22 = sbr.rel target = $region3
    $region8: #{octconv2d_forward.1} parent=1 // loop_exit
      _
    %4002 = vsyncpa [#allocation6], 1
    %s4003 = scalar_lea.sflag [#allocation6], 1
    %4004 = vsyncpa %s4003, 1

</llo_original>
